<compile_context>
chip_gen: v7x
topology: tpu7x:2x2x1
jax: 0.10.0
libtpu: 0.0.40
codegen_flags: <defaults>
</compile_context>

<pallas_src>
import math
import functools

import jax
import jax.numpy as jnp
from jax.experimental import pallas as pl
from jax.experimental.pallas import tpu as pltpu


# ----------------------------- kernel ----------------------------------------


def _layernorm(x, w, b, eps=1e-5):
    mu = jnp.mean(x, axis=-1, keepdims=True)
    var = jnp.mean((x - mu) ** 2, axis=-1, keepdims=True)
    return (x - mu) * jax.lax.rsqrt(var + eps) * w + b


def transformer_kernel(
    # inputs
    x_ref,                        # (S, D)  f32   encoder input (pe already added)
    wqkv_ref,                     # (D, 3D) bf16  in_proj^T, q-part pre-scaled
    bqkv_ref,                     # (1, 3D) f32
    wo_ref,                       # (D, D)  bf16  out_proj^T
    bo_ref,                       # (1, D)  f32
    ln1w_ref, ln1b_ref,           # (1, D)  f32
    w1_ref, b1_ref,               # (D, FF) bf16, (1, FF) f32
    w2_ref, b2_ref,               # (FF, D) bf16, (1, D) f32
    ln2w_ref, ln2b_ref,           # (1, D)  f32
    fcw_ref,                      # (D, TILE_N) bf16   fc weight tile (streamed)
    fcb_ref,                      # (1, TILE_N) f32
    # outputs
    out_ref,                      # (S, TILE_N) f32   fc output tile
    # scratch
    tok_ref,                      # (S, D) f32   carried tokens (resident in VMEM)
    *, nhead, num_layers,
):
    l = pl.program_id(0)

    # ------------------------- encoder phase ---------------------------------
    @pl.when(l < num_layers)
    def _encoder_layer():
        @pl.when(l == 0)
        def _seed():
            tok_ref[...] = x_ref[...]

        x = tok_ref[...]                                  # (S, D) f32
        S, D = x.shape
        hd = D // nhead
        xb = x.astype(jnp.bfloat16)

        # --- dense QKV projection: one (S,D)@(D,3D) MXU matmul ---------------
        qkv = jnp.dot(xb, wqkv_ref[...],
                      preferred_element_type=jnp.float32) + bqkv_ref[...]

        # split q/k/v and relayout heads onto the leading (batch) axis
        q = pltpu.einshape('shd->hsd', qkv[:, :D].reshape(S, nhead, hd))
        k = pltpu.einshape('shd->hsd', qkv[:, D:2 * D].reshape(S, nhead, hd))
        v = pltpu.einshape('shd->hsd', qkv[:, 2 * D:].reshape(S, nhead, hd))

        # --- per-head attention (1/sqrt(hd) already folded into q) -----------
        s = jnp.einsum('hqd,hkd->hqk', q, k, preferred_element_type=jnp.float32)
        s = s - jnp.max(s, axis=-1, keepdims=True)
        p = jnp.exp(s)
        p = p * pl.reciprocal(jnp.sum(p, axis=-1, keepdims=True), approx=True)
        attn = jnp.einsum('hqk,hkd->hqd', p, v,
                          preferred_element_type=jnp.float32)   # (H, S, hd)

        # --- dense out-projection: (S,D)@(D,D) --------------------------------
        attn2d = pltpu.einshape('hsd->shd', attn).reshape(S, D)
        y = jnp.dot(attn2d.astype(jnp.bfloat16), wo_ref[...],
                    preferred_element_type=jnp.float32) + bo_ref[...]

        # --- residual + LayerNorm1 (norm_first=False) -------------------------
        x = _layernorm(x + y, ln1w_ref[...], ln1b_ref[...])

        # --- feed-forward ------------------------------------------------------
        h1 = jnp.dot(x.astype(jnp.bfloat16), w1_ref[...],
                     preferred_element_type=jnp.float32) + b1_ref[...]
        h1 = jnp.maximum(h1, 0.0)                        # ReLU
        h2 = jnp.dot(h1.astype(jnp.bfloat16), w2_ref[...],
                     preferred_element_type=jnp.float32) + b2_ref[...]

        # --- residual + LayerNorm2 --------------------------------------------
        tok_ref[...] = _layernorm(x + h2, ln2w_ref[...], ln2b_ref[...])

    # ------------------------- fc phase (tiled over OUT) ----------------------
    @pl.when(l >= num_layers)
    def _fc_tile():
        out_ref[...] = (
            jnp.dot(tok_ref[...].astype(jnp.bfloat16), fcw_ref[...],
                    preferred_element_type=jnp.float32)
            + fcb_ref[...]
        )


# ----------------------------- wrapper ----------------------------------------


def run_transformer(tokens, enc, fc_w, fc_b, *, nhead, tile_n=1024):
    """tokens: (S, D) f32; enc: dict of (L, ...)-stacked layer params;
    fc_w: (D, OUT) bf16; fc_b: (1, OUT) f32."""
    S, D = tokens.shape
    num_layers = enc["wqkv"].shape[0]
    out_dim = fc_w.shape[1]
    n_fc = pl.cdiv(out_dim, tile_n)

    order = ("wqkv", "bqkv", "wo", "bo", "ln1w", "ln1b",
             "w1", "b1", "w2", "b2", "ln2w", "ln2b")
    weights = [enc[name] for name in order]

    def layer_spec(arr):
        rest = tuple(arr.shape[1:])
        zeros = (0,) * len(rest)

        def idx(l):
            # Clamp: during the fc phase the index stays at the last layer's
            # block, so no extra weight DMA is issued after the phase flips.
            return (jnp.minimum(l, num_layers - 1),) + zeros

        return pl.BlockSpec((None,) + rest, idx)

    def fc_idx(l):
        # 0 during the encoder phase (tile 0 prefetched early / resident),
        # then walks the OUT tiles during the fc phase.
        return (0, jnp.maximum(l - num_layers, 0))

    in_specs = [pl.BlockSpec((S, D), lambda l: (0, 0))]        # fetched once
    in_specs += [layer_spec(w) for w in weights]
    in_specs += [pl.BlockSpec((D, tile_n), fc_idx),
                 pl.BlockSpec((1, tile_n), fc_idx)]

    return pl.pallas_call(
        functools.partial(transformer_kernel, nhead=nhead, num_layers=num_layers),
        out_shape=jax.ShapeDtypeStruct((S, out_dim), jnp.float32),
        grid_spec=pltpu.PrefetchScalarGridSpec(
            num_scalar_prefetch=0,
            grid=(num_layers + n_fc,),
            in_specs=in_specs,
            out_specs=pl.BlockSpec((S, tile_n), fc_idx),
            scratch_shapes=[pltpu.VMEM((S, D), jnp.float32)],  # token carry
        ),
        compiler_params=pltpu.CompilerParams(
            dimension_semantics=("arbitrary",),
            # VMEM guardrail (v7x has 64 MiB physical); current use is ~3 MB.
            vmem_limit_bytes=32 * 1024 * 1024,
        ),
    )(tokens, *weights, fc_w, fc_b)


# ----------------------------- model setup -----------------------------------


def make_positional_encoding(d_model, max_len):
    # literal translation of PositionalEncoding.__init__
    position = jnp.arange(max_len, dtype=jnp.float32)[:, None]
    div_term = jnp.exp(
        jnp.arange(0, d_model, 2, dtype=jnp.float32) * (-math.log(10000.0) / d_model)
    )
    pe = jnp.zeros((max_len, d_model), jnp.float32)
    pe = pe.at[:, 0::2].set(jnp.sin(position * div_term))
    pe = pe.at[:, 1::2].set(jnp.cos(position * div_term))
    return pe[None]                                   # (1, max_len, d_model)


def init_torch_layout_params(key, d_model, num_layers, dim_ff, out_dim, max_len=64):
    """Parameters in PyTorch layouts (documenting the correspondence)."""
    def dense(k, shape, scale=0.05):
        return scale * jax.random.normal(k, shape, jnp.float32)

    layers = []
    for li in range(num_layers):
        ks = jax.random.split(jax.random.fold_in(key, li), 8)
        layers.append(dict(
            in_w=dense(ks[0], (3 * d_model, d_model)),    # self_attn.in_proj_weight
            in_b=dense(ks[1], (3 * d_model,)),            # self_attn.in_proj_bias
            out_w=dense(ks[2], (d_model, d_model)),       # self_attn.out_proj.weight
            out_b=dense(ks[3], (d_model,)),               # self_attn.out_proj.bias
            ln1_w=jnp.ones((d_model,), jnp.float32),      # norm1.weight
            ln1_b=jnp.zeros((d_model,), jnp.float32),     # norm1.bias
            lin1_w=dense(ks[4], (dim_ff, d_model)),       # linear1.weight
            lin1_b=dense(ks[5], (dim_ff,)),               # linear1.bias
            lin2_w=dense(ks[6], (d_model, dim_ff)),       # linear2.weight
            lin2_b=dense(ks[7], (d_model,)),              # linear2.bias
            ln2_w=jnp.ones((d_model,), jnp.float32),      # norm2.weight
            ln2_b=jnp.zeros((d_model,), jnp.float32),     # norm2.bias
        ))
    kfc = jax.random.split(jax.random.fold_in(key, 10_000), 2)
    return dict(
        pe=make_positional_encoding(d_model, max_len),
        layers=layers,
        fc_w=dense(kfc[0], (out_dim, d_model)),           # fc.weight (OUT, D)
        fc_b=dense(kfc[1], (out_dim,)),                   # fc.bias   (OUT,)
    )


def prepare_params(torch_params, nhead):
    """One-time host-side re-layout: transpose, fold softmax scale into q,
    cast streamed matmul weights to bf16 (biases / LN params stay f32)."""
    layers = torch_params["layers"]
    d_model = layers[0]["in_w"].shape[1]
    hd = d_model // nhead
    scale = 1.0 / math.sqrt(hd)

    def prep_layer(p):
        wqkv = p["in_w"].T                                # (D, 3D): [q | k | v] columns
        wqkv = wqkv.at[:, :d_model].multiply(scale)       # fold 1/sqrt(hd) into q
        bqkv = p["in_b"].at[:d_model].multiply(scale)[None, :]   # (1, 3D)
        return dict(
            wqkv=wqkv.astype(jnp.bfloat16),
            bqkv=bqkv,
            wo=p["out_w"].T.astype(jnp.bfloat16),         # (D, D)
            bo=p["out_b"][None, :],
            ln1w=p["ln1_w"][None, :], ln1b=p["ln1_b"][None, :],
            w1=p["lin1_w"].T.astype(jnp.bfloat16), b1=p["lin1_b"][None, :],
            w2=p["lin2_w"].T.astype(jnp.bfloat16), b2=p["lin2_b"][None, :],
            ln2w=p["ln2_w"][None, :], ln2b=p["ln2_b"][None, :],
        )

    per_layer = [prep_layer(p) for p in layers]
    stacked = {k: jnp.stack([lp[k] for lp in per_layer], axis=0)
               for k in per_layer[0]}
    return dict(
        pe=torch_params["pe"],
        encoder=stacked,
        fc_w=torch_params["fc_w"].T.astype(jnp.bfloat16),   # (D, OUT)
        fc_b=torch_params["fc_b"][None, :],                  # (1, OUT)
    )


def transformer_forward(x, params, nhead, view_hwc):
    """x: (S, N=1, D) float32 -> (S, H, W, C) float32."""
    S, N, D = x.shape
    # PositionalEncoding.forward: x = x + pe[:, :x.size(1), :]  (x.size(1) == N);
    # reproduced bug-for-bug from the seq-first reference.
    x = x + params["pe"][:, :N, :]
    # TODO(synk): dropout (train mode p=0.1) has no clean Pallas/torch-parity
    # equivalent; treated as identity (eval mode).
    tokens = x.reshape(S * N, D)          # flatten(start_dim=1) valid only for N == 1
    y = run_transformer(tokens, params["encoder"], params["fc_w"], params["fc_b"],
                        nhead=nhead)
    H, W, C = view_hwc
    return y.reshape(-1, H, W, C)


# ----------------------------- main -------------------------------------------

if __name__ == "__main__":
    # Real (lane-dense) encoder hyperparameters; fc output scaled down from
    # 768*768*1280 (not materializable) while keeping the tiled/streamed fc.
    D_MODEL, NHEAD, NUM_LAYERS, DIM_FF = 128, 8, 6, 512
    SEQ, BATCH = 8, 1
    H, W, C = 8, 8, 32                     # stand-in for (768, 768, 1280)
    OUT_DIM = H * W * C                    # 2048 (multiple of 128)

    key = jax.random.PRNGKey(0)
    k_param, k_x = jax.random.split(key)

    torch_layout = init_torch_layout_params(k_param, D_MODEL, NUM_LAYERS, DIM_FF, OUT_DIM)
    params = prepare_params(torch_layout, NHEAD)
    x = jax.random.normal(k_x, (SEQ, BATCH, D_MODEL), jnp.float32)

    fwd = jax.jit(functools.partial(transformer_forward, nhead=NHEAD, view_hwc=(H, W, C)))
    out = jax.block_until_ready(fwd(x, params))

    assert out.shape == (SEQ, H, W, C), out.shape
    assert out.dtype == jnp.float32
    assert bool(jnp.all(jnp.isfinite(out)))
    print("KERNEL_OK")
</pallas_src>

<mosaic_0001>
module attributes {stable_mosaic.version = 11 : i64} {
  func.func @transformer_kernel(%arg0: i32, %arg1: memref<8x128xf32, #tpu.memory_space<vmem>>, %arg2: memref<1x128x384xbf16, #tpu.memory_space<vmem>>, %arg3: memref<1x1x384xf32, #tpu.memory_space<vmem>>, %arg4: memref<1x128x128xbf16, #tpu.memory_space<vmem>>, %arg5: memref<1x1x128xf32, #tpu.memory_space<vmem>>, %arg6: memref<1x1x128xf32, #tpu.memory_space<vmem>>, %arg7: memref<1x1x128xf32, #tpu.memory_space<vmem>>, %arg8: memref<1x128x512xbf16, #tpu.memory_space<vmem>>, %arg9: memref<1x1x512xf32, #tpu.memory_space<vmem>>, %arg10: memref<1x512x128xbf16, #tpu.memory_space<vmem>>, %arg11: memref<1x1x128xf32, #tpu.memory_space<vmem>>, %arg12: memref<1x1x128xf32, #tpu.memory_space<vmem>>, %arg13: memref<1x1x128xf32, #tpu.memory_space<vmem>>, %arg14: memref<128x1024xbf16, #tpu.memory_space<vmem>>, %arg15: memref<1x1024xf32, #tpu.memory_space<vmem>>, %arg16: memref<8x1024xf32, #tpu.memory_space<vmem>>, %arg17: memref<8x128xf32, #tpu.memory_space<vmem>>) attributes {dimension_semantics = [#tpu.dimension_semantics<arbitrary>], iteration_bounds = array<i64: 8>, scalar_prefetch = 0 : i64, scratch_operands = 1 : i64, tpu.core_type = #tpu.core_type<tc>, window_params = [{pipeline_mode = #tpu.pipeline_mode<synchronous>, transform_indices = @transform_0, window_bounds = array<i64: 8, 128>}, {transform_indices = @transform_1, window_bounds = array<i64: 1, 128, 384>}, {transform_indices = @transform_2, window_bounds = array<i64: 1, 1, 384>}, {transform_indices = @transform_3, window_bounds = array<i64: 1, 128, 128>}, {transform_indices = @transform_4, window_bounds = array<i64: 1, 1, 128>}, {transform_indices = @transform_5, window_bounds = array<i64: 1, 1, 128>}, {transform_indices = @transform_6, window_bounds = array<i64: 1, 1, 128>}, {transform_indices = @transform_7, window_bounds = array<i64: 1, 128, 512>}, {transform_indices = @transform_8, window_bounds = array<i64: 1, 1, 512>}, {transform_indices = @transform_9, window_bounds = array<i64: 1, 512, 128>}, {transform_indices = @transform_10, window_bounds = array<i64: 1, 1, 128>}, {transform_indices = @transform_11, window_bounds = array<i64: 1, 1, 128>}, {transform_indices = @transform_12, window_bounds = array<i64: 1, 1, 128>}, {transform_indices = @transform_13, window_bounds = array<i64: 128, 1024>}, {transform_indices = @transform_14, window_bounds = array<i64: 1, 1024>}, {transform_indices = @transform_15, window_bounds = array<i64: 8, 1024>}]} {
    %c6_i32 = arith.constant 6 : i32
    %0 = arith.cmpi slt, %arg0, %c6_i32 : i32
    %1 = arith.extui %0 : i1 to i32
    %c0_i32 = arith.constant 0 : i32
    %2 = arith.cmpi ne, %1, %c0_i32 : i32
    scf.if %2 {
      %c0_i32_2 = arith.constant 0 : i32
      %6 = arith.cmpi eq, %arg0, %c0_i32_2 : i32
      %7 = arith.extui %6 : i1 to i32
      %c0_i32_3 = arith.constant 0 : i32
      %8 = arith.cmpi ne, %7, %c0_i32_3 : i32
      scf.if %8 {
        %c0_61 = arith.constant 0 : index
        %c0_62 = arith.constant 0 : index
        %122 = vector.load %arg1[%c0_61, %c0_62] : memref<8x128xf32, #tpu.memory_space<vmem>>, vector<8x128xf32>
        %c0_63 = arith.constant 0 : index
        %c0_64 = arith.constant 0 : index
        %123 = vector.load %arg17[%c0_63, %c0_64] : memref<8x128xf32, #tpu.memory_space<vmem>>, vector<8x128xf32>
        tpu.vector_store %arg17[%c0_63, %c0_64], %122 {strides = array<i32>} : memref<8x128xf32, #tpu.memory_space<vmem>>, vector<8x128xf32>,
      } else {
      }
      %c0 = arith.constant 0 : index
      %c0_4 = arith.constant 0 : index
      %9 = vector.load %arg17[%c0, %c0_4] : memref<8x128xf32, #tpu.memory_space<vmem>>, vector<8x128xf32>
      %10 = arith.truncf %9 : vector<8x128xf32> to vector<8x128xbf16>
      %c0_5 = arith.constant 0 : index
      %c0_6 = arith.constant 0 : index
      %c0_7 = arith.constant 0 : index
      %11 = vector.load %arg2[%c0_5, %c0_6, %c0_7] : memref<1x128x384xbf16, #tpu.memory_space<vmem>>, vector<1x128x384xbf16>
      %12 = vector.shape_cast %11 : vector<1x128x384xbf16> to vector<128x384xbf16>
      %cst = arith.constant dense<0.000000e+00> : vector<8x384xf32>
      %13 = tpu.matmul %10, %12, %cst {dimension_numbers = #tpu.dot_dimension_numbers<[1], [0], [0], [1], [0, 0, 1, 1], [], []>} : vector<8x128xbf16>, vector<128x384xbf16>, vector<8x384xf32> -> vector<8x384xf32>
      %c0_8 = arith.constant 0 : index
      %c0_9 = arith.constant 0 : index
      %c0_10 = arith.constant 0 : index
      %14 = vector.load %arg3[%c0_8, %c0_9, %c0_10] : memref<1x1x384xf32, #tpu.memory_space<vmem>>, vector<1x1x384xf32>
      %15 = vector.shape_cast %14 : vector<1x1x384xf32> to vector<1x384xf32>
      %16 = vector.broadcast %15 : vector<1x384xf32> to vector<8x384xf32>
      %17 = arith.addf %13, %16 : vector<8x384xf32>
      %18 = vector.extract_strided_slice %17 {offsets = [0, 0], sizes = [8, 128], strides = [1, 1]} : vector<8x384xf32> to vector<8x128xf32>
      %19 = vector.shape_cast %18 : vector<8x128xf32> to vector<8x8x16xf32>
      %20 = tpu.transpose %19, [1, 0, 2] : vector<8x8x16xf32> -> vector<8x8x16xf32>
      %21 = vector.extract_strided_slice %17 {offsets = [0, 128], sizes = [8, 128], strides = [1, 1]} : vector<8x384xf32> to vector<8x128xf32>
      %22 = vector.shape_cast %21 : vector<8x128xf32> to vector<8x8x16xf32>
      %23 = tpu.transpose %22, [1, 0, 2] : vector<8x8x16xf32> -> vector<8x8x16xf32>
      %24 = vector.extract_strided_slice %17 {offsets = [0, 256], sizes = [8, 128], strides = [1, 1]} : vector<8x384xf32> to vector<8x128xf32>
      %25 = vector.shape_cast %24 : vector<8x128xf32> to vector<8x8x16xf32>
      %26 = tpu.transpose %25, [1, 0, 2] : vector<8x8x16xf32> -> vector<8x8x16xf32>
      "tpu.trace_start"() <{level = 10 : i32, message = "hqd,hkd->hqk"}> : () -> ()
      %cst_11 = arith.constant dense<0.000000e+00> : vector<8x8x8xf32>
      %27 = tpu.matmul %20, %23, %cst_11 {dimension_numbers = #tpu.dot_dimension_numbers<[2], [2], [1], [1], [0, 0, 0, 1, 1, 1], [0], [0]>} : vector<8x8x16xf32>, vector<8x8x16xf32>, vector<8x8x8xf32> -> vector<8x8x8xf32>
      "tpu.trace_stop"() : () -> ()
      %cst_12 = arith.constant dense<0xFF800000> : vector<8x8xf32>
      %28 = vector.multi_reduction <maximumf>, %27, %cst_12 [2] : vector<8x8x8xf32> to vector<8x8xf32>
      %29 = vector.shape_cast %28 : vector<8x8xf32> to vector<8x8x1xf32>
      %30 = vector.broadcast %29 : vector<8x8x1xf32> to vector<8x8x8xf32>
      %31 = arith.subf %27, %30 : vector<8x8x8xf32>
      %32 = math.exp %31 : vector<8x8x8xf32>
      %cst_13 = arith.constant dense<0.000000e+00> : vector<8x8xf32>
      %33 = vector.multi_reduction <add>, %32, %cst_13 [2] : vector<8x8x8xf32> to vector<8x8xf32>
      %34 = vector.shape_cast %33 : vector<8x8xf32> to vector<8x8x1xf32>
      %35 = tpu.reciprocal %34 {approx = true} : vector<8x8x1xf32> -> vector<8x8x1xf32>
      %36 = vector.broadcast %35 : vector<8x8x1xf32> to vector<8x8x8xf32>
      %37 = arith.mulf %32, %36 : vector<8x8x8xf32>
      "tpu.trace_start"() <{level = 10 : i32, message = "hqk,hkd->hqd"}> : () -> ()
      %cst_14 = arith.constant dense<0.000000e+00> : vector<8x8x16xf32>
      %38 = tpu.matmul %37, %26, %cst_14 {dimension_numbers = #tpu.dot_dimension_numbers<[2], [1], [1], [2], [0, 0, 0, 1, 1, 2], [0], [0]>} : vector<8x8x8xf32>, vector<8x8x16xf32>, vector<8x8x16xf32> -> vector<8x8x16xf32>
      "tpu.trace_stop"() : () -> ()
      %39 = tpu.transpose %38, [1, 0, 2] : vector<8x8x16xf32> -> vector<8x8x16xf32>
      %40 = vector.shape_cast %39 : vector<8x8x16xf32> to vector<8x128xf32>
      %41 = arith.truncf %40 : vector<8x128xf32> to vector<8x128xbf16>
      %c0_15 = arith.constant 0 : index
      %c0_16 = arith.constant 0 : index
      %c0_17 = arith.constant 0 : index
      %42 = vector.load %arg4[%c0_15, %c0_16, %c0_17] : memref<1x128x128xbf16, #tpu.memory_space<vmem>>, vector<1x128x128xbf16>
      %43 = vector.shape_cast %42 : vector<1x128x128xbf16> to vector<128x128xbf16>
      %cst_18 = arith.constant dense<0.000000e+00> : vector<8x128xf32>
      %44 = tpu.matmul %41, %43, %cst_18 {dimension_numbers = #tpu.dot_dimension_numbers<[1], [0], [0], [1], [0, 0, 1, 1], [], []>} : vector<8x128xbf16>, vector<128x128xbf16>, vector<8x128xf32> -> vector<8x128xf32>
      %c0_19 = arith.constant 0 : index
      %c0_20 = arith.constant 0 : index
      %c0_21 = arith.constant 0 : index
      %45 = vector.load %arg5[%c0_19, %c0_20, %c0_21] : memref<1x1x128xf32, #tpu.memory_space<vmem>>, vector<1x1x128xf32>
      %46 = vector.shape_cast %45 : vector<1x1x128xf32> to vector<1x128xf32>
      %47 = vector.broadcast %46 : vector<1x128xf32> to vector<8x128xf32>
      %48 = arith.addf %44, %47 : vector<8x128xf32>
      %49 = arith.addf %9, %48 : vector<8x128xf32>
      %c0_22 = arith.constant 0 : index
      %c0_23 = arith.constant 0 : index
      %c0_24 = arith.constant 0 : index
      %50 = vector.load %arg6[%c0_22, %c0_23, %c0_24] : memref<1x1x128xf32, #tpu.memory_space<vmem>>, vector<1x1x128xf32>
      %51 = vector.shape_cast %50 : vector<1x1x128xf32> to vector<1x128xf32>
      %c0_25 = arith.constant 0 : index
      %c0_26 = arith.constant 0 : index
      %c0_27 = arith.constant 0 : index
      %52 = vector.load %arg7[%c0_25, %c0_26, %c0_27] : memref<1x1x128xf32, #tpu.memory_space<vmem>>, vector<1x1x128xf32>
      %53 = vector.shape_cast %52 : vector<1x1x128xf32> to vector<1x128xf32>
      %cst_28 = arith.constant dense<0.000000e+00> : vector<8xf32>
      %54 = vector.multi_reduction <add>, %49, %cst_28 [1] : vector<8x128xf32> to vector<8xf32>
      %55 = vector.shape_cast %54 : vector<8xf32> to vector<8x1xf32>
      %cst_29 = arith.constant 1.280000e+02 : f32
      %56 = vector.broadcast %cst_29 : f32 to vector<8x1xf32>
      %57 = arith.divf %55, %56 : vector<8x1xf32>
      %58 = vector.broadcast %57 : vector<8x1xf32> to vector<8x128xf32>
      %59 = arith.subf %49, %58 : vector<8x128xf32>
      %60 = arith.mulf %59, %59 : vector<8x128xf32>
      %cst_30 = arith.constant dense<0.000000e+00> : vector<8xf32>
      %61 = vector.multi_reduction <add>, %60, %cst_30 [1] : vector<8x128xf32> to vector<8xf32>
      %62 = vector.shape_cast %61 : vector<8xf32> to vector<8x1xf32>
      %cst_31 = arith.constant 1.280000e+02 : f32
      %63 = vector.broadcast %cst_31 : f32 to vector<8x1xf32>
      %64 = arith.divf %62, %63 : vector<8x1xf32>
      %65 = vector.broadcast %57 : vector<8x1xf32> to vector<8x128xf32>
      %66 = arith.subf %49, %65 : vector<8x128xf32>
      %cst_32 = arith.constant 9.99999974E-6 : f32
      %67 = vector.broadcast %cst_32 : f32 to vector<8x1xf32>
      %68 = arith.addf %64, %67 : vector<8x1xf32>
      %69 = math.rsqrt %68 : vector<8x1xf32>
      %70 = vector.broadcast %69 : vector<8x1xf32> to vector<8x128xf32>
      %71 = arith.mulf %66, %70 : vector<8x128xf32>
      %72 = vector.broadcast %51 : vector<1x128xf32> to vector<8x128xf32>
      %73 = arith.mulf %71, %72 : vector<8x128xf32>
      %74 = vector.broadcast %53 : vector<1x128xf32> to vector<8x128xf32>
      %75 = arith.addf %73, %74 : vector<8x128xf32>
      %76 = arith.truncf %75 : vector<8x128xf32> to vector<8x128xbf16>
      %c0_33 = arith.constant 0 : index
      %c0_34 = arith.constant 0 : index
      %c0_35 = arith.constant 0 : index
      %77 = vector.load %arg8[%c0_33, %c0_34, %c0_35] : memref<1x128x512xbf16, #tpu.memory_space<vmem>>, vector<1x128x512xbf16>
      %78 = vector.shape_cast %77 : vector<1x128x512xbf16> to vector<128x512xbf16>
      %cst_36 = arith.constant dense<0.000000e+00> : vector<8x512xf32>
      %79 = tpu.matmul %76, %78, %cst_36 {dimension_numbers = #tpu.dot_dimension_numbers<[1], [0], [0], [1], [0, 0, 1, 1], [], []>} : vector<8x128xbf16>, vector<128x512xbf16>, vector<8x512xf32> -> vector<8x512xf32>
      %c0_37 = arith.constant 0 : index
      %c0_38 = arith.constant 0 : index
      %c0_39 = arith.constant 0 : index
      %80 = vector.load %arg9[%c0_37, %c0_38, %c0_39] : memref<1x1x512xf32, #tpu.memory_space<vmem>>, vector<1x1x512xf32>
      %81 = vector.shape_cast %80 : vector<1x1x512xf32> to vector<1x512xf32>
      %82 = vector.broadcast %81 : vector<1x512xf32> to vector<8x512xf32>
      %83 = arith.addf %79, %82 : vector<8x512xf32>
      %cst_40 = arith.constant 0.000000e+00 : f32
      %84 = vector.broadcast %cst_40 : f32 to vector<8x512xf32>
      %85 = arith.maximumf %83, %84 : vector<8x512xf32>
      %86 = arith.truncf %85 : vector<8x512xf32> to vector<8x512xbf16>
      %c0_41 = arith.constant 0 : index
      %c0_42 = arith.constant 0 : index
      %c0_43 = arith.constant 0 : index
      %87 = vector.load %arg10[%c0_41, %c0_42, %c0_43] : memref<1x512x128xbf16, #tpu.memory_space<vmem>>, vector<1x512x128xbf16>
      %88 = vector.shape_cast %87 : vector<1x512x128xbf16> to vector<512x128xbf16>
      %cst_44 = arith.constant dense<0.000000e+00> : vector<8x128xf32>
      %89 = tpu.matmul %86, %88, %cst_44 {dimension_numbers = #tpu.dot_dimension_numbers<[1], [0], [0], [1], [0, 0, 1, 1], [], []>} : vector<8x512xbf16>, vector<512x128xbf16>, vector<8x128xf32> -> vector<8x128xf32>
      %c0_45 = arith.constant 0 : index
      %c0_46 = arith.constant 0 : index
      %c0_47 = arith.constant 0 : index
      %90 = vector.load %arg11[%c0_45, %c0_46, %c0_47] : memref<1x1x128xf32, #tpu.memory_space<vmem>>, vector<1x1x128xf32>
      %91 = vector.shape_cast %90 : vector<1x1x128xf32> to vector<1x128xf32>
      %92 = vector.broadcast %91 : vector<1x128xf32> to vector<8x128xf32>
      %93 = arith.addf %89, %92 : vector<8x128xf32>
      %94 = arith.addf %75, %93 : vector<8x128xf32>
      %c0_48 = arith.constant 0 : index
      %c0_49 = arith.constant 0 : index
      %c0_50 = arith.constant 0 : index
      %95 = vector.load %arg12[%c0_48, %c0_49, %c0_50] : memref<1x1x128xf32, #tpu.memory_space<vmem>>, vector<1x1x128xf32>
      %96 = vector.shape_cast %95 : vector<1x1x128xf32> to vector<1x128xf32>
      %c0_51 = arith.constant 0 : index
      %c0_52 = arith.constant 0 : index
      %c0_53 = arith.constant 0 : index
      %97 = vector.load %arg13[%c0_51, %c0_52, %c0_53] : memref<1x1x128xf32, #tpu.memory_space<vmem>>, vector<1x1x128xf32>
      %98 = vector.shape_cast %97 : vector<1x1x128xf32> to vector<1x128xf32>
      %cst_54 = arith.constant dense<0.000000e+00> : vector<8xf32>
      %99 = vector.multi_reduction <add>, %94, %cst_54 [1] : vector<8x128xf32> to vector<8xf32>
      %100 = vector.shape_cast %99 : vector<8xf32> to vector<8x1xf32>
      %cst_55 = arith.constant 1.280000e+02 : f32
      %101 = vector.broadcast %cst_55 : f32 to vector<8x1xf32>
      %102 = arith.divf %100, %101 : vector<8x1xf32>
      %103 = vector.broadcast %102 : vector<8x1xf32> to vector<8x128xf32>
      %104 = arith.subf %94, %103 : vector<8x128xf32>
      %105 = arith.mulf %104, %104 : vector<8x128xf32>
      %cst_56 = arith.constant dense<0.000000e+00> : vector<8xf32>
      %106 = vector.multi_reduction <add>, %105, %cst_56 [1] : vector<8x128xf32> to vector<8xf32>
      %107 = vector.shape_cast %106 : vector<8xf32> to vector<8x1xf32>
      %cst_57 = arith.constant 1.280000e+02 : f32
      %108 = vector.broadcast %cst_57 : f32 to vector<8x1xf32>
      %109 = arith.divf %107, %108 : vector<8x1xf32>
      %110 = vector.broadcast %102 : vector<8x1xf32> to vector<8x128xf32>
      %111 = arith.subf %94, %110 : vector<8x128xf32>
      %cst_58 = arith.constant 9.99999974E-6 : f32
      %112 = vector.broadcast %cst_58 : f32 to vector<8x1xf32>
      %113 = arith.addf %109, %112 : vector<8x1xf32>
      %114 = math.rsqrt %113 : vector<8x1xf32>
      %115 = vector.broadcast %114 : vector<8x1xf32> to vector<8x128xf32>
      %116 = arith.mulf %111, %115 : vector<8x128xf32>
      %117 = vector.broadcast %96 : vector<1x128xf32> to vector<8x128xf32>
      %118 = arith.mulf %116, %117 : vector<8x128xf32>
      %119 = vector.broadcast %98 : vector<1x128xf32> to vector<8x128xf32>
      %120 = arith.addf %118, %119 : vector<8x128xf32>
      %c0_59 = arith.constant 0 : index
      %c0_60 = arith.constant 0 : index
      %121 = vector.load %arg17[%c0_59, %c0_60] : memref<8x128xf32, #tpu.memory_space<vmem>>, vector<8x128xf32>
      tpu.vector_store %arg17[%c0_59, %c0_60], %120 {strides = array<i32>} : memref<8x128xf32, #tpu.memory_space<vmem>>, vector<8x128xf32>,
    } else {
    }
    %c6_i32_0 = arith.constant 6 : i32
    %3 = arith.cmpi sge, %arg0, %c6_i32_0 : i32
    %4 = arith.extui %3 : i1 to i32
    %c0_i32_1 = arith.constant 0 : i32
    %5 = arith.cmpi ne, %4, %c0_i32_1 : i32
    scf.if %5 {
      %c0 = arith.constant 0 : index
      %c0_2 = arith.constant 0 : index
      %6 = vector.load %arg17[%c0, %c0_2] : memref<8x128xf32, #tpu.memory_space<vmem>>, vector<8x128xf32>
      %7 = arith.truncf %6 : vector<8x128xf32> to vector<8x128xbf16>
      %c0_3 = arith.constant 0 : index
      %c0_4 = arith.constant 0 : index
      %8 = vector.load %arg14[%c0_3, %c0_4] : memref<128x1024xbf16, #tpu.memory_space<vmem>>, vector<128x1024xbf16>
      %cst = arith.constant dense<0.000000e+00> : vector<8x1024xf32>
      %9 = tpu.matmul %7, %8, %cst {dimension_numbers = #tpu.dot_dimension_numbers<[1], [0], [0], [1], [0, 0, 1, 1], [], []>} : vector<8x128xbf16>, vector<128x1024xbf16>, vector<8x1024xf32> -> vector<8x1024xf32>
      %c0_5 = arith.constant 0 : index
      %c0_6 = arith.constant 0 : index
      %10 = vector.load %arg15[%c0_5, %c0_6] : memref<1x1024xf32, #tpu.memory_space<vmem>>, vector<1x1024xf32>
      %11 = vector.broadcast %10 : vector<1x1024xf32> to vector<8x1024xf32>
      %12 = arith.addf %9, %11 : vector<8x1024xf32>
      %c0_7 = arith.constant 0 : index
      %c0_8 = arith.constant 0 : index
      %13 = vector.load %arg16[%c0_7, %c0_8] : memref<8x1024xf32, #tpu.memory_space<vmem>>, vector<8x1024xf32>
      tpu.vector_store %arg16[%c0_7, %c0_8], %12 {strides = array<i32>} : memref<8x1024xf32, #tpu.memory_space<vmem>>, vector<8x1024xf32>,
    } else {
    }
    return
  }
  func.func @transform_0(%arg0: i32) -> (i32, i32) {
    %c0_i32 = arith.constant 0 : i32
    %c0_i32_0 = arith.constant 0 : i32
    %c0_i32_1 = arith.constant 0 : i32
    return %c0_i32, %c0_i32_0 : i32, i32
  }
  func.func @transform_1(%arg0: i32) -> (i32, i32, i32) {
    %c5_i32 = arith.constant 5 : i32
    %0 = arith.minsi %arg0, %c5_i32 : i32
    %c0_i32 = arith.constant 0 : i32
    %c0_i32_0 = arith.constant 0 : i32
    %c0_i32_1 = arith.constant 0 : i32
    return %0, %c0_i32, %c0_i32_0 : i32, i32, i32
  }
  func.func @transform_2(%arg0: i32) -> (i32, i32, i32) {
    %c5_i32 = arith.constant 5 : i32
    %0 = arith.minsi %arg0, %c5_i32 : i32
    %c0_i32 = arith.constant 0 : i32
    %c0_i32_0 = arith.constant 0 : i32
    %c0_i32_1 = arith.constant 0 : i32
    return %0, %c0_i32, %c0_i32_0 : i32, i32, i32
  }
  func.func @transform_3(%arg0: i32) -> (i32, i32, i32) {
    %c5_i32 = arith.constant 5 : i32
    %0 = arith.minsi %arg0, %c5_i32 : i32
    %c0_i32 = arith.constant 0 : i32
    %c0_i32_0 = arith.constant 0 : i32
    %c0_i32_1 = arith.constant 0 : i32
    return %0, %c0_i32, %c0_i32_0 : i32, i32, i32
  }
  func.func @transform_4(%arg0: i32) -> (i32, i32, i32) {
    %c5_i32 = arith.constant 5 : i32
    %0 = arith.minsi %arg0, %c5_i32 : i32
    %c0_i32 = arith.constant 0 : i32
    %c0_i32_0 = arith.constant 0 : i32
    %c0_i32_1 = arith.constant 0 : i32
    return %0, %c0_i32, %c0_i32_0 : i32, i32, i32
  }
  func.func @transform_5(%arg0: i32) -> (i32, i32, i32) {
    %c5_i32 = arith.constant 5 : i32
    %0 = arith.minsi %arg0, %c5_i32 : i32
    %c0_i32 = arith.constant 0 : i32
    %c0_i32_0 = arith.constant 0 : i32
    %c0_i32_1 = arith.constant 0 : i32
    return %0, %c0_i32, %c0_i32_0 : i32, i32, i32
  }
  func.func @transform_6(%arg0: i32) -> (i32, i32, i32) {
    %c5_i32 = arith.constant 5 : i32
    %0 = arith.minsi %arg0, %c5_i32 : i32
    %c0_i32 = arith.constant 0 : i32
    %c0_i32_0 = arith.constant 0 : i32
    %c0_i32_1 = arith.constant 0 : i32
    return %0, %c0_i32, %c0_i32_0 : i32, i32, i32
  }
  func.func @transform_7(%arg0: i32) -> (i32, i32, i32) {
    %c5_i32 = arith.constant 5 : i32
    %0 = arith.minsi %arg0, %c5_i32 : i32
    %c0_i32 = arith.constant 0 : i32
    %c0_i32_0 = arith.constant 0 : i32
    %c0_i32_1 = arith.constant 0 : i32
    return %0, %c0_i32, %c0_i32_0 : i32, i32, i32
  }
  func.func @transform_8(%arg0: i32) -> (i32, i32, i32) {
    %c5_i32 = arith.constant 5 : i32
    %0 = arith.minsi %arg0, %c5_i32 : i32
    %c0_i32 = arith.constant 0 : i32
    %c0_i32_0 = arith.constant 0 : i32
    %c0_i32_1 = arith.constant 0 : i32
    return %0, %c0_i32, %c0_i32_0 : i32, i32, i32
  }
  func.func @transform_9(%arg0: i32) -> (i32, i32, i32) {
    %c5_i32 = arith.constant 5 : i32
    %0 = arith.minsi %arg0, %c5_i32 : i32
    %c0_i32 = arith.constant 0 : i32
    %c0_i32_0 = arith.constant 0 : i32
    %c0_i32_1 = arith.constant 0 : i32
    return %0, %c0_i32, %c0_i32_0 : i32, i32, i32
  }
  func.func @transform_10(%arg0: i32) -> (i32, i32, i32) {
    %c5_i32 = arith.constant 5 : i32
    %0 = arith.minsi %arg0, %c5_i32 : i32
    %c0_i32 = arith.constant 0 : i32
    %c0_i32_0 = arith.constant 0 : i32
    %c0_i32_1 = arith.constant 0 : i32
    return %0, %c0_i32, %c0_i32_0 : i32, i32, i32
  }
  func.func @transform_11(%arg0: i32) -> (i32, i32, i32) {
    %c5_i32 = arith.constant 5 : i32
    %0 = arith.minsi %arg0, %c5_i32 : i32
    %c0_i32 = arith.constant 0 : i32
    %c0_i32_0 = arith.constant 0 : i32
    %c0_i32_1 = arith.constant 0 : i32
    return %0, %c0_i32, %c0_i32_0 : i32, i32, i32
  }
  func.func @transform_12(%arg0: i32) -> (i32, i32, i32) {
    %c5_i32 = arith.constant 5 : i32
    %0 = arith.minsi %arg0, %c5_i32 : i32
    %c0_i32 = arith.constant 0 : i32
    %c0_i32_0 = arith.constant 0 : i32
    %c0_i32_1 = arith.constant 0 : i32
    return %0, %c0_i32, %c0_i32_0 : i32, i32, i32
  }
  func.func @transform_13(%arg0: i32) -> (i32, i32) {
    %c6_i32 = arith.constant 6 : i32
    %0 = arith.subi %arg0, %c6_i32 : i32
    %c0_i32 = arith.constant 0 : i32
    %1 = arith.maxsi %0, %c0_i32 : i32
    %c0_i32_0 = arith.constant 0 : i32
    %c0_i32_1 = arith.constant 0 : i32
    return %c0_i32_0, %1 : i32, i32
  }
  func.func @transform_14(%arg0: i32) -> (i32, i32) {
    %c6_i32 = arith.constant 6 : i32
    %0 = arith.subi %arg0, %c6_i32 : i32
    %c0_i32 = arith.constant 0 : i32
    %1 = arith.maxsi %0, %c0_i32 : i32
    %c0_i32_0 = arith.constant 0 : i32
    %c0_i32_1 = arith.constant 0 : i32
    return %c0_i32_0, %1 : i32, i32
  }
  func.func @transform_15(%arg0: i32) -> (i32, i32) {
    %c6_i32 = arith.constant 6 : i32
    %0 = arith.subi %arg0, %c6_i32 : i32
    %c0_i32 = arith.constant 0 : i32
    %1 = arith.maxsi %0, %c0_i32 : i32
    %c0_i32_0 = arith.constant 0 : i32
    %c0_i32_1 = arith.constant 0 : i32
    return %c0_i32_0, %1 : i32, i32
  }
}

</mosaic_0001>

<llo_original>
// kernel: transformer_forward.1
$region0: #{transformer_forward.1}
  #allocation0 [shape = 'u32[]', space=smem, size = 0x4, offset = 0x4, fixed_abs, tag = 'smem constant byte address 0x4 - core index']
  #allocation1 [shape = 'u32[144,128]{1,0:T(1,128)}', space=vmem, size = 0x12000, scoped, tag = 'internal scratch']
  #allocation2 [shape = 'f32[8,128]{1,0:T(8,128)}', space=vmem, size = 0x1000, scoped, tag = 'scratch operand']
  %s0 = inlined_call_operand.vmem [shape: f32[8,128], index: 0, kind: input, shape index: {}]
  %s1 = inlined_call_operand.hbm [shape: bf16[6,128,384], index: 1, kind: input, shape index: {}]
  %s2 = inlined_call_operand.hbm [shape: f32[6,1,384], index: 2, kind: input, shape index: {}]
  %s3 = inlined_call_operand.hbm [shape: bf16[6,128,128], index: 3, kind: input, shape index: {}]
  %s4 = inlined_call_operand.hbm [shape: f32[6,1,128], index: 4, kind: input, shape index: {}]
  %s5 = inlined_call_operand.vmem [shape: f32[6,1,128], index: 5, kind: input, shape index: {}]
  %s6 = inlined_call_operand.hbm [shape: f32[6,1,128], index: 6, kind: input, shape index: {}]
  %s7 = inlined_call_operand.hbm [shape: bf16[6,128,512], index: 7, kind: input, shape index: {}]
  %s8 = inlined_call_operand.vmem [shape: f32[6,1,512], index: 8, kind: input, shape index: {}]
  %s9 = inlined_call_operand.hbm [shape: bf16[6,512,128], index: 9, kind: input, shape index: {}]
  %s10 = inlined_call_operand.hbm [shape: f32[6,1,128], index: 10, kind: input, shape index: {}]
  %s11 = inlined_call_operand.vmem [shape: f32[6,1,128], index: 11, kind: input, shape index: {}]
  %s12 = inlined_call_operand.hbm [shape: f32[6,1,128], index: 12, kind: input, shape index: {}]
  %s13 = inlined_call_operand.hbm [shape: bf16[128,2048], index: 13, kind: input, shape index: {}]
  %s14 = inlined_call_operand.vmem [shape: f32[1,2048], index: 14, kind: input, shape index: {}]
  %s15 = inlined_call_operand.vmem [shape: f32[8,2048], index: 15, kind: output, shape index: {}]
  %s16 = sld [smem:[#allocation0]]
  $region145: #{transformer_forward.1} parent=0
    _
  %s18 = ssub.s32 1, %s16
  %s19 = scalar_select 0, %s18, %s16
  $region1: #{transformer_forward.1} parent=0
    #allocation3 [shape = 'u8[196608]{0}', space=vmem, size = 0x30000, scoped, tag = 'input window, operand 1']
    #allocation4 [shape = 's32[2]{0}', space=sflag, size = 0x8, scoped, tag = 'scoped memory for transformer_forward.1']
    #allocation5 [shape = 'u8[3072]{0}', space=vmem, size = 0xc00, scoped, tag = 'input window, operand 2']
    #allocation6 [shape = 's32[2]{0}', space=sflag, size = 0x8, scoped, tag = 'scoped memory for transformer_forward.1']
    #allocation7 [shape = 'u8[65536]{0}', space=vmem, size = 0x10000, scoped, tag = 'input window, operand 3']
    #allocation8 [shape = 'u8[1024]{0}', space=vmem, size = 0x400, scoped, tag = 'input window, operand 4']
    #allocation9 [shape = 's32[2]{0}', space=sflag, size = 0x8, scoped, tag = 'scoped memory for transformer_forward.1']
    #allocation10 [shape = 'u8[1024]{0}', space=vmem, size = 0x400, scoped, tag = 'input window, operand 6']
    #allocation11 [shape = 'u8[262144]{0}', space=vmem, size = 0x40000, scoped, tag = 'input window, operand 7']
    #allocation12 [shape = 's32[2]{0}', space=sflag, size = 0x8, scoped, tag = 'scoped memory for transformer_forward.1']
    #allocation13 [shape = 'u8[262144]{0}', space=vmem, size = 0x40000, scoped, tag = 'input window, operand 9']
    #allocation14 [shape = 'u8[1024]{0}', space=vmem, size = 0x400, scoped, tag = 'input window, operand 10']
    #allocation15 [shape = 's32[2]{0}', space=sflag, size = 0x8, scoped, tag = 'scoped memory for transformer_forward.1']
    #allocation16 [shape = 'u8[1024]{0}', space=vmem, size = 0x400, scoped, tag = 'input window, operand 12']
    #allocation17 [shape = 'u8[524288]{0}', space=vmem, size = 0x80000, scoped, tag = 'input window, operand 13']
    #allocation18 [shape = 's32[2]{0}', space=sflag, size = 0x8, scoped, tag = 'scoped memory for transformer_forward.1']
    %20 = vsyncpa [#allocation4], 0
    %s21 = scalar_lea.sflag [#allocation4], 1
    %22 = vsyncpa %s21, 0
    %23 = vsyncpa [#allocation6], 0
    %s24 = scalar_lea.sflag [#allocation6], 1
    %25 = vsyncpa %s24, 0
    %26 = vsyncpa [#allocation9], 0
    %s27 = scalar_lea.sflag [#allocation9], 1
    %28 = vsyncpa %s27, 0
    %29 = vsyncpa [#allocation12], 0
    %s30 = scalar_lea.sflag [#allocation12], 1
    %31 = vsyncpa %s30, 0
    %32 = vsyncpa [#allocation15], 0
    %s33 = scalar_lea.sflag [#allocation15], 1
    %34 = vsyncpa %s33, 0
    %35 = vsyncpa [#allocation18], 0
    %s36 = scalar_lea.sflag [#allocation18], 1
    %37 = vsyncpa %s36, 0
    loop: start=0, step=1, limit=10
    $region2: #{transformer_forward.1} parent=1 // loop_pre_header
      _
    $region3: #{transformer_forward.1} parent=1 // loop_header
      %s39 = sphi 0, %s43
      %p40 = scmp.ge.s32.totalorder %s39, 10
      %s47 = sphi 0, %s47
      %s49 = sphi 0, %s47
      %s50 = sphi 0, %s49
      %s64 = sphi 0, %s50
      %s74 = sphi 0, %s76
      %s77 = sphi 0, %s74
      %s78 = sphi 0, %s77
      %s94 = sphi 0, %s78
      %s104 = sphi 0, %s106
      %s107 = sphi 0, %s104
      %s108 = sphi 0, %s107
      %s124 = sphi 0, %s108
      %s134 = sphi 0, %s136
      %s137 = sphi 0, %s134
      %s138 = sphi 0, %s137
      %s154 = sphi 0, %s138
      %s164 = sphi 0, %s166
      %s167 = sphi 0, %s164
      %s168 = sphi 0, %s167
      %s184 = sphi 0, %s168
      %s194 = sphi 0, %s196
      %s197 = sphi 0, %s194
      %s198 = sphi 0, %s197
      %s214 = sphi 0, %s198
      %s224 = sphi 0, %s226
      %s227 = sphi 0, %s224
      %s228 = sphi 0, %s227
      %s244 = sphi 0, %s228
      %s254 = sphi 0, %s256
      %s257 = sphi 0, %s254
      %s258 = sphi 0, %s257
      %s274 = sphi 0, %s258
      %s284 = sphi 0, %s286
      %s287 = sphi 0, %s284
      %s288 = sphi 0, %s287
      %s304 = sphi 0, %s288
      %s314 = sphi 0, %s316
      %s317 = sphi 0, %s314
      %s318 = sphi 0, %s317
      %s334 = sphi 0, %s318
      %s344 = sphi 0, %s346
      %s347 = sphi 0, %s344
      %s348 = sphi 0, %s347
      %s364 = sphi 0, %s348
      %s374 = sphi 0, %s376
      %s377 = sphi 0, %s374
      %s378 = sphi 0, %s377
      %s394 = sphi 0, %s378
      %s404 = sphi 0, %s406
      %s407 = sphi 0, %s404
      %s408 = sphi 0, %s407
      %s424 = sphi 0, %s408
      %s436 = sphi 0, %s438
      %s439 = sphi 0, %s436
      %s440 = sphi 0, %s439
      %s456 = sphi 0, %s440
      %s468 = sphi 0, %s470
      %s471 = sphi 0, %s468
      %s472 = sphi 0, %s471
      %s488 = sphi 0, %s472
      %s500 = sphi 0, %s502
      %s503 = sphi 0, %s500
      %s504 = sphi 0, %s503
      %s520 = sphi 0, %s504
    $region4: #{transformer_forward.1} parent=1 // loop_header_branch
      %42 = sbr.rel (%p40) target = $region8
    $region5: #{transformer_forward.1} parent=1 // loop_body
      %s44 = ssub.s32 %s39, 1
      %s45 = ssub.s32 %s39, 2
      %s46 = sadd.s32 %s39, 1
      %s48 = sadd.s32 %s47, 1
      %p51 = scmp.eq.s32.totalorder %s39, 7
      %p52 = scmp.ne.s32.totalorder %s47, %s49
      %p53 = scmp.eq.s32.totalorder %s39, 0
      %p54 = por %p52, %p53
      %p55 = scmp.ne.s32.totalorder %s47, %s49
      %p56 = scmp.eq.s32.totalorder %s44, 7
      %p57 = por %p55, %p56
      %p58 = scmp.ne.s32.totalorder %s49, %s50
      %p59 = scmp.eq.s32.totalorder %s44, 0
      %p60 = por %p58, %p59
      %p61 = scmp.ne.s32.totalorder %s49, %s50
      %p62 = scmp.eq.s32.totalorder %s45, 7
      %p63 = por %p61, %p62
      %p65 = scmp.ne.s32.totalorder %s50, %s64
      %p66 = scmp.eq.s32.totalorder %s45, 0
      %p67 = por %p65, %p66
      %p68 = scmp.lt.s32.totalorder %s39, 5
      %s69 = scalar_select %p68, %s39, 5
      %p70 = scmp.lt.s32.totalorder %s46, 5
      %s71 = scalar_select %p70, %s46, 5
      %s72 = ssub.s32 %s69, %s71
      %p73 = scmp.eq.s32.totalorder %s72, 0
      %s75 = sadd.s32 %s74, 1
      %s76 = scalar_select %p73, %s74, %s75
      %p79 = pneg %p73
      %p80 = scmp.eq.s32.totalorder %s39, 7
      %p81 = por %p79, %p80
      %p82 = scmp.ne.s32.totalorder %s74, %s77
      %p83 = scmp.eq.s32.totalorder %s39, 0
      %p84 = por %p82, %p83
      %p85 = scmp.ne.s32.totalorder %s74, %s77
      %p86 = scmp.eq.s32.totalorder %s44, 7
      %p87 = por %p85, %p86
      %p88 = scmp.ne.s32.totalorder %s77, %s78
      %p89 = scmp.eq.s32.totalorder %s44, 0
      %p90 = por %p88, %p89
      %p91 = scmp.ne.s32.totalorder %s77, %s78
      %p92 = scmp.eq.s32.totalorder %s45, 7
      %p93 = por %p91, %p92
      %p95 = scmp.ne.s32.totalorder %s78, %s94
      %p96 = scmp.eq.s32.totalorder %s45, 0
      %p97 = por %p95, %p96
      %p98 = scmp.lt.s32.totalorder %s39, 5
      %s99 = scalar_select %p98, %s39, 5
      %p100 = scmp.lt.s32.totalorder %s46, 5
      %s101 = scalar_select %p100, %s46, 5
      %s102 = ssub.s32 %s99, %s101
      %p103 = scmp.eq.s32.totalorder %s102, 0
      %s105 = sadd.s32 %s104, 1
      %s106 = scalar_select %p103, %s104, %s105
      %p109 = pneg %p103
      %p110 = scmp.eq.s32.totalorder %s39, 7
      %p111 = por %p109, %p110
      %p112 = scmp.ne.s32.totalorder %s104, %s107
      %p113 = scmp.eq.s32.totalorder %s39, 0
      %p114 = por %p112, %p113
      %p115 = scmp.ne.s32.totalorder %s104, %s107
      %p116 = scmp.eq.s32.totalorder %s44, 7
      %p117 = por %p115, %p116
      %p118 = scmp.ne.s32.totalorder %s107, %s108
      %p119 = scmp.eq.s32.totalorder %s44, 0
      %p120 = por %p118, %p119
      %p121 = scmp.ne.s32.totalorder %s107, %s108
      %p122 = scmp.eq.s32.totalorder %s45, 7
      %p123 = por %p121, %p122
      %p125 = scmp.ne.s32.totalorder %s108, %s124
      %p126 = scmp.eq.s32.totalorder %s45, 0
      %p127 = por %p125, %p126
      %p128 = scmp.lt.s32.totalorder %s39, 5
      %s129 = scalar_select %p128, %s39, 5
      %p130 = scmp.lt.s32.totalorder %s46, 5
      %s131 = scalar_select %p130, %s46, 5
      %s132 = ssub.s32 %s129, %s131
      %p133 = scmp.eq.s32.totalorder %s132, 0
      %s135 = sadd.s32 %s134, 1
      %s136 = scalar_select %p133, %s134, %s135
      %p139 = pneg %p133
      %p140 = scmp.eq.s32.totalorder %s39, 7
      %p141 = por %p139, %p140
      %p142 = scmp.ne.s32.totalorder %s134, %s137
      %p143 = scmp.eq.s32.totalorder %s39, 0
      %p144 = por %p142, %p143
      %p145 = scmp.ne.s32.totalorder %s134, %s137
      %p146 = scmp.eq.s32.totalorder %s44, 7
      %p147 = por %p145, %p146
      %p148 = scmp.ne.s32.totalorder %s137, %s138
      %p149 = scmp.eq.s32.totalorder %s44, 0
      %p150 = por %p148, %p149
      %p151 = scmp.ne.s32.totalorder %s137, %s138
      %p152 = scmp.eq.s32.totalorder %s45, 7
      %p153 = por %p151, %p152
      %p155 = scmp.ne.s32.totalorder %s138, %s154
      %p156 = scmp.eq.s32.totalorder %s45, 0
      %p157 = por %p155, %p156
      %p158 = scmp.lt.s32.totalorder %s39, 5
      %s159 = scalar_select %p158, %s39, 5
      %p160 = scmp.lt.s32.totalorder %s46, 5
      %s161 = scalar_select %p160, %s46, 5
      %s162 = ssub.s32 %s159, %s161
      %p163 = scmp.eq.s32.totalorder %s162, 0
      %s165 = sadd.s32 %s164, 1
      %s166 = scalar_select %p163, %s164, %s165
      %p169 = pneg %p163
      %p170 = scmp.eq.s32.totalorder %s39, 7
      %p171 = por %p169, %p170
      %p172 = scmp.ne.s32.totalorder %s164, %s167
      %p173 = scmp.eq.s32.totalorder %s39, 0
      %p174 = por %p172, %p173
      %p175 = scmp.ne.s32.totalorder %s164, %s167
      %p176 = scmp.eq.s32.totalorder %s44, 7
      %p177 = por %p175, %p176
      %p178 = scmp.ne.s32.totalorder %s167, %s168
      %p179 = scmp.eq.s32.totalorder %s44, 0
      %p180 = por %p178, %p179
      %p181 = scmp.ne.s32.totalorder %s167, %s168
      %p182 = scmp.eq.s32.totalorder %s45, 7
      %p183 = por %p181, %p182
      %p185 = scmp.ne.s32.totalorder %s168, %s184
      %p186 = scmp.eq.s32.totalorder %s45, 0
      %p187 = por %p185, %p186
      %p188 = scmp.lt.s32.totalorder %s39, 5
      %s189 = scalar_select %p188, %s39, 5
      %p190 = scmp.lt.s32.totalorder %s46, 5
      %s191 = scalar_select %p190, %s46, 5
      %s192 = ssub.s32 %s189, %s191
      %p193 = scmp.eq.s32.totalorder %s192, 0
      %s195 = sadd.s32 %s194, 1
      %s196 = scalar_select %p193, %s194, %s195
      %p199 = pneg %p193
      %p200 = scmp.eq.s32.totalorder %s39, 7
      %p201 = por %p199, %p200
      %p202 = scmp.ne.s32.totalorder %s194, %s197
      %p203 = scmp.eq.s32.totalorder %s39, 0
      %p204 = por %p202, %p203
      %p205 = scmp.ne.s32.totalorder %s194, %s197
      %p206 = scmp.eq.s32.totalorder %s44, 7
      %p207 = por %p205, %p206
      %p208 = scmp.ne.s32.totalorder %s197, %s198
      %p209 = scmp.eq.s32.totalorder %s44, 0
      %p210 = por %p208, %p209
      %p211 = scmp.ne.s32.totalorder %s197, %s198
      %p212 = scmp.eq.s32.totalorder %s45, 7
      %p213 = por %p211, %p212
      %p215 = scmp.ne.s32.totalorder %s198, %s214
      %p216 = scmp.eq.s32.totalorder %s45, 0
      %p217 = por %p215, %p216
      %p218 = scmp.lt.s32.totalorder %s39, 5
      %s219 = scalar_select %p218, %s39, 5
      %p220 = scmp.lt.s32.totalorder %s46, 5
      %s221 = scalar_select %p220, %s46, 5
      %s222 = ssub.s32 %s219, %s221
      %p223 = scmp.eq.s32.totalorder %s222, 0
      %s225 = sadd.s32 %s224, 1
      %s226 = scalar_select %p223, %s224, %s225
      %p229 = pneg %p223
      %p230 = scmp.eq.s32.totalorder %s39, 7
      %p231 = por %p229, %p230
      %p232 = scmp.ne.s32.totalorder %s224, %s227
      %p233 = scmp.eq.s32.totalorder %s39, 0
      %p234 = por %p232, %p233
      %p235 = scmp.ne.s32.totalorder %s224, %s227
      %p236 = scmp.eq.s32.totalorder %s44, 7
      %p237 = por %p235, %p236
      %p238 = scmp.ne.s32.totalorder %s227, %s228
      %p239 = scmp.eq.s32.totalorder %s44, 0
      %p240 = por %p238, %p239
      %p241 = scmp.ne.s32.totalorder %s227, %s228
      %p242 = scmp.eq.s32.totalorder %s45, 7
      %p243 = por %p241, %p242
      %p245 = scmp.ne.s32.totalorder %s228, %s244
      %p246 = scmp.eq.s32.totalorder %s45, 0
      %p247 = por %p245, %p246
      %p248 = scmp.lt.s32.totalorder %s39, 5
      %s249 = scalar_select %p248, %s39, 5
      %p250 = scmp.lt.s32.totalorder %s46, 5
      %s251 = scalar_select %p250, %s46, 5
      %s252 = ssub.s32 %s249, %s251
      %p253 = scmp.eq.s32.totalorder %s252, 0
      %s255 = sadd.s32 %s254, 1
      %s256 = scalar_select %p253, %s254, %s255
      %p259 = pneg %p253
      %p260 = scmp.eq.s32.totalorder %s39, 7
      %p261 = por %p259, %p260
      %p262 = scmp.ne.s32.totalorder %s254, %s257
      %p263 = scmp.eq.s32.totalorder %s39, 0
      %p264 = por %p262, %p263
      %p265 = scmp.ne.s32.totalorder %s254, %s257
      %p266 = scmp.eq.s32.totalorder %s44, 7
      %p267 = por %p265, %p266
      %p268 = scmp.ne.s32.totalorder %s257, %s258
      %p269 = scmp.eq.s32.totalorder %s44, 0
      %p270 = por %p268, %p269
      %p271 = scmp.ne.s32.totalorder %s257, %s258
      %p272 = scmp.eq.s32.totalorder %s45, 7
      %p273 = por %p271, %p272
      %p275 = scmp.ne.s32.totalorder %s258, %s274
      %p276 = scmp.eq.s32.totalorder %s45, 0
      %p277 = por %p275, %p276
      %p278 = scmp.lt.s32.totalorder %s39, 5
      %s279 = scalar_select %p278, %s39, 5
      %p280 = scmp.lt.s32.totalorder %s46, 5
      %s281 = scalar_select %p280, %s46, 5
      %s282 = ssub.s32 %s279, %s281
      %p283 = scmp.eq.s32.totalorder %s282, 0
      %s285 = sadd.s32 %s284, 1
      %s286 = scalar_select %p283, %s284, %s285
      %p289 = pneg %p283
      %p290 = scmp.eq.s32.totalorder %s39, 7
      %p291 = por %p289, %p290
      %p292 = scmp.ne.s32.totalorder %s284, %s287
      %p293 = scmp.eq.s32.totalorder %s39, 0
      %p294 = por %p292, %p293
      %p295 = scmp.ne.s32.totalorder %s284, %s287
      %p296 = scmp.eq.s32.totalorder %s44, 7
      %p297 = por %p295, %p296
      %p298 = scmp.ne.s32.totalorder %s287, %s288
      %p299 = scmp.eq.s32.totalorder %s44, 0
      %p300 = por %p298, %p299
      %p301 = scmp.ne.s32.totalorder %s287, %s288
      %p302 = scmp.eq.s32.totalorder %s45, 7
      %p303 = por %p301, %p302
      %p305 = scmp.ne.s32.totalorder %s288, %s304
      %p306 = scmp.eq.s32.totalorder %s45, 0
      %p307 = por %p305, %p306
      %p308 = scmp.lt.s32.totalorder %s39, 5
      %s309 = scalar_select %p308, %s39, 5
      %p310 = scmp.lt.s32.totalorder %s46, 5
      %s311 = scalar_select %p310, %s46, 5
      %s312 = ssub.s32 %s309, %s311
      %p313 = scmp.eq.s32.totalorder %s312, 0
      %s315 = sadd.s32 %s314, 1
      %s316 = scalar_select %p313, %s314, %s315
      %p319 = pneg %p313
      %p320 = scmp.eq.s32.totalorder %s39, 7
      %p321 = por %p319, %p320
      %p322 = scmp.ne.s32.totalorder %s314, %s317
      %p323 = scmp.eq.s32.totalorder %s39, 0
      %p324 = por %p322, %p323
      %p325 = scmp.ne.s32.totalorder %s314, %s317
      %p326 = scmp.eq.s32.totalorder %s44, 7
      %p327 = por %p325, %p326
      %p328 = scmp.ne.s32.totalorder %s317, %s318
      %p329 = scmp.eq.s32.totalorder %s44, 0
      %p330 = por %p328, %p329
      %p331 = scmp.ne.s32.totalorder %s317, %s318
      %p332 = scmp.eq.s32.totalorder %s45, 7
      %p333 = por %p331, %p332
      %p335 = scmp.ne.s32.totalorder %s318, %s334
      %p336 = scmp.eq.s32.totalorder %s45, 0
      %p337 = por %p335, %p336
      %p338 = scmp.lt.s32.totalorder %s39, 5
      %s339 = scalar_select %p338, %s39, 5
      %p340 = scmp.lt.s32.totalorder %s46, 5
      %s341 = scalar_select %p340, %s46, 5
      %s342 = ssub.s32 %s339, %s341
      %p343 = scmp.eq.s32.totalorder %s342, 0
      %s345 = sadd.s32 %s344, 1
      %s346 = scalar_select %p343, %s344, %s345
      %p349 = pneg %p343
      %p350 = scmp.eq.s32.totalorder %s39, 7
      %p351 = por %p349, %p350
      %p352 = scmp.ne.s32.totalorder %s344, %s347
      %p353 = scmp.eq.s32.totalorder %s39, 0
      %p354 = por %p352, %p353
      %p355 = scmp.ne.s32.totalorder %s344, %s347
      %p356 = scmp.eq.s32.totalorder %s44, 7
      %p357 = por %p355, %p356
      %p358 = scmp.ne.s32.totalorder %s347, %s348
      %p359 = scmp.eq.s32.totalorder %s44, 0
      %p360 = por %p358, %p359
      %p361 = scmp.ne.s32.totalorder %s347, %s348
      %p362 = scmp.eq.s32.totalorder %s45, 7
      %p363 = por %p361, %p362
      %p365 = scmp.ne.s32.totalorder %s348, %s364
      %p366 = scmp.eq.s32.totalorder %s45, 0
      %p367 = por %p365, %p366
      %p368 = scmp.lt.s32.totalorder %s39, 5
      %s369 = scalar_select %p368, %s39, 5
      %p370 = scmp.lt.s32.totalorder %s46, 5
      %s371 = scalar_select %p370, %s46, 5
      %s372 = ssub.s32 %s369, %s371
      %p373 = scmp.eq.s32.totalorder %s372, 0
      %s375 = sadd.s32 %s374, 1
      %s376 = scalar_select %p373, %s374, %s375
      %p379 = pneg %p373
      %p380 = scmp.eq.s32.totalorder %s39, 7
      %p381 = por %p379, %p380
      %p382 = scmp.ne.s32.totalorder %s374, %s377
      %p383 = scmp.eq.s32.totalorder %s39, 0
      %p384 = por %p382, %p383
      %p385 = scmp.ne.s32.totalorder %s374, %s377
      %p386 = scmp.eq.s32.totalorder %s44, 7
      %p387 = por %p385, %p386
      %p388 = scmp.ne.s32.totalorder %s377, %s378
      %p389 = scmp.eq.s32.totalorder %s44, 0
      %p390 = por %p388, %p389
      %p391 = scmp.ne.s32.totalorder %s377, %s378
      %p392 = scmp.eq.s32.totalorder %s45, 7
      %p393 = por %p391, %p392
      %p395 = scmp.ne.s32.totalorder %s378, %s394
      %p396 = scmp.eq.s32.totalorder %s45, 0
      %p397 = por %p395, %p396
      %p398 = scmp.lt.s32.totalorder %s39, 5
      %s399 = scalar_select %p398, %s39, 5
      %p400 = scmp.lt.s32.totalorder %s46, 5
      %s401 = scalar_select %p400, %s46, 5
      %s402 = ssub.s32 %s399, %s401
      %p403 = scmp.eq.s32.totalorder %s402, 0
      %s405 = sadd.s32 %s404, 1
      %s406 = scalar_select %p403, %s404, %s405
      %p409 = pneg %p403
      %p410 = scmp.eq.s32.totalorder %s39, 7
      %p411 = por %p409, %p410
      %p412 = scmp.ne.s32.totalorder %s404, %s407
      %p413 = scmp.eq.s32.totalorder %s39, 0
      %p414 = por %p412, %p413
      %p415 = scmp.ne.s32.totalorder %s404, %s407
      %p416 = scmp.eq.s32.totalorder %s44, 7
      %p417 = por %p415, %p416
      %p418 = scmp.ne.s32.totalorder %s407, %s408
      %p419 = scmp.eq.s32.totalorder %s44, 0
      %p420 = por %p418, %p419
      %p421 = scmp.ne.s32.totalorder %s407, %s408
      %p422 = scmp.eq.s32.totalorder %s45, 7
      %p423 = por %p421, %p422
      %p425 = scmp.ne.s32.totalorder %s408, %s424
      %p426 = scmp.eq.s32.totalorder %s45, 0
      %p427 = por %p425, %p426
      %s428 = ssub.s32 %s39, 6
      %p429 = scmp.gt.s32.totalorder %s428, 0
      %s430 = scalar_select %p429, %s428, 0
      %s431 = ssub.s32 %s46, 6
      %p432 = scmp.gt.s32.totalorder %s431, 0
      %s433 = scalar_select %p432, %s431, 0
      %s434 = ssub.s32 %s430, %s433
      %p435 = scmp.eq.s32.totalorder %s434, 0
      %s437 = sadd.s32 %s436, 1
      %s438 = scalar_select %p435, %s436, %s437
      %p441 = pneg %p435
      %p442 = scmp.eq.s32.totalorder %s39, 7
      %p443 = por %p441, %p442
      %p444 = scmp.ne.s32.totalorder %s436, %s439
      %p445 = scmp.eq.s32.totalorder %s39, 0
      %p446 = por %p444, %p445
      %p447 = scmp.ne.s32.totalorder %s436, %s439
      %p448 = scmp.eq.s32.totalorder %s44, 7
      %p449 = por %p447, %p448
      %p450 = scmp.ne.s32.totalorder %s439, %s440
      %p451 = scmp.eq.s32.totalorder %s44, 0
      %p452 = por %p450, %p451
      %p453 = scmp.ne.s32.totalorder %s439, %s440
      %p454 = scmp.eq.s32.totalorder %s45, 7
      %p455 = por %p453, %p454
      %p457 = scmp.ne.s32.totalorder %s440, %s456
      %p458 = scmp.eq.s32.totalorder %s45, 0
      %p459 = por %p457, %p458
      %s460 = ssub.s32 %s39, 6
      %p461 = scmp.gt.s32.totalorder %s460, 0
      %s462 = scalar_select %p461, %s460, 0
      %s463 = ssub.s32 %s46, 6
      %p464 = scmp.gt.s32.totalorder %s463, 0
      %s465 = scalar_select %p464, %s463, 0
      %s466 = ssub.s32 %s462, %s465
      %p467 = scmp.eq.s32.totalorder %s466, 0
      %s469 = sadd.s32 %s468, 1
      %s470 = scalar_select %p467, %s468, %s469
      %p473 = pneg %p467
      %p474 = scmp.eq.s32.totalorder %s39, 7
      %p475 = por %p473, %p474
      %p476 = scmp.ne.s32.totalorder %s468, %s471
      %p477 = scmp.eq.s32.totalorder %s39, 0
      %p478 = por %p476, %p477
      %p479 = scmp.ne.s32.totalorder %s468, %s471
      %p480 = scmp.eq.s32.totalorder %s44, 7
      %p481 = por %p479, %p480
      %p482 = scmp.ne.s32.totalorder %s471, %s472
      %p483 = scmp.eq.s32.totalorder %s44, 0
      %p484 = por %p482, %p483
      %p485 = scmp.ne.s32.totalorder %s471, %s472
      %p486 = scmp.eq.s32.totalorder %s45, 7
      %p487 = por %p485, %p486
      %p489 = scmp.ne.s32.totalorder %s472, %s488
      %p490 = scmp.eq.s32.totalorder %s45, 0
      %p491 = por %p489, %p490
      %s492 = ssub.s32 %s39, 6
      %p493 = scmp.gt.s32.totalorder %s492, 0
      %s494 = scalar_select %p493, %s492, 0
      %s495 = ssub.s32 %s46, 6
      %p496 = scmp.gt.s32.totalorder %s495, 0
      %s497 = scalar_select %p496, %s495, 0
      %s498 = ssub.s32 %s494, %s497
      %p499 = scmp.eq.s32.totalorder %s498, 0
      %s501 = sadd.s32 %s500, 1
      %s502 = scalar_select %p499, %s500, %s501
      %p505 = pneg %p499
      %p506 = scmp.eq.s32.totalorder %s39, 7
      %p507 = por %p505, %p506
      %p508 = scmp.ne.s32.totalorder %s500, %s503
      %p509 = scmp.eq.s32.totalorder %s39, 0
      %p510 = por %p508, %p509
      %p511 = scmp.ne.s32.totalorder %s500, %s503
      %p512 = scmp.eq.s32.totalorder %s44, 7
      %p513 = por %p511, %p512
      %p514 = scmp.ne.s32.totalorder %s503, %s504
      %p515 = scmp.eq.s32.totalorder %s44, 0
      %p516 = por %p514, %p515
      %p517 = scmp.ne.s32.totalorder %s503, %s504
      %p518 = scmp.eq.s32.totalorder %s45, 7
      %p519 = por %p517, %p518
      %p521 = scmp.ne.s32.totalorder %s504, %s520
      %p522 = scmp.eq.s32.totalorder %s45, 0
      %p523 = por %p521, %p522
      %p524 = scmp.le.s32.totalorder 1, %s39
      %p525 = scmp.lt.s32.totalorder %s39, 9
      %p526 = pnand %p524, %p525
      %p527 = pneg %p526
      // Predicated region
      $region9: #{transformer_forward.1} parent=5 // pred_check
        _
      $region10: #{transformer_forward.1} parent=5 // pred_check_branch
        %529 = sbr.rel (%p526) target = $region12
      $region11: #{transformer_forward.1} parent=5 // pred_region
        %s530 = ssub.s32 %s39, 1
        // Predicated region
        $region13: #{transformer_forward.1} parent=11 // pred_check
          %p531 = pneg %p60
        $region14: #{transformer_forward.1} parent=11 // pred_check_branch
          %533 = sbr.rel (%p531) target = $region16
        $region15: #{transformer_forward.1} parent=11 // pred_region
          _
        $region16: #{transformer_forward.1} parent=11 // pred_fallthru
          _
      $region12: #{transformer_forward.1} parent=5 // pred_fallthru
        _
      %p534 = scmp.lt.s32.totalorder %s39, 8
      // Predicated region
      $region17: #{transformer_forward.1} parent=5 // pred_check
        %p535 = pneg %p534
      $region18: #{transformer_forward.1} parent=5 // pred_check_branch
        %537 = sbr.rel (%p535) target = $region20
      $region19: #{transformer_forward.1} parent=5 // pred_region
        // Predicated region
        $region21: #{transformer_forward.1} parent=19 // pred_check
          %p538 = pneg %p84
        $region22: #{transformer_forward.1} parent=19 // pred_check_branch
          %540 = sbr.rel (%p538) target = $region24
        $region23: #{transformer_forward.1} parent=19 // pred_region
          %s541 = sand.u32 %s74, 1
          %s542 = scalar_lea.sflag [#allocation4], %s541
          %s543 = sand.u32 %s74, 1
          %s544 = smul.addr %s543, 192
          %s545 = scalar_lea.vmem [#allocation3], %s544
          %p546 = scmp.lt.s32.totalorder %s39, 5
          %s547 = scalar_select %p546, %s39, 5
          %s549 = ssub.s32 3072, 3072
          %550 = vsyncadd %s542, %s549
          %s551 = smul.addr %s547, 48
          %s552 = smul.addr %s551, 64
          %s553 = scalar_lea.hbm %s1, %s552
          %s554 = sshll.u32 %s545, 4
          %s555 = int_to_ptr.vmem [resolvable:$true] %s554
          %560 = dma.hbm_to_vmem [thread:$0]  %s553, 3072, %s555, %s542, 192, 192, 12
        $region24: #{transformer_forward.1} parent=19 // pred_fallthru
          _
        // Predicated region
        $region25: #{transformer_forward.1} parent=19 // pred_check
          %p561 = pneg %p114
        $region26: #{transformer_forward.1} parent=19 // pred_check_branch
          %563 = sbr.rel (%p561) target = $region28
        $region27: #{transformer_forward.1} parent=19 // pred_region
          %s564 = sand.u32 %s39, 1
          %s565 = scalar_lea.sflag [#allocation6], %s564
          %s566 = sand.u32 %s104, 1
          %s567 = smul.addr %s566, 3
          %s568 = scalar_lea.vmem [#allocation5], %s567
          %p569 = scmp.lt.s32.totalorder %s39, 5
          %s570 = scalar_select %p569, %s39, 5
          %s572 = ssub.s32 48, 48
          %573 = vsyncadd %s565, %s572
          %s574 = smul.addr %s570, 3
          %s575 = smul.addr %s574, 16
          %s576 = scalar_lea.hbm %s2, %s575
          %s578 = sshll.u32 %s568, 4
          %s579 = int_to_ptr.vmem [resolvable:$true] %s578
          %581 = dma.hbm_to_vmem [thread:$0]  %s576, 48, %s579, %s565
        $region28: #{transformer_forward.1} parent=19 // pred_fallthru
          _
        // Predicated region
        $region29: #{transformer_forward.1} parent=19 // pred_check
          %p582 = pneg %p144
        $region30: #{transformer_forward.1} parent=19 // pred_check_branch
          %584 = sbr.rel (%p582) target = $region32
        $region31: #{transformer_forward.1} parent=19 // pred_region
          %s585 = sand.u32 %s39, 1
          %s586 = scalar_lea.sflag [#allocation6], %s585
          %s587 = sand.u32 %s134, 1
          %s588 = smul.addr %s587, 64
          %s589 = scalar_lea.vmem [#allocation7], %s588
          %p590 = scmp.lt.s32.totalorder %s39, 5
          %s591 = scalar_select %p590, %s39, 5
          %s593 = ssub.s32 1024, 1024
          %594 = vsyncadd %s586, %s593
          %s595 = smul.addr %s591, 16
          %s596 = smul.addr %s595, 64
          %s597 = scalar_lea.hbm %s3, %s596
          %s598 = sshll.u32 %s589, 4
          %s599 = int_to_ptr.vmem [resolvable:$true] %s598
          %604 = dma.hbm_to_vmem [thread:$0]  %s597, 1024, %s599, %s586, 64, 64, 4
        $region32: #{transformer_forward.1} parent=19 // pred_fallthru
          _
        // Predicated region
        $region33: #{transformer_forward.1} parent=19 // pred_check
          %p605 = pneg %p174
        $region34: #{transformer_forward.1} parent=19 // pred_check_branch
          %607 = sbr.rel (%p605) target = $region36
        $region35: #{transformer_forward.1} parent=19 // pred_region
          %s608 = sand.u32 %s39, 1
          %s609 = scalar_lea.sflag [#allocation9], %s608
          %s610 = sand.u32 %s164, 1
          %s611 = scalar_lea.vmem [#allocation8], %s610
          %p612 = scmp.lt.s32.totalorder %s39, 5
          %s613 = scalar_select %p612, %s39, 5
          %s615 = ssub.s32 16, 16
          %616 = vsyncadd %s609, %s615
          %s617 = smul.addr %s613, 16
          %s618 = scalar_lea.hbm %s4, %s617
          %s620 = sshll.u32 %s611, 4
          %s621 = int_to_ptr.vmem [resolvable:$true] %s620
          %623 = dma.hbm_to_vmem [thread:$0]  %s618, 16, %s621, %s609
        $region36: #{transformer_forward.1} parent=19 // pred_fallthru
          _
        // Predicated region
        $region37: #{transformer_forward.1} parent=19 // pred_check
          %p624 = pneg %p204
        $region38: #{transformer_forward.1} parent=19 // pred_check_branch
          %626 = sbr.rel (%p624) target = $region40
        $region39: #{transformer_forward.1} parent=19 // pred_region
          %p627 = scmp.lt.s32.totalorder %s39, 5
          %s628 = scalar_select %p627, %s39, 5
          %p629 = scmp.lt.s32.totalorder %s628, 5
          %s630 = scalar_select %p629, %s628, 5
          %s631 = scalar_lea.vmem %s5, %s630
          %p632 = scmp.lt.s32.totalorder %s39, 5
          %s633 = scalar_select %p632, %s39, 5
        $region40: #{transformer_forward.1} parent=19 // pred_fallthru
          _
        // Predicated region
        $region41: #{transformer_forward.1} parent=19 // pred_check
          %p634 = pneg %p234
        $region42: #{transformer_forward.1} parent=19 // pred_check_branch
          %636 = sbr.rel (%p634) target = $region44
        $region43: #{transformer_forward.1} parent=19 // pred_region
          %s637 = sand.u32 %s39, 1
          %s638 = scalar_lea.sflag [#allocation9], %s637
          %s639 = sand.u32 %s224, 1
          %s640 = scalar_lea.vmem [#allocation10], %s639
          %p641 = scmp.lt.s32.totalorder %s39, 5
          %s642 = scalar_select %p641, %s39, 5
          %s644 = ssub.s32 16, 16
          %645 = vsyncadd %s638, %s644
          %s646 = smul.addr %s642, 16
          %s647 = scalar_lea.hbm %s6, %s646
          %s649 = sshll.u32 %s640, 4
          %s650 = int_to_ptr.vmem [resolvable:$true] %s649
          %652 = dma.hbm_to_vmem [thread:$0]  %s647, 16, %s650, %s638
        $region44: #{transformer_forward.1} parent=19 // pred_fallthru
          _
        // Predicated region
        $region45: #{transformer_forward.1} parent=19 // pred_check
          %p653 = pneg %p264
        $region46: #{transformer_forward.1} parent=19 // pred_check_branch
          %655 = sbr.rel (%p653) target = $region48
        $region47: #{transformer_forward.1} parent=19 // pred_region
          %s656 = sand.u32 %s39, 1
          %s657 = scalar_lea.sflag [#allocation12], %s656
          %s658 = sand.u32 %s254, 1
          %s659 = smul.addr %s658, 256
          %s660 = scalar_lea.vmem [#allocation11], %s659
          %p661 = scmp.lt.s32.totalorder %s39, 5
          %s662 = scalar_select %p661, %s39, 5
          %s664 = ssub.s32 4096, 4096
          %665 = vsyncadd %s657, %s664
          %s666 = smul.addr %s662, 64
          %s667 = smul.addr %s666, 64
          %s668 = scalar_lea.hbm %s7, %s667
          %s669 = sshll.u32 %s660, 4
          %s670 = int_to_ptr.vmem [resolvable:$true] %s669
          %675 = dma.hbm_to_vmem [thread:$0]  %s668, 4096, %s670, %s657, 256, 256, 16
        $region48: #{transformer_forward.1} parent=19 // pred_fallthru
          _
        // Predicated region
        $region49: #{transformer_forward.1} parent=19 // pred_check
          %p676 = pneg %p294
        $region50: #{transformer_forward.1} parent=19 // pred_check_branch
          %678 = sbr.rel (%p676) target = $region52
        $region51: #{transformer_forward.1} parent=19 // pred_region
          %p679 = scmp.lt.s32.totalorder %s39, 5
          %s680 = scalar_select %p679, %s39, 5
          %p681 = scmp.lt.s32.totalorder %s680, 5
          %s682 = scalar_select %p681, %s680, 5
          %s683 = smul.addr %s682, 4
          %s684 = scalar_lea.vmem %s8, %s683
          %p685 = scmp.lt.s32.totalorder %s39, 5
          %s686 = scalar_select %p685, %s39, 5
        $region52: #{transformer_forward.1} parent=19 // pred_fallthru
          _
        // Predicated region
        $region53: #{transformer_forward.1} parent=19 // pred_check
          %p687 = pneg %p324
        $region54: #{transformer_forward.1} parent=19 // pred_check_branch
          %689 = sbr.rel (%p687) target = $region56
        $region55: #{transformer_forward.1} parent=19 // pred_region
          %s690 = sand.u32 %s39, 1
          %s691 = scalar_lea.sflag [#allocation12], %s690
          %s692 = sand.u32 %s314, 1
          %s693 = smul.addr %s692, 256
          %s694 = scalar_lea.vmem [#allocation13], %s693
          %p695 = scmp.lt.s32.totalorder %s39, 5
          %s696 = scalar_select %p695, %s39, 5
          %s698 = ssub.s32 4096, 4096
          %699 = vsyncadd %s691, %s698
          %s700 = smul.addr %s696, 64
          %s701 = smul.addr %s700, 64
          %s702 = scalar_lea.hbm %s9, %s701
          %s703 = sshll.u32 %s694, 4
          %s704 = int_to_ptr.vmem [resolvable:$true] %s703
          %709 = dma.hbm_to_vmem [thread:$0]  %s702, 4096, %s704, %s691, 64, 64, 4
        $region56: #{transformer_forward.1} parent=19 // pred_fallthru
          _
        // Predicated region
        $region57: #{transformer_forward.1} parent=19 // pred_check
          %p710 = pneg %p354
        $region58: #{transformer_forward.1} parent=19 // pred_check_branch
          %712 = sbr.rel (%p710) target = $region60
        $region59: #{transformer_forward.1} parent=19 // pred_region
          %s713 = sand.u32 %s39, 1
          %s714 = scalar_lea.sflag [#allocation15], %s713
          %s715 = sand.u32 %s344, 1
          %s716 = scalar_lea.vmem [#allocation14], %s715
          %p717 = scmp.lt.s32.totalorder %s39, 5
          %s718 = scalar_select %p717, %s39, 5
          %s720 = ssub.s32 16, 16
          %721 = vsyncadd %s714, %s720
          %s722 = smul.addr %s718, 16
          %s723 = scalar_lea.hbm %s10, %s722
          %s725 = sshll.u32 %s716, 4
          %s726 = int_to_ptr.vmem [resolvable:$true] %s725
          %728 = dma.hbm_to_vmem [thread:$0]  %s723, 16, %s726, %s714
        $region60: #{transformer_forward.1} parent=19 // pred_fallthru
          _
        // Predicated region
        $region61: #{transformer_forward.1} parent=19 // pred_check
          %p729 = pneg %p384
        $region62: #{transformer_forward.1} parent=19 // pred_check_branch
          %731 = sbr.rel (%p729) target = $region64
        $region63: #{transformer_forward.1} parent=19 // pred_region
          %p732 = scmp.lt.s32.totalorder %s39, 5
          %s733 = scalar_select %p732, %s39, 5
          %p734 = scmp.lt.s32.totalorder %s733, 5
          %s735 = scalar_select %p734, %s733, 5
          %s736 = scalar_lea.vmem %s11, %s735
          %p737 = scmp.lt.s32.totalorder %s39, 5
          %s738 = scalar_select %p737, %s39, 5
        $region64: #{transformer_forward.1} parent=19 // pred_fallthru
          _
        // Predicated region
        $region65: #{transformer_forward.1} parent=19 // pred_check
          %p739 = pneg %p414
        $region66: #{transformer_forward.1} parent=19 // pred_check_branch
          %741 = sbr.rel (%p739) target = $region68
        $region67: #{transformer_forward.1} parent=19 // pred_region
          %s742 = sand.u32 %s39, 1
          %s743 = scalar_lea.sflag [#allocation15], %s742
          %s744 = sand.u32 %s404, 1
          %s745 = scalar_lea.vmem [#allocation16], %s744
          %p746 = scmp.lt.s32.totalorder %s39, 5
          %s747 = scalar_select %p746, %s39, 5
          %s749 = ssub.s32 16, 16
          %750 = vsyncadd %s743, %s749
          %s751 = smul.addr %s747, 16
          %s752 = scalar_lea.hbm %s12, %s751
          %s754 = sshll.u32 %s745, 4
          %s755 = int_to_ptr.vmem [resolvable:$true] %s754
          %757 = dma.hbm_to_vmem [thread:$0]  %s752, 16, %s755, %s743
        $region68: #{transformer_forward.1} parent=19 // pred_fallthru
          _
        // Predicated region
        $region69: #{transformer_forward.1} parent=19 // pred_check
          %p758 = pneg %p446
        $region70: #{transformer_forward.1} parent=19 // pred_check_branch
          %760 = sbr.rel (%p758) target = $region72
        $region71: #{transformer_forward.1} parent=19 // pred_region
          %s761 = sand.u32 %s436, 1
          %s762 = scalar_lea.sflag [#allocation18], %s761
          %s763 = sand.u32 %s436, 1
          %s764 = smul.addr %s763, 512
          %s765 = scalar_lea.vmem [#allocation17], %s764
          %s766 = ssub.s32 %s39, 6
          %p767 = scmp.gt.s32.totalorder %s766, 0
          %s768 = scalar_select %p767, %s766, 0
          %s769 = smul.u32 8, %s768
          %s771 = ssub.s32 8192, 8192
          %772 = vsyncadd %s762, %s771
          %s773 = smul.addr %s769, 64
          %s774 = scalar_lea.hbm %s13, %s773
          %s775 = sshll.u32 %s765, 4
          %s776 = int_to_ptr.vmem [resolvable:$true] %s775
          %781 = dma.hbm_to_vmem [thread:$0]  %s774, 8192, %s776, %s762, 1024, 512, 32
        $region72: #{transformer_forward.1} parent=19 // pred_fallthru
          _
        // Predicated region
        $region73: #{transformer_forward.1} parent=19 // pred_check
          %p782 = pneg %p478
        $region74: #{transformer_forward.1} parent=19 // pred_check_branch
          %784 = sbr.rel (%p782) target = $region76
        $region75: #{transformer_forward.1} parent=19 // pred_region
          %s785 = ssub.s32 %s39, 6
          %p786 = scmp.gt.s32.totalorder %s785, 0
          %s787 = scalar_select %p786, %s785, 0
          %s788 = smul.u32 8, %s787
          %p789 = scmp.lt.s32.totalorder %s788, 15
          %s790 = scalar_select %p789, %s788, 15
          %s791 = scalar_lea.vmem %s14, %s790
          %s792 = ssub.s32 %s39, 6
          %p793 = scmp.gt.s32.totalorder %s792, 0
          %s794 = scalar_select %p793, %s792, 0
          %s795 = smul.u32 8, %s794
        $region76: #{transformer_forward.1} parent=19 // pred_fallthru
          _
      $region20: #{transformer_forward.1} parent=5 // pred_fallthru
        _
      %p796 = scmp.le.s32.totalorder 1, %s39
      %p797 = scmp.lt.s32.totalorder %s39, 9
      %p798 = pnand %p796, %p797
      %p799 = pneg %p798
      // Predicated region
      $region77: #{transformer_forward.1} parent=5 // pred_check
        _
      $region78: #{transformer_forward.1} parent=5 // pred_check_branch
        %801 = sbr.rel (%p798) target = $region80
      $region79: #{transformer_forward.1} parent=5 // pred_region
        %s802 = ssub.s32 %s39, 1
        %s803 = sand.u32 %s77, 1
        %s804 = scalar_lea.sflag [#allocation4], %s803
        %s805 = sand.u32 %s77, 1
        %s806 = smul.addr %s805, 192
        %s807 = scalar_lea.vmem [#allocation3], %s806
        // Predicated region
        $region81: #{transformer_forward.1} parent=79 // pred_check
          %p808 = pneg %p90
        $region82: #{transformer_forward.1} parent=79 // pred_check_branch
          %810 = sbr.rel (%p808) target = $region84
        $region83: #{transformer_forward.1} parent=79 // pred_region
          %811 = dma.done %s804, 3072
        $region84: #{transformer_forward.1} parent=79 // pred_fallthru
          _
        %s812 = sand.u32 %s44, 1
        %s813 = scalar_lea.sflag [#allocation6], %s812
        %s814 = sand.u32 %s107, 1
        %s815 = smul.addr %s814, 3
        %s816 = scalar_lea.vmem [#allocation5], %s815
        // Predicated region
        $region85: #{transformer_forward.1} parent=79 // pred_check
          %p817 = pneg %p120
        $region86: #{transformer_forward.1} parent=79 // pred_check_branch
          %819 = sbr.rel (%p817) target = $region88
        $region87: #{transformer_forward.1} parent=79 // pred_region
          %820 = dma.done %s813, 48
        $region88: #{transformer_forward.1} parent=79 // pred_fallthru
          _
        %s821 = sand.u32 %s44, 1
        %s822 = scalar_lea.sflag [#allocation6], %s821
        %s823 = sand.u32 %s137, 1
        %s824 = smul.addr %s823, 64
        %s825 = scalar_lea.vmem [#allocation7], %s824
        // Predicated region
        $region89: #{transformer_forward.1} parent=79 // pred_check
          %p826 = pneg %p150
        $region90: #{transformer_forward.1} parent=79 // pred_check_branch
          %828 = sbr.rel (%p826) target = $region92
        $region91: #{transformer_forward.1} parent=79 // pred_region
          %829 = dma.done %s822, 1024
        $region92: #{transformer_forward.1} parent=79 // pred_fallthru
          _
        %s830 = sand.u32 %s44, 1
        %s831 = scalar_lea.sflag [#allocation9], %s830
        %s832 = sand.u32 %s167, 1
        %s833 = scalar_lea.vmem [#allocation8], %s832
        // Predicated region
        $region93: #{transformer_forward.1} parent=79 // pred_check
          %p834 = pneg %p180
        $region94: #{transformer_forward.1} parent=79 // pred_check_branch
          %836 = sbr.rel (%p834) target = $region96
        $region95: #{transformer_forward.1} parent=79 // pred_region
          %837 = dma.done %s831, 16
        $region96: #{transformer_forward.1} parent=79 // pred_fallthru
          _
        %s838 = sand.u32 %s44, 1
        %s839 = scalar_lea.sflag [#allocation9], %s838
        %s840 = sand.u32 %s227, 1
        %s841 = scalar_lea.vmem [#allocation10], %s840
        // Predicated region
        $region97: #{transformer_forward.1} parent=79 // pred_check
          %p842 = pneg %p240
        $region98: #{transformer_forward.1} parent=79 // pred_check_branch
          %844 = sbr.rel (%p842) target = $region100
        $region99: #{transformer_forward.1} parent=79 // pred_region
          %845 = dma.done %s839, 16
        $region100: #{transformer_forward.1} parent=79 // pred_fallthru
          _
        %s846 = sand.u32 %s44, 1
        %s847 = scalar_lea.sflag [#allocation12], %s846
        %s848 = sand.u32 %s257, 1
        %s849 = smul.addr %s848, 256
        %s850 = scalar_lea.vmem [#allocation11], %s849
        // Predicated region
        $region101: #{transformer_forward.1} parent=79 // pred_check
          %p851 = pneg %p270
        $region102: #{transformer_forward.1} parent=79 // pred_check_branch
          %853 = sbr.rel (%p851) target = $region104
        $region103: #{transformer_forward.1} parent=79 // pred_region
          %854 = dma.done %s847, 4096
        $region104: #{transformer_forward.1} parent=79 // pred_fallthru
          _
        %s855 = sand.u32 %s44, 1
        %s856 = scalar_lea.sflag [#allocation12], %s855
        %s857 = sand.u32 %s317, 1
        %s858 = smul.addr %s857, 256
        %s859 = scalar_lea.vmem [#allocation13], %s858
        // Predicated region
        $region105: #{transformer_forward.1} parent=79 // pred_check
          %p860 = pneg %p330
        $region106: #{transformer_forward.1} parent=79 // pred_check_branch
          %862 = sbr.rel (%p860) target = $region108
        $region107: #{transformer_forward.1} parent=79 // pred_region
          %863 = dma.done %s856, 4096
        $region108: #{transformer_forward.1} parent=79 // pred_fallthru
          _
        %s864 = sand.u32 %s44, 1
        %s865 = scalar_lea.sflag [#allocation15], %s864
        %s866 = sand.u32 %s347, 1
        %s867 = scalar_lea.vmem [#allocation14], %s866
        // Predicated region
        $region109: #{transformer_forward.1} parent=79 // pred_check
          %p868 = pneg %p360
        $region110: #{transformer_forward.1} parent=79 // pred_check_branch
          %870 = sbr.rel (%p868) target = $region112
        $region111: #{transformer_forward.1} parent=79 // pred_region
          %871 = dma.done %s865, 16
        $region112: #{transformer_forward.1} parent=79 // pred_fallthru
          _
        %s872 = sand.u32 %s44, 1
        %s873 = scalar_lea.sflag [#allocation15], %s872
        %s874 = sand.u32 %s407, 1
        %s875 = scalar_lea.vmem [#allocation16], %s874
        // Predicated region
        $region113: #{transformer_forward.1} parent=79 // pred_check
          %p876 = pneg %p420
        $region114: #{transformer_forward.1} parent=79 // pred_check_branch
          %878 = sbr.rel (%p876) target = $region116
        $region115: #{transformer_forward.1} parent=79 // pred_region
          %879 = dma.done %s873, 16
        $region116: #{transformer_forward.1} parent=79 // pred_fallthru
          _
        %s880 = sand.u32 %s439, 1
        %s881 = scalar_lea.sflag [#allocation18], %s880
        %s882 = sand.u32 %s439, 1
        %s883 = smul.addr %s882, 512
        %s884 = scalar_lea.vmem [#allocation17], %s883
        // Predicated region
        $region117: #{transformer_forward.1} parent=79 // pred_check
          %p885 = pneg %p452
        $region118: #{transformer_forward.1} parent=79 // pred_check_branch
          %887 = sbr.rel (%p885) target = $region120
        $region119: #{transformer_forward.1} parent=79 // pred_region
          %888 = dma.done %s881, 8192
        $region120: #{transformer_forward.1} parent=79 // pred_fallthru
          _
        %p889 = pneg %p60
        %p890 = pneg %p57
        %s891 = sand.u32 %s77, 1
        %s892 = scalar_lea.sflag [#allocation4], %s891
        %s893 = sand.u32 %s77, 1
        %s894 = smul.addr %s893, 192
        %s895 = scalar_lea.vmem [#allocation3], %s894
        %p896 = pneg %p90
        %p897 = pneg %p87
        %s898 = sand.u32 %s44, 1
        %s899 = scalar_lea.sflag [#allocation6], %s898
        %s900 = sand.u32 %s107, 1
        %s901 = smul.addr %s900, 3
        %s902 = scalar_lea.vmem [#allocation5], %s901
        %p903 = pneg %p120
        %p904 = pneg %p117
        %s905 = sand.u32 %s44, 1
        %s906 = scalar_lea.sflag [#allocation6], %s905
        %s907 = sand.u32 %s137, 1
        %s908 = smul.addr %s907, 64
        %s909 = scalar_lea.vmem [#allocation7], %s908
        %p910 = pneg %p150
        %p911 = pneg %p147
        %s912 = sand.u32 %s44, 1
        %s913 = scalar_lea.sflag [#allocation9], %s912
        %s914 = sand.u32 %s167, 1
        %s915 = scalar_lea.vmem [#allocation8], %s914
        %p916 = pneg %p180
        %p917 = pneg %p177
        %p918 = scmp.lt.s32.totalorder %s44, 5
        %s919 = scalar_select %p918, %s44, 5
        %p920 = scmp.lt.s32.totalorder %s919, 5
        %s921 = scalar_select %p920, %s919, 5
        %s922 = scalar_lea.vmem %s5, %s921
        %p923 = pneg %p210
        %p924 = pneg %p207
        %s925 = sand.u32 %s44, 1
        %s926 = scalar_lea.sflag [#allocation9], %s925
        %s927 = sand.u32 %s227, 1
        %s928 = scalar_lea.vmem [#allocation10], %s927
        %p929 = pneg %p240
        %p930 = pneg %p237
        %s931 = sand.u32 %s44, 1
        %s932 = scalar_lea.sflag [#allocation12], %s931
        %s933 = sand.u32 %s257, 1
        %s934 = smul.addr %s933, 256
        %s935 = scalar_lea.vmem [#allocation11], %s934
        %p936 = pneg %p270
        %p937 = pneg %p267
        %p938 = scmp.lt.s32.totalorder %s44, 5
        %s939 = scalar_select %p938, %s44, 5
        %p940 = scmp.lt.s32.totalorder %s939, 5
        %s941 = scalar_select %p940, %s939, 5
        %s942 = smul.addr %s941, 4
        %s943 = scalar_lea.vmem %s8, %s942
        %p944 = pneg %p300
        %p945 = pneg %p297
        %s946 = sand.u32 %s44, 1
        %s947 = scalar_lea.sflag [#allocation12], %s946
        %s948 = sand.u32 %s317, 1
        %s949 = smul.addr %s948, 256
        %s950 = scalar_lea.vmem [#allocation13], %s949
        %p951 = pneg %p330
        %p952 = pneg %p327
        %s953 = sand.u32 %s44, 1
        %s954 = scalar_lea.sflag [#allocation15], %s953
        %s955 = sand.u32 %s347, 1
        %s956 = scalar_lea.vmem [#allocation14], %s955
        %p957 = pneg %p360
        %p958 = pneg %p357
        %p959 = scmp.lt.s32.totalorder %s44, 5
        %s960 = scalar_select %p959, %s44, 5
        %p961 = scmp.lt.s32.totalorder %s960, 5
        %s962 = scalar_select %p961, %s960, 5
        %s963 = scalar_lea.vmem %s11, %s962
        %p964 = pneg %p390
        %p965 = pneg %p387
        %s966 = sand.u32 %s44, 1
        %s967 = scalar_lea.sflag [#allocation15], %s966
        %s968 = sand.u32 %s407, 1
        %s969 = scalar_lea.vmem [#allocation16], %s968
        %p970 = pneg %p420
        %p971 = pneg %p417
        %s972 = sand.u32 %s439, 1
        %s973 = scalar_lea.sflag [#allocation18], %s972
        %s974 = sand.u32 %s439, 1
        %s975 = smul.addr %s974, 512
        %s976 = scalar_lea.vmem [#allocation17], %s975
        %p977 = pneg %p452
        %p978 = pneg %p449
        %s979 = ssub.s32 %s44, 6
        %p980 = scmp.gt.s32.totalorder %s979, 0
        %s981 = scalar_select %p980, %s979, 0
        %s982 = smul.u32 8, %s981
        %p983 = scmp.lt.s32.totalorder %s982, 15
        %s984 = scalar_select %p983, %s982, 15
        %s985 = scalar_lea.vmem %s14, %s984
        %p986 = pneg %p484
        %p987 = pneg %p481
        %p988 = pneg %p516
        %p989 = pneg %p513
        %s990 = ssub.s32 %s44, 6
        %p991 = scmp.gt.s32.totalorder %s990, 0
        %s992 = scalar_select %p991, %s990, 0
        %s993 = smul.u32 8, %s992
        %p994 = scmp.lt.s32.totalorder %s993, 15
        %s995 = scalar_select %p994, %s993, 15
        %s996 = smul.addr %s995, 8
        %s997 = scalar_lea.vmem %s15, %s996
        %p998 = scmp.lt.s32.totalorder %s44, 5
        %s999 = scalar_select %p998, %s44, 5
        %p1000 = scmp.lt.s32.totalorder %s44, 5
        %s1001 = scalar_select %p1000, %s44, 5
        %p1002 = scmp.lt.s32.totalorder %s44, 5
        %s1003 = scalar_select %p1002, %s44, 5
        %p1004 = scmp.lt.s32.totalorder %s44, 5
        %s1005 = scalar_select %p1004, %s44, 5
        %p1006 = scmp.lt.s32.totalorder %s44, 5
        %s1007 = scalar_select %p1006, %s44, 5
        %p1008 = scmp.lt.s32.totalorder %s1007, 5
        %s1009 = scalar_select %p1008, %s1007, 5
        %s1010 = scalar_lea.vmem %s5, %s1009
        %p1011 = scmp.lt.s32.totalorder %s44, 5
        %s1012 = scalar_select %p1011, %s44, 5
        %p1013 = scmp.lt.s32.totalorder %s44, 5
        %s1014 = scalar_select %p1013, %s44, 5
        %p1015 = scmp.lt.s32.totalorder %s44, 5
        %s1016 = scalar_select %p1015, %s44, 5
        %p1017 = scmp.lt.s32.totalorder %s44, 5
        %s1018 = scalar_select %p1017, %s44, 5
        %p1019 = scmp.lt.s32.totalorder %s1018, 5
        %s1020 = scalar_select %p1019, %s1018, 5
        %s1021 = smul.addr %s1020, 4
        %s1022 = scalar_lea.vmem %s8, %s1021
        %p1023 = scmp.lt.s32.totalorder %s44, 5
        %s1024 = scalar_select %p1023, %s44, 5
        %p1025 = scmp.lt.s32.totalorder %s44, 5
        %s1026 = scalar_select %p1025, %s44, 5
        %p1027 = scmp.lt.s32.totalorder %s44, 5
        %s1028 = scalar_select %p1027, %s44, 5
        %p1029 = scmp.lt.s32.totalorder %s44, 5
        %s1030 = scalar_select %p1029, %s44, 5
        %p1031 = scmp.lt.s32.totalorder %s1030, 5
        %s1032 = scalar_select %p1031, %s1030, 5
        %s1033 = scalar_lea.vmem %s11, %s1032
        %p1034 = scmp.lt.s32.totalorder %s44, 5
        %s1035 = scalar_select %p1034, %s44, 5
        %p1036 = scmp.lt.s32.totalorder %s44, 5
        %s1037 = scalar_select %p1036, %s44, 5
        %s1038 = ssub.s32 %s44, 6
        %p1039 = scmp.gt.s32.totalorder %s1038, 0
        %s1040 = scalar_select %p1039, %s1038, 0
        %s1041 = smul.u32 8, %s1040
        %s1042 = ssub.s32 %s44, 6
        %p1043 = scmp.gt.s32.totalorder %s1042, 0
        %s1044 = scalar_select %p1043, %s1042, 0
        %s1045 = smul.u32 8, %s1044
        %p1046 = scmp.lt.s32.totalorder %s1045, 15
        %s1047 = scalar_select %p1046, %s1045, 15
        %s1048 = scalar_lea.vmem %s14, %s1047
        %s1049 = ssub.s32 %s44, 6
        %p1050 = scmp.gt.s32.totalorder %s1049, 0
        %s1051 = scalar_select %p1050, %s1049, 0
        %s1052 = smul.u32 8, %s1051
        %s1053 = ssub.s32 %s44, 6
        %p1054 = scmp.gt.s32.totalorder %s1053, 0
        %s1055 = scalar_select %p1054, %s1053, 0
        %s1056 = smul.u32 8, %s1055
        %p1057 = scmp.lt.s32.totalorder %s1056, 15
        %s1058 = scalar_select %p1057, %s1056, 15
        %s1059 = smul.addr %s1058, 8
        %s1060 = scalar_lea.vmem %s15, %s1059
        %s1061 = ssub.s32 %s44, 6
        %p1062 = scmp.gt.s32.totalorder %s1061, 0
        %s1063 = scalar_select %p1062, %s1061, 0
        %s1064 = smul.u32 8, %s1063
        %p1066 = scmp.lt.s32.totalorder %s44, 6
        // Predicated region
        $region121: #{transformer_forward.1} parent=79 // pred_check
          %p1067 = pneg %p1066
        $region122: #{transformer_forward.1} parent=79 // pred_check_branch
          %1069 = sbr.rel (%p1067) target = $region124
        $region123: #{transformer_forward.1} parent=79 // pred_region
          %p1070 = scmp.eq.s32.totalorder %s44, 0
          // Predicated region
          $region125: #{transformer_forward.1} parent=123 // pred_check
            %p1071 = pneg %p1070
          $region126: #{transformer_forward.1} parent=123 // pred_check_branch
            %1073 = sbr.rel (%p1071) target = $region128
          $region127: #{transformer_forward.1} parent=123 // pred_region
            %v1074 = vld [vmem:[%s0] sm:$0xff]
            %1075 = vst [vmem:[#allocation2] sm:$0xff] %v1074
          $region128: #{transformer_forward.1} parent=123 // pred_fallthru
            _
          %v1076 = vld [vmem:[#allocation2] sm:$0xff]
          %v1077 = vpack.c.bf16 %v1076, %v1076
          %v1078 = vld [vmem:[%s807] sm:$0xff]
          %v1079 = vld [vmem:[%s807 + $0x8] sm:$0xf]
          %v1080 = vld [vmem:[%s807 + $0xc] sm:$0xff]
          %v1081 = vld [vmem:[%s807 + $0x14] sm:$0xf]
          %v1082 = vld [vmem:[%s807 + $0x18] sm:$0xff]
          %v1083 = vld [vmem:[%s807 + $0x20] sm:$0xf]
          %v1084 = vld [vmem:[%s807 + $0x24] sm:$0xff]
          %v1085 = vld [vmem:[%s807 + $0x2c] sm:$0xf]
          %v1086 = vld [vmem:[%s807 + $0x30] sm:$0xff]
          %v1087 = vld [vmem:[%s807 + $0x38] sm:$0xf]
          %v1088 = vld [vmem:[%s807 + $0x3c] sm:$0xff]
          %v1089 = vld [vmem:[%s807 + $0x44] sm:$0xf]
          %v1090 = vld [vmem:[%s807 + $0x48] sm:$0xff]
          %v1091 = vld [vmem:[%s807 + $0x50] sm:$0xf]
          %v1092 = vld [vmem:[%s807 + $0x54] sm:$0xff]
          %v1093 = vld [vmem:[%s807 + $0x5c] sm:$0xf]
          %v1094 = vld [vmem:[%s807 + $0x60] sm:$0xff]
          %v1095 = vld [vmem:[%s807 + $0x68] sm:$0xf]
          %v1096 = vld [vmem:[%s807 + $0x6c] sm:$0xff]
          %v1097 = vld [vmem:[%s807 + $0x74] sm:$0xf]
          %v1098 = vld [vmem:[%s807 + $0x78] sm:$0xff]
          %v1099 = vld [vmem:[%s807 + $0x80] sm:$0xf]
          %v1100 = vld [vmem:[%s807 + $0x84] sm:$0xff]
          %v1101 = vld [vmem:[%s807 + $0x8c] sm:$0xf]
          %v1102 = vld [vmem:[%s807 + $0x90] sm:$0xff]
          %v1103 = vld [vmem:[%s807 + $0x98] sm:$0xf]
          %v1104 = vld [vmem:[%s807 + $0x9c] sm:$0xff]
          %v1105 = vld [vmem:[%s807 + $0xa4] sm:$0xf]
          %v1106 = vld [vmem:[%s807 + $0xa8] sm:$0xff]
          %v1107 = vld [vmem:[%s807 + $0xb0] sm:$0xf]
          %v1108 = vld [vmem:[%s807 + $0xb4] sm:$0xff]
          %v1109 = vld [vmem:[%s807 + $0xbc] sm:$0xf]
          %v1110 = vld [vmem:[%s816] sm:$0x7]
          %v1112 = vlaneseq
          %v1113 = vshrl.u32 %v1112, 7
          %v1114 = vsub.s32 0, %v1113
          %v1115 = vrot.slane %v1110, %v1114
          %v1116 = vlaneseq
          %v1117 = vshrl.u32 %v1116, 7
          %v1118 = vsub.s32 1, %v1117
          %v1119 = vrot.slane %v1110, %v1118
          %v1120 = vlaneseq
          %v1121 = vshrl.u32 %v1120, 7
          %v1122 = vsub.s32 2, %v1121
          %v1123 = vrot.slane %v1110, %v1122
          %v1159 = vunpack.c.l.b16 %v1078
          %v1160 = vunpack.c.h.b16 %v1078
          %v1161 = vunpack.c.l.b16 %v1079
          %v1162 = vunpack.c.l.b16 %v1080
          %v1163 = vunpack.c.h.b16 %v1080
          %v1164 = vunpack.c.l.b16 %v1081
          %v1165 = vunpack.c.l.b16 %v1082
          %v1166 = vunpack.c.h.b16 %v1082
          %v1167 = vunpack.c.l.b16 %v1083
          %v1168 = vunpack.c.l.b16 %v1084
          %v1169 = vunpack.c.h.b16 %v1084
          %v1170 = vunpack.c.l.b16 %v1085
          %v1171 = vunpack.c.l.b16 %v1086
          %v1172 = vunpack.c.h.b16 %v1086
          %v1173 = vunpack.c.l.b16 %v1087
          %v1174 = vunpack.c.l.b16 %v1088
          %v1175 = vunpack.c.h.b16 %v1088
          %v1176 = vunpack.c.l.b16 %v1089
          %v1177 = vunpack.c.l.b16 %v1090
          %v1178 = vunpack.c.h.b16 %v1090
          %v1179 = vunpack.c.l.b16 %v1091
          %v1180 = vunpack.c.l.b16 %v1092
          %v1181 = vunpack.c.h.b16 %v1092
          %v1182 = vunpack.c.l.b16 %v1093
          %v1183 = vunpack.c.l.b16 %v1094
          %v1184 = vunpack.c.h.b16 %v1094
          %v1185 = vunpack.c.l.b16 %v1095
          %v1186 = vunpack.c.l.b16 %v1096
          %v1187 = vunpack.c.h.b16 %v1096
          %v1188 = vunpack.c.l.b16 %v1097
          %v1189 = vunpack.c.l.b16 %v1098
          %v1190 = vunpack.c.h.b16 %v1098
          %v1191 = vunpack.c.l.b16 %v1099
          %v1192 = vunpack.c.l.b16 %v1100
          %v1193 = vunpack.c.h.b16 %v1100
          %v1194 = vunpack.c.l.b16 %v1101
          %v1195 = vunpack.c.l.b16 %v1102
          %v1196 = vunpack.c.h.b16 %v1102
          %v1197 = vunpack.c.l.b16 %v1103
          %v1198 = vunpack.c.l.b16 %v1104
          %v1199 = vunpack.c.h.b16 %v1104
          %v1200 = vunpack.c.l.b16 %v1105
          %v1201 = vunpack.c.l.b16 %v1106
          %v1202 = vunpack.c.h.b16 %v1106
          %v1203 = vunpack.c.l.b16 %v1107
          %v1204 = vunpack.c.l.b16 %v1108
          %v1205 = vunpack.c.h.b16 %v1108
          %v1206 = vunpack.c.l.b16 %v1109
          %v1207 = vpack.c.b16 %v1162, %v1159
          %v1208 = vpack.c.b16 %v1163, %v1160
          %v1209 = vpack.c.b16 %v1164, %v1161
          %v1210 = vpack.c.b16 %v1168, %v1165
          %v1211 = vpack.c.b16 %v1169, %v1166
          %v1212 = vpack.c.b16 %v1170, %v1167
          %v1213 = vpack.c.b16 %v1174, %v1171
          %v1214 = vpack.c.b16 %v1175, %v1172
          %v1215 = vpack.c.b16 %v1176, %v1173
          %v1216 = vpack.c.b16 %v1180, %v1177
          %v1217 = vpack.c.b16 %v1181, %v1178
          %v1218 = vpack.c.b16 %v1182, %v1179
          %v1219 = vpack.c.b16 %v1186, %v1183
          %v1220 = vpack.c.b16 %v1187, %v1184
          %v1221 = vpack.c.b16 %v1188, %v1185
          %v1222 = vpack.c.b16 %v1192, %v1189
          %v1223 = vpack.c.b16 %v1193, %v1190
          %v1224 = vpack.c.b16 %v1194, %v1191
          %v1225 = vpack.c.b16 %v1198, %v1195
          %v1226 = vpack.c.b16 %v1199, %v1196
          %v1227 = vpack.c.b16 %v1200, %v1197
          %v1228 = vpack.c.b16 %v1204, %v1201
          %v1229 = vpack.c.b16 %v1205, %v1202
          %v1230 = vpack.c.b16 %v1206, %v1203
          %1255 = vmatprep.subr.bf16.mxu0 %v1208
          %1256 = vmatpush1.bf16.msra.mxu0 %v1207
          %1257 = vmatprep.subr.bf16.mxu0 %v1211
          %1258 = vmatpush1.bf16.msra.mxu0 %v1210
          %1259 = vmatprep.subr.bf16.mxu0 %v1214
          %1260 = vmatpush1.bf16.msra.mxu0 %v1213
          %1261 = vmatprep.subr.bf16.mxu0 %v1217
          %1262 = vmatpush1.bf16.msra.mxu0 %v1216
          %1263 = vmatprep.subr.bf16.mxu0 %v1220
          %1264 = vmatpush1.bf16.msra.mxu0 %v1219
          %1265 = vmatprep.subr.bf16.mxu0 %v1223
          %1266 = vmatpush1.bf16.msra.mxu0 %v1222
          %1267 = vmatprep.subr.bf16.mxu0 %v1226
          %1268 = vmatpush1.bf16.msra.mxu0 %v1225
          %1269 = vmatprep.subr.bf16.mxu0 %v1229
          %1270 = vmatpush1.bf16.msra.mxu0 %v1228
          %1271 = vmatprep.subr.bf16.mxu0 0
          %1272 = vmatpush1.bf16.msra.mxu0 0
          %1273 = vmatprep.subr.bf16.mxu0 0
          %1274 = vmatpush1.bf16.msra.mxu0 0
          %1275 = vmatprep.subr.bf16.mxu0 0
          %1276 = vmatpush1.bf16.msra.mxu0 0
          %1277 = vmatprep.subr.bf16.mxu0 0
          %1278 = vmatpush1.bf16.msra.mxu0 0
          %1279 = vmatprep.subr.bf16.mxu0 0
          %1280 = vmatpush1.bf16.msra.mxu0 0
          %1281 = vmatprep.subr.bf16.mxu0 0
          %1282 = vmatpush1.bf16.msra.mxu0 0
          %1283 = vmatprep.subr.bf16.mxu0 0
          %1284 = vmatpush1.bf16.msra.mxu0 0
          %1285 = vmatprep.subr.bf16.mxu0 0
          %1286 = vmatpush1.bf16.msra.mxu0 0
          %1287 = vmatprep.mubr.bf16.mxu0 0
          %1288 = vmatmul.mubr.bf16.gmra.mrb[0].mxu0 %v1077
          %v1289 = vpop.f32.mrb[0].mxu0
          %v1290 = vadd.f32 %v1115, %v1289
          %v1291 = vpop.f32.mrb[0].mxu0
          %v1292 = vadd.f32 %v1119, %v1291
          %v1293 = vpop.f32.mrb[0].mxu0
          %v1294 = vpop.f32.mrb[0].mxu0
          %1295 = vdwg.mxu0
          %1296 = vmatprep.subr.bf16.mxu0 0
          %1297 = vmatpush1.bf16.msra.mxu0 %v1209
          %1298 = vmatprep.subr.bf16.mxu0 0
          %1299 = vmatpush1.bf16.msra.mxu0 %v1212
          %1300 = vmatprep.subr.bf16.mxu0 0
          %1301 = vmatpush1.bf16.msra.mxu0 %v1215
          %1302 = vmatprep.subr.bf16.mxu0 0
          %1303 = vmatpush1.bf16.msra.mxu0 %v1218
          %1304 = vmatprep.subr.bf16.mxu0 0
          %1305 = vmatpush1.bf16.msra.mxu0 %v1221
          %1306 = vmatprep.subr.bf16.mxu0 0
          %1307 = vmatpush1.bf16.msra.mxu0 %v1224
          %1308 = vmatprep.subr.bf16.mxu0 0
          %1309 = vmatpush1.bf16.msra.mxu0 %v1227
          %1310 = vmatprep.subr.bf16.mxu0 0
          %1311 = vmatpush1.bf16.msra.mxu0 %v1230
          %1312 = vmatprep.subr.bf16.mxu0 0
          %1313 = vmatpush1.bf16.msra.mxu0 0
          %1314 = vmatprep.subr.bf16.mxu0 0
          %1315 = vmatpush1.bf16.msra.mxu0 0
          %1316 = vmatprep.subr.bf16.mxu0 0
          %1317 = vmatpush1.bf16.msra.mxu0 0
          %1318 = vmatprep.subr.bf16.mxu0 0
          %1319 = vmatpush1.bf16.msra.mxu0 0
          %1320 = vmatprep.subr.bf16.mxu0 0
          %1321 = vmatpush1.bf16.msra.mxu0 0
          %1322 = vmatprep.subr.bf16.mxu0 0
          %1323 = vmatpush1.bf16.msra.mxu0 0
          %1324 = vmatprep.subr.bf16.mxu0 0
          %1325 = vmatpush1.bf16.msra.mxu0 0
          %1326 = vmatprep.subr.bf16.mxu0 0
          %1327 = vmatpush1.bf16.msra.mxu0 0
          %1328 = vmatprep.mubr.bf16.mxu0 0
          %1329 = vmatmul.mubr.bf16.gmra.mrb[0].mxu0 %v1077
          %v1330 = vpop.f32.mrb[0].mxu0
          %v1331 = vadd.f32 %v1123, %v1330
          %v1332 = vpop.f32.mrb[0].mxu0
          %v1333 = vpop.f32.mrb[0].mxu0
          %v1334 = vpop.f32.mrb[0].mxu0
          %1335 = vdwg.mxu0
          %1337 = vrot.lane.b32.xlu0 %v1290, 112
          %v1338 = vpop.permute.xlu0 %1337
          %1340 = vrot.lane.b32.xlu0 %v1290, 96
          %v1341 = vpop.permute.xlu0 %1340
          %1343 = vrot.lane.b32.xlu0 %v1290, 80
          %v1344 = vpop.permute.xlu0 %1343
          %1346 = vrot.lane.b32.xlu0 %v1290, 64
          %v1347 = vpop.permute.xlu0 %1346
          %1349 = vrot.lane.b32.xlu0 %v1290, 48
          %v1350 = vpop.permute.xlu0 %1349
          %1352 = vrot.lane.b32.xlu0 %v1290, 32
          %v1353 = vpop.permute.xlu0 %1352
          %1355 = vrot.lane.b32.xlu0 %v1290, 16
          %v1356 = vpop.permute.xlu0 %1355
          %v1358 = vcombine.low %v1290, %v1341
          %v1359 = vcombine.high %v1290, %v1341
          %v1361 = vunpack.c.l.s4 1983009808
          %v1362 = vunpack.c.0.s8 %v1361
          %v1363 = vlaneseq
          %v1364 = vshrl.u32 %v1363, 7
          %v1365 = vsub.s32 %v1362, %v1364
          %v1366 = vrot.slane %v1358, %v1365
          %v1368 = vunpack.c.l.s4 1983009808
          %v1369 = vunpack.c.0.s8 %v1368
          %v1370 = vlaneseq
          %v1371 = vshrl.u32 %v1370, 7
          %v1372 = vsub.s32 %v1369, %v1371
          %v1373 = vrot.slane %v1359, %v1372
          %v1374 = vcombine.low %v1338, %v1344
          %v1375 = vcombine.high %v1338, %v1344
          %v1377 = vunpack.c.l.s4 1983009808
          %v1378 = vunpack.c.0.s8 %v1377
          %v1379 = vlaneseq
          %v1380 = vshrl.u32 %v1379, 7
          %v1381 = vsub.s32 %v1378, %v1380
          %v1382 = vrot.slane %v1374, %v1381
          %v1384 = vunpack.c.l.s4 1983009808
          %v1385 = vunpack.c.0.s8 %v1384
          %v1386 = vlaneseq
          %v1387 = vshrl.u32 %v1386, 7
          %v1388 = vsub.s32 %v1385, %v1387
          %v1389 = vrot.slane %v1375, %v1388
          %v1390 = vcombine.low %v1347, %v1353
          %v1391 = vcombine.high %v1347, %v1353
          %v1393 = vunpack.c.l.s4 1983009808
          %v1394 = vunpack.c.0.s8 %v1393
          %v1395 = vlaneseq
          %v1396 = vshrl.u32 %v1395, 7
          %v1397 = vsub.s32 %v1394, %v1396
          %v1398 = vrot.slane %v1390, %v1397
          %v1400 = vunpack.c.l.s4 1983009808
          %v1401 = vunpack.c.0.s8 %v1400
          %v1402 = vlaneseq
          %v1403 = vshrl.u32 %v1402, 7
          %v1404 = vsub.s32 %v1401, %v1403
          %v1405 = vrot.slane %v1391, %v1404
          %v1406 = vcombine.low %v1350, %v1356
          %v1407 = vcombine.high %v1350, %v1356
          %v1409 = vunpack.c.l.s4 1983009808
          %v1410 = vunpack.c.0.s8 %v1409
          %v1411 = vlaneseq
          %v1412 = vshrl.u32 %v1411, 7
          %v1413 = vsub.s32 %v1410, %v1412
          %v1414 = vrot.slane %v1406, %v1413
          %v1416 = vunpack.c.l.s4 1983009808
          %v1417 = vunpack.c.0.s8 %v1416
          %v1418 = vlaneseq
          %v1419 = vshrl.u32 %v1418, 7
          %v1420 = vsub.s32 %v1417, %v1419
          %v1421 = vrot.slane %v1407, %v1420
          %v1422 = vcombine.low %v1366, %v1382
          %v1423 = vcombine.high %v1366, %v1382
          %v1425 = vunpack.c.l.s4 1934713408
          %v1426 = vunpack.c.0.s8 %v1425
          %v1427 = vlaneseq
          %v1428 = vshrl.u32 %v1427, 7
          %v1429 = vsub.s32 %v1426, %v1428
          %v1430 = vrot.slane %v1422, %v1429
          %v1432 = vunpack.c.l.s4 1934713408
          %v1433 = vunpack.c.0.s8 %v1432
          %v1434 = vlaneseq
          %v1435 = vshrl.u32 %v1434, 7
          %v1436 = vsub.s32 %v1433, %v1435
          %v1437 = vrot.slane %v1423, %v1436
          %v1438 = vcombine.low %v1373, %v1389
          %v1439 = vcombine.high %v1373, %v1389
          %v1441 = vunpack.c.l.s4 1934713408
          %v1442 = vunpack.c.0.s8 %v1441
          %v1443 = vlaneseq
          %v1444 = vshrl.u32 %v1443, 7
          %v1445 = vsub.s32 %v1442, %v1444
          %v1446 = vrot.slane %v1438, %v1445
          %v1448 = vunpack.c.l.s4 1934713408
          %v1449 = vunpack.c.0.s8 %v1448
          %v1450 = vlaneseq
          %v1451 = vshrl.u32 %v1450, 7
          %v1452 = vsub.s32 %v1449, %v1451
          %v1453 = vrot.slane %v1439, %v1452
          %v1454 = vcombine.low %v1398, %v1414
          %v1455 = vcombine.high %v1398, %v1414
          %v1457 = vunpack.c.l.s4 1934713408
          %v1458 = vunpack.c.0.s8 %v1457
          %v1459 = vlaneseq
          %v1460 = vshrl.u32 %v1459, 7
          %v1461 = vsub.s32 %v1458, %v1460
          %v1462 = vrot.slane %v1454, %v1461
          %v1464 = vunpack.c.l.s4 1934713408
          %v1465 = vunpack.c.0.s8 %v1464
          %v1466 = vlaneseq
          %v1467 = vshrl.u32 %v1466, 7
          %v1468 = vsub.s32 %v1465, %v1467
          %v1469 = vrot.slane %v1455, %v1468
          %v1470 = vcombine.low %v1405, %v1421
          %v1471 = vcombine.high %v1405, %v1421
          %v1473 = vunpack.c.l.s4 1934713408
          %v1474 = vunpack.c.0.s8 %v1473
          %v1475 = vlaneseq
          %v1476 = vshrl.u32 %v1475, 7
          %v1477 = vsub.s32 %v1474, %v1476
          %v1478 = vrot.slane %v1470, %v1477
          %v1480 = vunpack.c.l.s4 1934713408
          %v1481 = vunpack.c.0.s8 %v1480
          %v1482 = vlaneseq
          %v1483 = vshrl.u32 %v1482, 7
          %v1484 = vsub.s32 %v1481, %v1483
          %v1485 = vrot.slane %v1471, %v1484
          %v1486 = vcombine.low %v1430, %v1462
          %v1487 = vcombine.high %v1430, %v1462
          %v1488 = vcombine.low %v1437, %v1469
          %v1489 = vcombine.high %v1437, %v1469
          %v1490 = vcombine.low %v1446, %v1478
          %v1491 = vcombine.high %v1446, %v1478
          %v1492 = vcombine.low %v1453, %v1485
          %v1493 = vcombine.high %v1453, %v1485
          %v1494 = vcombine.low %v1486, %v1488
          %v1495 = vcombine.high %v1486, %v1488
          %v1497 = vunpack.c.l.s4 1983009808
          %v1498 = vunpack.c.0.s8 %v1497
          %v1499 = vlaneseq
          %v1500 = vshrl.u32 %v1499, 7
          %v1501 = vsub.s32 %v1498, %v1500
          %v1502 = vrot.slane %v1494, %v1501
          %v1504 = vunpack.c.l.s4 1983009808
          %v1505 = vunpack.c.0.s8 %v1504
          %v1506 = vlaneseq
          %v1507 = vshrl.u32 %v1506, 7
          %v1508 = vsub.s32 %v1505, %v1507
          %v1509 = vrot.slane %v1495, %v1508
          %v1510 = vcombine.low %v1487, %v1489
          %v1511 = vcombine.high %v1487, %v1489
          %v1513 = vunpack.c.l.s4 1983009808
          %v1514 = vunpack.c.0.s8 %v1513
          %v1515 = vlaneseq
          %v1516 = vshrl.u32 %v1515, 7
          %v1517 = vsub.s32 %v1514, %v1516
          %v1518 = vrot.slane %v1510, %v1517
          %v1520 = vunpack.c.l.s4 1983009808
          %v1521 = vunpack.c.0.s8 %v1520
          %v1522 = vlaneseq
          %v1523 = vshrl.u32 %v1522, 7
          %v1524 = vsub.s32 %v1521, %v1523
          %v1525 = vrot.slane %v1511, %v1524
          %v1526 = vcombine.low %v1490, %v1492
          %v1527 = vcombine.high %v1490, %v1492
          %v1529 = vunpack.c.l.s4 1983009808
          %v1530 = vunpack.c.0.s8 %v1529
          %v1531 = vlaneseq
          %v1532 = vshrl.u32 %v1531, 7
          %v1533 = vsub.s32 %v1530, %v1532
          %v1534 = vrot.slane %v1526, %v1533
          %v1536 = vunpack.c.l.s4 1983009808
          %v1537 = vunpack.c.0.s8 %v1536
          %v1538 = vlaneseq
          %v1539 = vshrl.u32 %v1538, 7
          %v1540 = vsub.s32 %v1537, %v1539
          %v1541 = vrot.slane %v1527, %v1540
          %v1542 = vcombine.low %v1491, %v1493
          %v1543 = vcombine.high %v1491, %v1493
          %v1545 = vunpack.c.l.s4 1983009808
          %v1546 = vunpack.c.0.s8 %v1545
          %v1547 = vlaneseq
          %v1548 = vshrl.u32 %v1547, 7
          %v1549 = vsub.s32 %v1546, %v1548
          %v1550 = vrot.slane %v1542, %v1549
          %v1552 = vunpack.c.l.s4 1983009808
          %v1553 = vunpack.c.0.s8 %v1552
          %v1554 = vlaneseq
          %v1555 = vshrl.u32 %v1554, 7
          %v1556 = vsub.s32 %v1553, %v1555
          %v1557 = vrot.slane %v1543, %v1556
          %v1558 = vcombine.low %v1502, %v1518
          %v1559 = vcombine.high %v1502, %v1518
          %v1561 = vunpack.c.l.s4 1934713408
          %v1562 = vunpack.c.0.s8 %v1561
          %v1563 = vlaneseq
          %v1564 = vshrl.u32 %v1563, 7
          %v1565 = vsub.s32 %v1562, %v1564
          %v1566 = vrot.slane %v1558, %v1565
          %v1568 = vunpack.c.l.s4 1934713408
          %v1569 = vunpack.c.0.s8 %v1568
          %v1570 = vlaneseq
          %v1571 = vshrl.u32 %v1570, 7
          %v1572 = vsub.s32 %v1569, %v1571
          %v1573 = vrot.slane %v1559, %v1572
          %v1574 = vcombine.low %v1509, %v1525
          %v1575 = vcombine.high %v1509, %v1525
          %v1577 = vunpack.c.l.s4 1934713408
          %v1578 = vunpack.c.0.s8 %v1577
          %v1579 = vlaneseq
          %v1580 = vshrl.u32 %v1579, 7
          %v1581 = vsub.s32 %v1578, %v1580
          %v1582 = vrot.slane %v1574, %v1581
          %v1584 = vunpack.c.l.s4 1934713408
          %v1585 = vunpack.c.0.s8 %v1584
          %v1586 = vlaneseq
          %v1587 = vshrl.u32 %v1586, 7
          %v1588 = vsub.s32 %v1585, %v1587
          %v1589 = vrot.slane %v1575, %v1588
          %v1590 = vcombine.low %v1534, %v1550
          %v1591 = vcombine.high %v1534, %v1550
          %v1593 = vunpack.c.l.s4 1934713408
          %v1594 = vunpack.c.0.s8 %v1593
          %v1595 = vlaneseq
          %v1596 = vshrl.u32 %v1595, 7
          %v1597 = vsub.s32 %v1594, %v1596
          %v1598 = vrot.slane %v1590, %v1597
          %v1600 = vunpack.c.l.s4 1934713408
          %v1601 = vunpack.c.0.s8 %v1600
          %v1602 = vlaneseq
          %v1603 = vshrl.u32 %v1602, 7
          %v1604 = vsub.s32 %v1601, %v1603
          %v1605 = vrot.slane %v1591, %v1604
          %v1606 = vcombine.low %v1541, %v1557
          %v1607 = vcombine.high %v1541, %v1557
          %v1609 = vunpack.c.l.s4 1934713408
          %v1610 = vunpack.c.0.s8 %v1609
          %v1611 = vlaneseq
          %v1612 = vshrl.u32 %v1611, 7
          %v1613 = vsub.s32 %v1610, %v1612
          %v1614 = vrot.slane %v1606, %v1613
          %v1616 = vunpack.c.l.s4 1934713408
          %v1617 = vunpack.c.0.s8 %v1616
          %v1618 = vlaneseq
          %v1619 = vshrl.u32 %v1618, 7
          %v1620 = vsub.s32 %v1617, %v1619
          %v1621 = vrot.slane %v1607, %v1620
          %v1622 = vcombine.low %v1566, %v1598
          %v1623 = vcombine.high %v1566, %v1598
          %v1624 = vcombine.low %v1573, %v1605
          %v1625 = vcombine.high %v1573, %v1605
          %v1626 = vcombine.low %v1582, %v1614
          %v1627 = vcombine.high %v1582, %v1614
          %v1628 = vcombine.low %v1589, %v1621
          %v1629 = vcombine.high %v1589, %v1621
          %1631 = vrot.lane.b32.xlu0 %v1292, 112
          %v1632 = vpop.permute.xlu0 %1631
          %1634 = vrot.lane.b32.xlu0 %v1292, 96
          %v1635 = vpop.permute.xlu0 %1634
          %1637 = vrot.lane.b32.xlu0 %v1292, 80
          %v1638 = vpop.permute.xlu0 %1637
          %1640 = vrot.lane.b32.xlu0 %v1292, 64
          %v1641 = vpop.permute.xlu0 %1640
          %1643 = vrot.lane.b32.xlu0 %v1292, 48
          %v1644 = vpop.permute.xlu0 %1643
          %1646 = vrot.lane.b32.xlu0 %v1292, 32
          %v1647 = vpop.permute.xlu0 %1646
          %1649 = vrot.lane.b32.xlu0 %v1292, 16
          %v1650 = vpop.permute.xlu0 %1649
          %v1652 = vcombine.low %v1292, %v1635
          %v1653 = vcombine.high %v1292, %v1635
          %v1655 = vunpack.c.l.s4 1983009808
          %v1656 = vunpack.c.0.s8 %v1655
          %v1657 = vlaneseq
          %v1658 = vshrl.u32 %v1657, 7
          %v1659 = vsub.s32 %v1656, %v1658
          %v1660 = vrot.slane %v1652, %v1659
          %v1662 = vunpack.c.l.s4 1983009808
          %v1663 = vunpack.c.0.s8 %v1662
          %v1664 = vlaneseq
          %v1665 = vshrl.u32 %v1664, 7
          %v1666 = vsub.s32 %v1663, %v1665
          %v1667 = vrot.slane %v1653, %v1666
          %v1668 = vcombine.low %v1632, %v1638
          %v1669 = vcombine.high %v1632, %v1638
          %v1671 = vunpack.c.l.s4 1983009808
          %v1672 = vunpack.c.0.s8 %v1671
          %v1673 = vlaneseq
          %v1674 = vshrl.u32 %v1673, 7
          %v1675 = vsub.s32 %v1672, %v1674
          %v1676 = vrot.slane %v1668, %v1675
          %v1678 = vunpack.c.l.s4 1983009808
          %v1679 = vunpack.c.0.s8 %v1678
          %v1680 = vlaneseq
          %v1681 = vshrl.u32 %v1680, 7
          %v1682 = vsub.s32 %v1679, %v1681
          %v1683 = vrot.slane %v1669, %v1682
          %v1684 = vcombine.low %v1641, %v1647
          %v1685 = vcombine.high %v1641, %v1647
          %v1687 = vunpack.c.l.s4 1983009808
          %v1688 = vunpack.c.0.s8 %v1687
          %v1689 = vlaneseq
          %v1690 = vshrl.u32 %v1689, 7
          %v1691 = vsub.s32 %v1688, %v1690
          %v1692 = vrot.slane %v1684, %v1691
          %v1694 = vunpack.c.l.s4 1983009808
          %v1695 = vunpack.c.0.s8 %v1694
          %v1696 = vlaneseq
          %v1697 = vshrl.u32 %v1696, 7
          %v1698 = vsub.s32 %v1695, %v1697
          %v1699 = vrot.slane %v1685, %v1698
          %v1700 = vcombine.low %v1644, %v1650
          %v1701 = vcombine.high %v1644, %v1650
          %v1703 = vunpack.c.l.s4 1983009808
          %v1704 = vunpack.c.0.s8 %v1703
          %v1705 = vlaneseq
          %v1706 = vshrl.u32 %v1705, 7
          %v1707 = vsub.s32 %v1704, %v1706
          %v1708 = vrot.slane %v1700, %v1707
          %v1710 = vunpack.c.l.s4 1983009808
          %v1711 = vunpack.c.0.s8 %v1710
          %v1712 = vlaneseq
          %v1713 = vshrl.u32 %v1712, 7
          %v1714 = vsub.s32 %v1711, %v1713
          %v1715 = vrot.slane %v1701, %v1714
          %v1716 = vcombine.low %v1660, %v1676
          %v1717 = vcombine.high %v1660, %v1676
          %v1719 = vunpack.c.l.s4 1934713408
          %v1720 = vunpack.c.0.s8 %v1719
          %v1721 = vlaneseq
          %v1722 = vshrl.u32 %v1721, 7
          %v1723 = vsub.s32 %v1720, %v1722
          %v1724 = vrot.slane %v1716, %v1723
          %v1726 = vunpack.c.l.s4 1934713408
          %v1727 = vunpack.c.0.s8 %v1726
          %v1728 = vlaneseq
          %v1729 = vshrl.u32 %v1728, 7
          %v1730 = vsub.s32 %v1727, %v1729
          %v1731 = vrot.slane %v1717, %v1730
          %v1732 = vcombine.low %v1667, %v1683
          %v1733 = vcombine.high %v1667, %v1683
          %v1735 = vunpack.c.l.s4 1934713408
          %v1736 = vunpack.c.0.s8 %v1735
          %v1737 = vlaneseq
          %v1738 = vshrl.u32 %v1737, 7
          %v1739 = vsub.s32 %v1736, %v1738
          %v1740 = vrot.slane %v1732, %v1739
          %v1742 = vunpack.c.l.s4 1934713408
          %v1743 = vunpack.c.0.s8 %v1742
          %v1744 = vlaneseq
          %v1745 = vshrl.u32 %v1744, 7
          %v1746 = vsub.s32 %v1743, %v1745
          %v1747 = vrot.slane %v1733, %v1746
          %v1748 = vcombine.low %v1692, %v1708
          %v1749 = vcombine.high %v1692, %v1708
          %v1751 = vunpack.c.l.s4 1934713408
          %v1752 = vunpack.c.0.s8 %v1751
          %v1753 = vlaneseq
          %v1754 = vshrl.u32 %v1753, 7
          %v1755 = vsub.s32 %v1752, %v1754
          %v1756 = vrot.slane %v1748, %v1755
          %v1758 = vunpack.c.l.s4 1934713408
          %v1759 = vunpack.c.0.s8 %v1758
          %v1760 = vlaneseq
          %v1761 = vshrl.u32 %v1760, 7
          %v1762 = vsub.s32 %v1759, %v1761
          %v1763 = vrot.slane %v1749, %v1762
          %v1764 = vcombine.low %v1699, %v1715
          %v1765 = vcombine.high %v1699, %v1715
          %v1767 = vunpack.c.l.s4 1934713408
          %v1768 = vunpack.c.0.s8 %v1767
          %v1769 = vlaneseq
          %v1770 = vshrl.u32 %v1769, 7
          %v1771 = vsub.s32 %v1768, %v1770
          %v1772 = vrot.slane %v1764, %v1771
          %v1774 = vunpack.c.l.s4 1934713408
          %v1775 = vunpack.c.0.s8 %v1774
          %v1776 = vlaneseq
          %v1777 = vshrl.u32 %v1776, 7
          %v1778 = vsub.s32 %v1775, %v1777
          %v1779 = vrot.slane %v1765, %v1778
          %v1780 = vcombine.low %v1724, %v1756
          %v1781 = vcombine.high %v1724, %v1756
          %v1782 = vcombine.low %v1731, %v1763
          %v1783 = vcombine.high %v1731, %v1763
          %v1784 = vcombine.low %v1740, %v1772
          %v1785 = vcombine.high %v1740, %v1772
          %v1786 = vcombine.low %v1747, %v1779
          %v1787 = vcombine.high %v1747, %v1779
          %v1788 = vcombine.low %v1780, %v1782
          %v1789 = vcombine.high %v1780, %v1782
          %v1791 = vunpack.c.l.s4 1983009808
          %v1792 = vunpack.c.0.s8 %v1791
          %v1793 = vlaneseq
          %v1794 = vshrl.u32 %v1793, 7
          %v1795 = vsub.s32 %v1792, %v1794
          %v1796 = vrot.slane %v1788, %v1795
          %v1798 = vunpack.c.l.s4 1983009808
          %v1799 = vunpack.c.0.s8 %v1798
          %v1800 = vlaneseq
          %v1801 = vshrl.u32 %v1800, 7
          %v1802 = vsub.s32 %v1799, %v1801
          %v1803 = vrot.slane %v1789, %v1802
          %v1804 = vcombine.low %v1781, %v1783
          %v1805 = vcombine.high %v1781, %v1783
          %v1807 = vunpack.c.l.s4 1983009808
          %v1808 = vunpack.c.0.s8 %v1807
          %v1809 = vlaneseq
          %v1810 = vshrl.u32 %v1809, 7
          %v1811 = vsub.s32 %v1808, %v1810
          %v1812 = vrot.slane %v1804, %v1811
          %v1814 = vunpack.c.l.s4 1983009808
          %v1815 = vunpack.c.0.s8 %v1814
          %v1816 = vlaneseq
          %v1817 = vshrl.u32 %v1816, 7
          %v1818 = vsub.s32 %v1815, %v1817
          %v1819 = vrot.slane %v1805, %v1818
          %v1820 = vcombine.low %v1784, %v1786
          %v1821 = vcombine.high %v1784, %v1786
          %v1823 = vunpack.c.l.s4 1983009808
          %v1824 = vunpack.c.0.s8 %v1823
          %v1825 = vlaneseq
          %v1826 = vshrl.u32 %v1825, 7
          %v1827 = vsub.s32 %v1824, %v1826
          %v1828 = vrot.slane %v1820, %v1827
          %v1830 = vunpack.c.l.s4 1983009808
          %v1831 = vunpack.c.0.s8 %v1830
          %v1832 = vlaneseq
          %v1833 = vshrl.u32 %v1832, 7
          %v1834 = vsub.s32 %v1831, %v1833
          %v1835 = vrot.slane %v1821, %v1834
          %v1836 = vcombine.low %v1785, %v1787
          %v1837 = vcombine.high %v1785, %v1787
          %v1839 = vunpack.c.l.s4 1983009808
          %v1840 = vunpack.c.0.s8 %v1839
          %v1841 = vlaneseq
          %v1842 = vshrl.u32 %v1841, 7
          %v1843 = vsub.s32 %v1840, %v1842
          %v1844 = vrot.slane %v1836, %v1843
          %v1846 = vunpack.c.l.s4 1983009808
          %v1847 = vunpack.c.0.s8 %v1846
          %v1848 = vlaneseq
          %v1849 = vshrl.u32 %v1848, 7
          %v1850 = vsub.s32 %v1847, %v1849
          %v1851 = vrot.slane %v1837, %v1850
          %v1852 = vcombine.low %v1796, %v1812
          %v1853 = vcombine.high %v1796, %v1812
          %v1855 = vunpack.c.l.s4 1934713408
          %v1856 = vunpack.c.0.s8 %v1855
          %v1857 = vlaneseq
          %v1858 = vshrl.u32 %v1857, 7
          %v1859 = vsub.s32 %v1856, %v1858
          %v1860 = vrot.slane %v1852, %v1859
          %v1862 = vunpack.c.l.s4 1934713408
          %v1863 = vunpack.c.0.s8 %v1862
          %v1864 = vlaneseq
          %v1865 = vshrl.u32 %v1864, 7
          %v1866 = vsub.s32 %v1863, %v1865
          %v1867 = vrot.slane %v1853, %v1866
          %v1868 = vcombine.low %v1803, %v1819
          %v1869 = vcombine.high %v1803, %v1819
          %v1871 = vunpack.c.l.s4 1934713408
          %v1872 = vunpack.c.0.s8 %v1871
          %v1873 = vlaneseq
          %v1874 = vshrl.u32 %v1873, 7
          %v1875 = vsub.s32 %v1872, %v1874
          %v1876 = vrot.slane %v1868, %v1875
          %v1878 = vunpack.c.l.s4 1934713408
          %v1879 = vunpack.c.0.s8 %v1878
          %v1880 = vlaneseq
          %v1881 = vshrl.u32 %v1880, 7
          %v1882 = vsub.s32 %v1879, %v1881
          %v1883 = vrot.slane %v1869, %v1882
          %v1884 = vcombine.low %v1828, %v1844
          %v1885 = vcombine.high %v1828, %v1844
          %v1887 = vunpack.c.l.s4 1934713408
          %v1888 = vunpack.c.0.s8 %v1887
          %v1889 = vlaneseq
          %v1890 = vshrl.u32 %v1889, 7
          %v1891 = vsub.s32 %v1888, %v1890
          %v1892 = vrot.slane %v1884, %v1891
          %v1894 = vunpack.c.l.s4 1934713408
          %v1895 = vunpack.c.0.s8 %v1894
          %v1896 = vlaneseq
          %v1897 = vshrl.u32 %v1896, 7
          %v1898 = vsub.s32 %v1895, %v1897
          %v1899 = vrot.slane %v1885, %v1898
          %v1900 = vcombine.low %v1835, %v1851
          %v1901 = vcombine.high %v1835, %v1851
          %v1903 = vunpack.c.l.s4 1934713408
          %v1904 = vunpack.c.0.s8 %v1903
          %v1905 = vlaneseq
          %v1906 = vshrl.u32 %v1905, 7
          %v1907 = vsub.s32 %v1904, %v1906
          %v1908 = vrot.slane %v1900, %v1907
          %v1910 = vunpack.c.l.s4 1934713408
          %v1911 = vunpack.c.0.s8 %v1910
          %v1912 = vlaneseq
          %v1913 = vshrl.u32 %v1912, 7
          %v1914 = vsub.s32 %v1911, %v1913
          %v1915 = vrot.slane %v1901, %v1914
          %v1916 = vcombine.low %v1860, %v1892
          %v1917 = vcombine.high %v1860, %v1892
          %v1918 = vcombine.low %v1867, %v1899
          %v1919 = vcombine.high %v1867, %v1899
          %v1920 = vcombine.low %v1876, %v1908
          %v1921 = vcombine.high %v1876, %v1908
          %v1922 = vcombine.low %v1883, %v1915
          %v1923 = vcombine.high %v1883, %v1915
          %1925 = vrot.lane.b32.xlu0 %v1331, 112
          %v1926 = vpop.permute.xlu0 %1925
          %1928 = vrot.lane.b32.xlu0 %v1331, 96
          %v1929 = vpop.permute.xlu0 %1928
          %1931 = vrot.lane.b32.xlu0 %v1331, 80
          %v1932 = vpop.permute.xlu0 %1931
          %1934 = vrot.lane.b32.xlu0 %v1331, 64
          %v1935 = vpop.permute.xlu0 %1934
          %1937 = vrot.lane.b32.xlu0 %v1331, 48
          %v1938 = vpop.permute.xlu0 %1937
          %1940 = vrot.lane.b32.xlu0 %v1331, 32
          %v1941 = vpop.permute.xlu0 %1940
          %1943 = vrot.lane.b32.xlu0 %v1331, 16
          %v1944 = vpop.permute.xlu0 %1943
          %v1946 = vcombine.low %v1331, %v1929
          %v1947 = vcombine.high %v1331, %v1929
          %v1949 = vunpack.c.l.s4 1983009808
          %v1950 = vunpack.c.0.s8 %v1949
          %v1951 = vlaneseq
          %v1952 = vshrl.u32 %v1951, 7
          %v1953 = vsub.s32 %v1950, %v1952
          %v1954 = vrot.slane %v1946, %v1953
          %v1956 = vunpack.c.l.s4 1983009808
          %v1957 = vunpack.c.0.s8 %v1956
          %v1958 = vlaneseq
          %v1959 = vshrl.u32 %v1958, 7
          %v1960 = vsub.s32 %v1957, %v1959
          %v1961 = vrot.slane %v1947, %v1960
          %v1962 = vcombine.low %v1926, %v1932
          %v1963 = vcombine.high %v1926, %v1932
          %v1965 = vunpack.c.l.s4 1983009808
          %v1966 = vunpack.c.0.s8 %v1965
          %v1967 = vlaneseq
          %v1968 = vshrl.u32 %v1967, 7
          %v1969 = vsub.s32 %v1966, %v1968
          %v1970 = vrot.slane %v1962, %v1969
          %v1972 = vunpack.c.l.s4 1983009808
          %v1973 = vunpack.c.0.s8 %v1972
          %v1974 = vlaneseq
          %v1975 = vshrl.u32 %v1974, 7
          %v1976 = vsub.s32 %v1973, %v1975
          %v1977 = vrot.slane %v1963, %v1976
          %v1978 = vcombine.low %v1935, %v1941
          %v1979 = vcombine.high %v1935, %v1941
          %v1981 = vunpack.c.l.s4 1983009808
          %v1982 = vunpack.c.0.s8 %v1981
          %v1983 = vlaneseq
          %v1984 = vshrl.u32 %v1983, 7
          %v1985 = vsub.s32 %v1982, %v1984
          %v1986 = vrot.slane %v1978, %v1985
          %v1988 = vunpack.c.l.s4 1983009808
          %v1989 = vunpack.c.0.s8 %v1988
          %v1990 = vlaneseq
          %v1991 = vshrl.u32 %v1990, 7
          %v1992 = vsub.s32 %v1989, %v1991
          %v1993 = vrot.slane %v1979, %v1992
          %v1994 = vcombine.low %v1938, %v1944
          %v1995 = vcombine.high %v1938, %v1944
          %v1997 = vunpack.c.l.s4 1983009808
          %v1998 = vunpack.c.0.s8 %v1997
          %v1999 = vlaneseq
          %v2000 = vshrl.u32 %v1999, 7
          %v2001 = vsub.s32 %v1998, %v2000
          %v2002 = vrot.slane %v1994, %v2001
          %v2004 = vunpack.c.l.s4 1983009808
          %v2005 = vunpack.c.0.s8 %v2004
          %v2006 = vlaneseq
          %v2007 = vshrl.u32 %v2006, 7
          %v2008 = vsub.s32 %v2005, %v2007
          %v2009 = vrot.slane %v1995, %v2008
          %v2010 = vcombine.low %v1954, %v1970
          %v2011 = vcombine.high %v1954, %v1970
          %v2013 = vunpack.c.l.s4 1934713408
          %v2014 = vunpack.c.0.s8 %v2013
          %v2015 = vlaneseq
          %v2016 = vshrl.u32 %v2015, 7
          %v2017 = vsub.s32 %v2014, %v2016
          %v2018 = vrot.slane %v2010, %v2017
          %v2020 = vunpack.c.l.s4 1934713408
          %v2021 = vunpack.c.0.s8 %v2020
          %v2022 = vlaneseq
          %v2023 = vshrl.u32 %v2022, 7
          %v2024 = vsub.s32 %v2021, %v2023
          %v2025 = vrot.slane %v2011, %v2024
          %v2026 = vcombine.low %v1961, %v1977
          %v2027 = vcombine.high %v1961, %v1977
          %v2029 = vunpack.c.l.s4 1934713408
          %v2030 = vunpack.c.0.s8 %v2029
          %v2031 = vlaneseq
          %v2032 = vshrl.u32 %v2031, 7
          %v2033 = vsub.s32 %v2030, %v2032
          %v2034 = vrot.slane %v2026, %v2033
          %v2036 = vunpack.c.l.s4 1934713408
          %v2037 = vunpack.c.0.s8 %v2036
          %v2038 = vlaneseq
          %v2039 = vshrl.u32 %v2038, 7
          %v2040 = vsub.s32 %v2037, %v2039
          %v2041 = vrot.slane %v2027, %v2040
          %v2042 = vcombine.low %v1986, %v2002
          %v2043 = vcombine.high %v1986, %v2002
          %v2045 = vunpack.c.l.s4 1934713408
          %v2046 = vunpack.c.0.s8 %v2045
          %v2047 = vlaneseq
          %v2048 = vshrl.u32 %v2047, 7
          %v2049 = vsub.s32 %v2046, %v2048
          %v2050 = vrot.slane %v2042, %v2049
          %v2052 = vunpack.c.l.s4 1934713408
          %v2053 = vunpack.c.0.s8 %v2052
          %v2054 = vlaneseq
          %v2055 = vshrl.u32 %v2054, 7
          %v2056 = vsub.s32 %v2053, %v2055
          %v2057 = vrot.slane %v2043, %v2056
          %v2058 = vcombine.low %v1993, %v2009
          %v2059 = vcombine.high %v1993, %v2009
          %v2061 = vunpack.c.l.s4 1934713408
          %v2062 = vunpack.c.0.s8 %v2061
          %v2063 = vlaneseq
          %v2064 = vshrl.u32 %v2063, 7
          %v2065 = vsub.s32 %v2062, %v2064
          %v2066 = vrot.slane %v2058, %v2065
          %v2068 = vunpack.c.l.s4 1934713408
          %v2069 = vunpack.c.0.s8 %v2068
          %v2070 = vlaneseq
          %v2071 = vshrl.u32 %v2070, 7
          %v2072 = vsub.s32 %v2069, %v2071
          %v2073 = vrot.slane %v2059, %v2072
          %v2074 = vcombine.low %v2018, %v2050
          %v2075 = vcombine.high %v2018, %v2050
          %v2076 = vcombine.low %v2025, %v2057
          %v2077 = vcombine.high %v2025, %v2057
          %v2078 = vcombine.low %v2034, %v2066
          %v2079 = vcombine.high %v2034, %v2066
          %v2080 = vcombine.low %v2041, %v2073
          %v2081 = vcombine.high %v2041, %v2073
          %v2082 = vcombine.low %v2074, %v2076
          %v2083 = vcombine.high %v2074, %v2076
          %v2085 = vunpack.c.l.s4 1983009808
          %v2086 = vunpack.c.0.s8 %v2085
          %v2087 = vlaneseq
          %v2088 = vshrl.u32 %v2087, 7
          %v2089 = vsub.s32 %v2086, %v2088
          %v2090 = vrot.slane %v2082, %v2089
          %v2092 = vunpack.c.l.s4 1983009808
          %v2093 = vunpack.c.0.s8 %v2092
          %v2094 = vlaneseq
          %v2095 = vshrl.u32 %v2094, 7
          %v2096 = vsub.s32 %v2093, %v2095
          %v2097 = vrot.slane %v2083, %v2096
          %v2098 = vcombine.low %v2075, %v2077
          %v2099 = vcombine.high %v2075, %v2077
          %v2101 = vunpack.c.l.s4 1983009808
          %v2102 = vunpack.c.0.s8 %v2101
          %v2103 = vlaneseq
          %v2104 = vshrl.u32 %v2103, 7
          %v2105 = vsub.s32 %v2102, %v2104
          %v2106 = vrot.slane %v2098, %v2105
          %v2108 = vunpack.c.l.s4 1983009808
          %v2109 = vunpack.c.0.s8 %v2108
          %v2110 = vlaneseq
          %v2111 = vshrl.u32 %v2110, 7
          %v2112 = vsub.s32 %v2109, %v2111
          %v2113 = vrot.slane %v2099, %v2112
          %v2114 = vcombine.low %v2078, %v2080
          %v2115 = vcombine.high %v2078, %v2080
          %v2117 = vunpack.c.l.s4 1983009808
          %v2118 = vunpack.c.0.s8 %v2117
          %v2119 = vlaneseq
          %v2120 = vshrl.u32 %v2119, 7
          %v2121 = vsub.s32 %v2118, %v2120
          %v2122 = vrot.slane %v2114, %v2121
          %v2124 = vunpack.c.l.s4 1983009808
          %v2125 = vunpack.c.0.s8 %v2124
          %v2126 = vlaneseq
          %v2127 = vshrl.u32 %v2126, 7
          %v2128 = vsub.s32 %v2125, %v2127
          %v2129 = vrot.slane %v2115, %v2128
          %v2130 = vcombine.low %v2079, %v2081
          %v2131 = vcombine.high %v2079, %v2081
          %v2133 = vunpack.c.l.s4 1983009808
          %v2134 = vunpack.c.0.s8 %v2133
          %v2135 = vlaneseq
          %v2136 = vshrl.u32 %v2135, 7
          %v2137 = vsub.s32 %v2134, %v2136
          %v2138 = vrot.slane %v2130, %v2137
          %v2140 = vunpack.c.l.s4 1983009808
          %v2141 = vunpack.c.0.s8 %v2140
          %v2142 = vlaneseq
          %v2143 = vshrl.u32 %v2142, 7
          %v2144 = vsub.s32 %v2141, %v2143
          %v2145 = vrot.slane %v2131, %v2144
          %v2146 = vcombine.low %v2090, %v2106
          %v2147 = vcombine.high %v2090, %v2106
          %v2149 = vunpack.c.l.s4 1934713408
          %v2150 = vunpack.c.0.s8 %v2149
          %v2151 = vlaneseq
          %v2152 = vshrl.u32 %v2151, 7
          %v2153 = vsub.s32 %v2150, %v2152
          %v2154 = vrot.slane %v2146, %v2153
          %v2156 = vunpack.c.l.s4 1934713408
          %v2157 = vunpack.c.0.s8 %v2156
          %v2158 = vlaneseq
          %v2159 = vshrl.u32 %v2158, 7
          %v2160 = vsub.s32 %v2157, %v2159
          %v2161 = vrot.slane %v2147, %v2160
          %v2162 = vcombine.low %v2097, %v2113
          %v2163 = vcombine.high %v2097, %v2113
          %v2165 = vunpack.c.l.s4 1934713408
          %v2166 = vunpack.c.0.s8 %v2165
          %v2167 = vlaneseq
          %v2168 = vshrl.u32 %v2167, 7
          %v2169 = vsub.s32 %v2166, %v2168
          %v2170 = vrot.slane %v2162, %v2169
          %v2172 = vunpack.c.l.s4 1934713408
          %v2173 = vunpack.c.0.s8 %v2172
          %v2174 = vlaneseq
          %v2175 = vshrl.u32 %v2174, 7
          %v2176 = vsub.s32 %v2173, %v2175
          %v2177 = vrot.slane %v2163, %v2176
          %v2178 = vcombine.low %v2122, %v2138
          %v2179 = vcombine.high %v2122, %v2138
          %v2181 = vunpack.c.l.s4 1934713408
          %v2182 = vunpack.c.0.s8 %v2181
          %v2183 = vlaneseq
          %v2184 = vshrl.u32 %v2183, 7
          %v2185 = vsub.s32 %v2182, %v2184
          %v2186 = vrot.slane %v2178, %v2185
          %v2188 = vunpack.c.l.s4 1934713408
          %v2189 = vunpack.c.0.s8 %v2188
          %v2190 = vlaneseq
          %v2191 = vshrl.u32 %v2190, 7
          %v2192 = vsub.s32 %v2189, %v2191
          %v2193 = vrot.slane %v2179, %v2192
          %v2194 = vcombine.low %v2129, %v2145
          %v2195 = vcombine.high %v2129, %v2145
          %v2197 = vunpack.c.l.s4 1934713408
          %v2198 = vunpack.c.0.s8 %v2197
          %v2199 = vlaneseq
          %v2200 = vshrl.u32 %v2199, 7
          %v2201 = vsub.s32 %v2198, %v2200
          %v2202 = vrot.slane %v2194, %v2201
          %v2204 = vunpack.c.l.s4 1934713408
          %v2205 = vunpack.c.0.s8 %v2204
          %v2206 = vlaneseq
          %v2207 = vshrl.u32 %v2206, 7
          %v2208 = vsub.s32 %v2205, %v2207
          %v2209 = vrot.slane %v2195, %v2208
          %v2210 = vcombine.low %v2154, %v2186
          %v2211 = vcombine.high %v2154, %v2186
          %v2212 = vcombine.low %v2161, %v2193
          %v2213 = vcombine.high %v2161, %v2193
          %v2214 = vcombine.low %v2170, %v2202
          %v2215 = vcombine.high %v2170, %v2202
          %v2216 = vcombine.low %v2177, %v2209
          %v2217 = vcombine.high %v2177, %v2209
          %vm2218 = vcmask 130048
          %v2220 = vsel %vm2218, %v1622, 0
          %v2223 = vsel %vm2218, %v1916, 0
          %2225 = vmatprep.subr.mxu0 0.0
          %2226 = vmatpush1.xpose.msra.mxu0 %v2223
          %2227 = vmatprep.subr.mxu0 0.0
          %2228 = vmatpush1.xpose.msra.mxu0 0.0
          %2229 = vmatprep.subr.mxu0 0.0
          %2230 = vmatpush1.xpose.msra.mxu0 0.0
          %2231 = vmatprep.subr.mxu0 0.0
          %2232 = vmatpush1.xpose.msra.mxu0 0.0
          %2233 = vmatprep.subr.mxu0 0.0
          %2234 = vmatpush1.xpose.msra.mxu0 0.0
          %2235 = vmatprep.subr.mxu0 0.0
          %2236 = vmatpush1.xpose.msra.mxu0 0.0
          %2237 = vmatprep.subr.mxu0 0.0
          %2238 = vmatpush1.xpose.msra.mxu0 0.0
          %2239 = vmatprep.subr.mxu0 0.0
          %2240 = vmatpush1.xpose.msra.mxu0 0.0
          %2241 = vmatprep.subr.mxu0 0.0
          %2242 = vmatpush1.xpose.msra.mxu0 0.0
          %2243 = vmatprep.subr.mxu0 0.0
          %2244 = vmatpush1.xpose.msra.mxu0 0.0
          %2245 = vmatprep.subr.mxu0 0.0
          %2246 = vmatpush1.xpose.msra.mxu0 0.0
          %2247 = vmatprep.subr.mxu0 0.0
          %2248 = vmatpush1.xpose.msra.mxu0 0.0
          %2249 = vmatprep.subr.mxu0 0.0
          %2250 = vmatpush1.xpose.msra.mxu0 0.0
          %2251 = vmatprep.subr.mxu0 0.0
          %2252 = vmatpush1.xpose.msra.mxu0 0.0
          %2253 = vmatprep.subr.mxu0 0.0
          %2254 = vmatpush1.xpose.msra.mxu0 0.0
          %2255 = vmatprep.subr.mxu0 0.0
          %2256 = vmatpush1.xpose.msra.mxu0 0.0
          %2257 = vmatprep.subr.mxu0 0.0
          %2258 = vmatpush1.xpose.msra.mxu0 0.0
          %2259 = vmatprep.subr.mxu0 0.0
          %2260 = vmatpush1.xpose.msra.mxu0 0.0
          %2261 = vmatprep.subr.mxu0 0.0
          %2262 = vmatpush1.xpose.msra.mxu0 0.0
          %2263 = vmatprep.subr.mxu0 0.0
          %2264 = vmatpush1.xpose.msra.mxu0 0.0
          %2265 = vmatprep.subr.mxu0 0.0
          %2266 = vmatpush1.xpose.msra.mxu0 0.0
          %2267 = vmatprep.subr.mxu0 0.0
          %2268 = vmatpush1.xpose.msra.mxu0 0.0
          %2269 = vmatprep.subr.mxu0 0.0
          %2270 = vmatpush1.xpose.msra.mxu0 0.0
          %2271 = vmatprep.subr.mxu0 0.0
          %2272 = vmatpush1.xpose.msra.mxu0 0.0
          %2273 = vmatprep.subr.mxu0 0.0
          %2274 = vmatpush1.xpose.msra.mxu0 0.0
          %2275 = vmatprep.subr.mxu0 0.0
          %2276 = vmatpush1.xpose.msra.mxu0 0.0
          %2277 = vmatprep.subr.mxu0 0.0
          %2278 = vmatpush1.xpose.msra.mxu0 0.0
          %2279 = vmatprep.subr.mxu0 0.0
          %2280 = vmatpush1.xpose.msra.mxu0 0.0
          %2281 = vmatprep.subr.mxu0 0.0
          %2282 = vmatpush1.xpose.msra.mxu0 0.0
          %2283 = vmatprep.subr.mxu0 0.0
          %2284 = vmatpush1.xpose.msra.mxu0 0.0
          %2285 = vmatprep.subr.mxu0 0.0
          %2286 = vmatpush1.xpose.msra.mxu0 0.0
          %2287 = vmatprep.subr.mxu0 0.0
          %2288 = vmatpush1.xpose.msra.mxu0 0.0
          %2289 = vmatprep.mubr.f32.mxu0 0.0
          %2290 = vmatmul.mubr.f32.gmra.mrb[0].mxu0 %v2220
          %v2291 = vpop.f32.mrb[0].mxu0
          %v2292 = vadd.f32 0.0, %v2291
          %v2293 = vpop.f32.mrb[0].mxu0
          %2294 = vdwg.mxu0
          %v2296 = vsel %vm2218, %v1623, 0
          %v2299 = vsel %vm2218, %v1917, 0
          %2301 = vmatprep.subr.mxu0 0.0
          %2302 = vmatpush1.xpose.msra.mxu0 %v2299
          %2303 = vmatprep.subr.mxu0 0.0
          %2304 = vmatpush1.xpose.msra.mxu0 0.0
          %2305 = vmatprep.subr.mxu0 0.0
          %2306 = vmatpush1.xpose.msra.mxu0 0.0
          %2307 = vmatprep.subr.mxu0 0.0
          %2308 = vmatpush1.xpose.msra.mxu0 0.0
          %2309 = vmatprep.subr.mxu0 0.0
          %2310 = vmatpush1.xpose.msra.mxu0 0.0
          %2311 = vmatprep.subr.mxu0 0.0
          %2312 = vmatpush1.xpose.msra.mxu0 0.0
          %2313 = vmatprep.subr.mxu0 0.0
          %2314 = vmatpush1.xpose.msra.mxu0 0.0
          %2315 = vmatprep.subr.mxu0 0.0
          %2316 = vmatpush1.xpose.msra.mxu0 0.0
          %2317 = vmatprep.subr.mxu0 0.0
          %2318 = vmatpush1.xpose.msra.mxu0 0.0
          %2319 = vmatprep.subr.mxu0 0.0
          %2320 = vmatpush1.xpose.msra.mxu0 0.0
          %2321 = vmatprep.subr.mxu0 0.0
          %2322 = vmatpush1.xpose.msra.mxu0 0.0
          %2323 = vmatprep.subr.mxu0 0.0
          %2324 = vmatpush1.xpose.msra.mxu0 0.0
          %2325 = vmatprep.subr.mxu0 0.0
          %2326 = vmatpush1.xpose.msra.mxu0 0.0
          %2327 = vmatprep.subr.mxu0 0.0
          %2328 = vmatpush1.xpose.msra.mxu0 0.0
          %2329 = vmatprep.subr.mxu0 0.0
          %2330 = vmatpush1.xpose.msra.mxu0 0.0
          %2331 = vmatprep.subr.mxu0 0.0
          %2332 = vmatpush1.xpose.msra.mxu0 0.0
          %2333 = vmatprep.subr.mxu0 0.0
          %2334 = vmatpush1.xpose.msra.mxu0 0.0
          %2335 = vmatprep.subr.mxu0 0.0
          %2336 = vmatpush1.xpose.msra.mxu0 0.0
          %2337 = vmatprep.subr.mxu0 0.0
          %2338 = vmatpush1.xpose.msra.mxu0 0.0
          %2339 = vmatprep.subr.mxu0 0.0
          %2340 = vmatpush1.xpose.msra.mxu0 0.0
          %2341 = vmatprep.subr.mxu0 0.0
          %2342 = vmatpush1.xpose.msra.mxu0 0.0
          %2343 = vmatprep.subr.mxu0 0.0
          %2344 = vmatpush1.xpose.msra.mxu0 0.0
          %2345 = vmatprep.subr.mxu0 0.0
          %2346 = vmatpush1.xpose.msra.mxu0 0.0
          %2347 = vmatprep.subr.mxu0 0.0
          %2348 = vmatpush1.xpose.msra.mxu0 0.0
          %2349 = vmatprep.subr.mxu0 0.0
          %2350 = vmatpush1.xpose.msra.mxu0 0.0
          %2351 = vmatprep.subr.mxu0 0.0
          %2352 = vmatpush1.xpose.msra.mxu0 0.0
          %2353 = vmatprep.subr.mxu0 0.0
          %2354 = vmatpush1.xpose.msra.mxu0 0.0
          %2355 = vmatprep.subr.mxu0 0.0
          %2356 = vmatpush1.xpose.msra.mxu0 0.0
          %2357 = vmatprep.subr.mxu0 0.0
          %2358 = vmatpush1.xpose.msra.mxu0 0.0
          %2359 = vmatprep.subr.mxu0 0.0
          %2360 = vmatpush1.xpose.msra.mxu0 0.0
          %2361 = vmatprep.subr.mxu0 0.0
          %2362 = vmatpush1.xpose.msra.mxu0 0.0
          %2363 = vmatprep.subr.mxu0 0.0
          %2364 = vmatpush1.xpose.msra.mxu0 0.0
          %2365 = vmatprep.mubr.f32.mxu0 0.0
          %2366 = vmatmul.mubr.f32.gmra.mrb[0].mxu0 %v2296
          %v2367 = vpop.f32.mrb[0].mxu0
          %v2368 = vadd.f32 0.0, %v2367
          %v2369 = vpop.f32.mrb[0].mxu0
          %2370 = vdwg.mxu0
          %v2372 = vsel %vm2218, %v1624, 0
          %v2375 = vsel %vm2218, %v1918, 0
          %2377 = vmatprep.subr.mxu0 0.0
          %2378 = vmatpush1.xpose.msra.mxu0 %v2375
          %2379 = vmatprep.subr.mxu0 0.0
          %2380 = vmatpush1.xpose.msra.mxu0 0.0
          %2381 = vmatprep.subr.mxu0 0.0
          %2382 = vmatpush1.xpose.msra.mxu0 0.0
          %2383 = vmatprep.subr.mxu0 0.0
          %2384 = vmatpush1.xpose.msra.mxu0 0.0
          %2385 = vmatprep.subr.mxu0 0.0
          %2386 = vmatpush1.xpose.msra.mxu0 0.0
          %2387 = vmatprep.subr.mxu0 0.0
          %2388 = vmatpush1.xpose.msra.mxu0 0.0
          %2389 = vmatprep.subr.mxu0 0.0
          %2390 = vmatpush1.xpose.msra.mxu0 0.0
          %2391 = vmatprep.subr.mxu0 0.0
          %2392 = vmatpush1.xpose.msra.mxu0 0.0
          %2393 = vmatprep.subr.mxu0 0.0
          %2394 = vmatpush1.xpose.msra.mxu0 0.0
          %2395 = vmatprep.subr.mxu0 0.0
          %2396 = vmatpush1.xpose.msra.mxu0 0.0
          %2397 = vmatprep.subr.mxu0 0.0
          %2398 = vmatpush1.xpose.msra.mxu0 0.0
          %2399 = vmatprep.subr.mxu0 0.0
          %2400 = vmatpush1.xpose.msra.mxu0 0.0
          %2401 = vmatprep.subr.mxu0 0.0
          %2402 = vmatpush1.xpose.msra.mxu0 0.0
          %2403 = vmatprep.subr.mxu0 0.0
          %2404 = vmatpush1.xpose.msra.mxu0 0.0
          %2405 = vmatprep.subr.mxu0 0.0
          %2406 = vmatpush1.xpose.msra.mxu0 0.0
          %2407 = vmatprep.subr.mxu0 0.0
          %2408 = vmatpush1.xpose.msra.mxu0 0.0
          %2409 = vmatprep.subr.mxu0 0.0
          %2410 = vmatpush1.xpose.msra.mxu0 0.0
          %2411 = vmatprep.subr.mxu0 0.0
          %2412 = vmatpush1.xpose.msra.mxu0 0.0
          %2413 = vmatprep.subr.mxu0 0.0
          %2414 = vmatpush1.xpose.msra.mxu0 0.0
          %2415 = vmatprep.subr.mxu0 0.0
          %2416 = vmatpush1.xpose.msra.mxu0 0.0
          %2417 = vmatprep.subr.mxu0 0.0
          %2418 = vmatpush1.xpose.msra.mxu0 0.0
          %2419 = vmatprep.subr.mxu0 0.0
          %2420 = vmatpush1.xpose.msra.mxu0 0.0
          %2421 = vmatprep.subr.mxu0 0.0
          %2422 = vmatpush1.xpose.msra.mxu0 0.0
          %2423 = vmatprep.subr.mxu0 0.0
          %2424 = vmatpush1.xpose.msra.mxu0 0.0
          %2425 = vmatprep.subr.mxu0 0.0
          %2426 = vmatpush1.xpose.msra.mxu0 0.0
          %2427 = vmatprep.subr.mxu0 0.0
          %2428 = vmatpush1.xpose.msra.mxu0 0.0
          %2429 = vmatprep.subr.mxu0 0.0
          %2430 = vmatpush1.xpose.msra.mxu0 0.0
          %2431 = vmatprep.subr.mxu0 0.0
          %2432 = vmatpush1.xpose.msra.mxu0 0.0
          %2433 = vmatprep.subr.mxu0 0.0
          %2434 = vmatpush1.xpose.msra.mxu0 0.0
          %2435 = vmatprep.subr.mxu0 0.0
          %2436 = vmatpush1.xpose.msra.mxu0 0.0
          %2437 = vmatprep.subr.mxu0 0.0
          %2438 = vmatpush1.xpose.msra.mxu0 0.0
          %2439 = vmatprep.subr.mxu0 0.0
          %2440 = vmatpush1.xpose.msra.mxu0 0.0
          %2441 = vmatprep.mubr.f32.mxu0 0.0
          %2442 = vmatmul.mubr.f32.gmra.mrb[0].mxu0 %v2372
          %v2443 = vpop.f32.mrb[0].mxu0
          %v2444 = vadd.f32 0.0, %v2443
          %v2445 = vpop.f32.mrb[0].mxu0
          %2446 = vdwg.mxu0
          %v2448 = vsel %vm2218, %v1625, 0
          %v2451 = vsel %vm2218, %v1919, 0
          %2453 = vmatprep.subr.mxu0 0.0
          %2454 = vmatpush1.xpose.msra.mxu0 %v2451
          %2455 = vmatprep.subr.mxu0 0.0
          %2456 = vmatpush1.xpose.msra.mxu0 0.0
          %2457 = vmatprep.subr.mxu0 0.0
          %2458 = vmatpush1.xpose.msra.mxu0 0.0
          %2459 = vmatprep.subr.mxu0 0.0
          %2460 = vmatpush1.xpose.msra.mxu0 0.0
          %2461 = vmatprep.subr.mxu0 0.0
          %2462 = vmatpush1.xpose.msra.mxu0 0.0
          %2463 = vmatprep.subr.mxu0 0.0
          %2464 = vmatpush1.xpose.msra.mxu0 0.0
          %2465 = vmatprep.subr.mxu0 0.0
          %2466 = vmatpush1.xpose.msra.mxu0 0.0
          %2467 = vmatprep.subr.mxu0 0.0
          %2468 = vmatpush1.xpose.msra.mxu0 0.0
          %2469 = vmatprep.subr.mxu0 0.0
          %2470 = vmatpush1.xpose.msra.mxu0 0.0
          %2471 = vmatprep.subr.mxu0 0.0
          %2472 = vmatpush1.xpose.msra.mxu0 0.0
          %2473 = vmatprep.subr.mxu0 0.0
          %2474 = vmatpush1.xpose.msra.mxu0 0.0
          %2475 = vmatprep.subr.mxu0 0.0
          %2476 = vmatpush1.xpose.msra.mxu0 0.0
          %2477 = vmatprep.subr.mxu0 0.0
          %2478 = vmatpush1.xpose.msra.mxu0 0.0
          %2479 = vmatprep.subr.mxu0 0.0
          %2480 = vmatpush1.xpose.msra.mxu0 0.0
          %2481 = vmatprep.subr.mxu0 0.0
          %2482 = vmatpush1.xpose.msra.mxu0 0.0
          %2483 = vmatprep.subr.mxu0 0.0
          %2484 = vmatpush1.xpose.msra.mxu0 0.0
          %2485 = vmatprep.subr.mxu0 0.0
          %2486 = vmatpush1.xpose.msra.mxu0 0.0
          %2487 = vmatprep.subr.mxu0 0.0
          %2488 = vmatpush1.xpose.msra.mxu0 0.0
          %2489 = vmatprep.subr.mxu0 0.0
          %2490 = vmatpush1.xpose.msra.mxu0 0.0
          %2491 = vmatprep.subr.mxu0 0.0
          %2492 = vmatpush1.xpose.msra.mxu0 0.0
          %2493 = vmatprep.subr.mxu0 0.0
          %2494 = vmatpush1.xpose.msra.mxu0 0.0
          %2495 = vmatprep.subr.mxu0 0.0
          %2496 = vmatpush1.xpose.msra.mxu0 0.0
          %2497 = vmatprep.subr.mxu0 0.0
          %2498 = vmatpush1.xpose.msra.mxu0 0.0
          %2499 = vmatprep.subr.mxu0 0.0
          %2500 = vmatpush1.xpose.msra.mxu0 0.0
          %2501 = vmatprep.subr.mxu0 0.0
          %2502 = vmatpush1.xpose.msra.mxu0 0.0
          %2503 = vmatprep.subr.mxu0 0.0
          %2504 = vmatpush1.xpose.msra.mxu0 0.0
          %2505 = vmatprep.subr.mxu0 0.0
          %2506 = vmatpush1.xpose.msra.mxu0 0.0
          %2507 = vmatprep.subr.mxu0 0.0
          %2508 = vmatpush1.xpose.msra.mxu0 0.0
          %2509 = vmatprep.subr.mxu0 0.0
          %2510 = vmatpush1.xpose.msra.mxu0 0.0
          %2511 = vmatprep.subr.mxu0 0.0
          %2512 = vmatpush1.xpose.msra.mxu0 0.0
          %2513 = vmatprep.subr.mxu0 0.0
          %2514 = vmatpush1.xpose.msra.mxu0 0.0
          %2515 = vmatprep.subr.mxu0 0.0
          %2516 = vmatpush1.xpose.msra.mxu0 0.0
          %2517 = vmatprep.mubr.f32.mxu0 0.0
          %2518 = vmatmul.mubr.f32.gmra.mrb[0].mxu0 %v2448
          %v2519 = vpop.f32.mrb[0].mxu0
          %v2520 = vadd.f32 0.0, %v2519
          %v2521 = vpop.f32.mrb[0].mxu0
          %2522 = vdwg.mxu0
          %v2524 = vsel %vm2218, %v1626, 0
          %v2527 = vsel %vm2218, %v1920, 0
          %2529 = vmatprep.subr.mxu0 0.0
          %2530 = vmatpush1.xpose.msra.mxu0 %v2527
          %2531 = vmatprep.subr.mxu0 0.0
          %2532 = vmatpush1.xpose.msra.mxu0 0.0
          %2533 = vmatprep.subr.mxu0 0.0
          %2534 = vmatpush1.xpose.msra.mxu0 0.0
          %2535 = vmatprep.subr.mxu0 0.0
          %2536 = vmatpush1.xpose.msra.mxu0 0.0
          %2537 = vmatprep.subr.mxu0 0.0
          %2538 = vmatpush1.xpose.msra.mxu0 0.0
          %2539 = vmatprep.subr.mxu0 0.0
          %2540 = vmatpush1.xpose.msra.mxu0 0.0
          %2541 = vmatprep.subr.mxu0 0.0
          %2542 = vmatpush1.xpose.msra.mxu0 0.0
          %2543 = vmatprep.subr.mxu0 0.0
          %2544 = vmatpush1.xpose.msra.mxu0 0.0
          %2545 = vmatprep.subr.mxu0 0.0
          %2546 = vmatpush1.xpose.msra.mxu0 0.0
          %2547 = vmatprep.subr.mxu0 0.0
          %2548 = vmatpush1.xpose.msra.mxu0 0.0
          %2549 = vmatprep.subr.mxu0 0.0
          %2550 = vmatpush1.xpose.msra.mxu0 0.0
          %2551 = vmatprep.subr.mxu0 0.0
          %2552 = vmatpush1.xpose.msra.mxu0 0.0
          %2553 = vmatprep.subr.mxu0 0.0
          %2554 = vmatpush1.xpose.msra.mxu0 0.0
          %2555 = vmatprep.subr.mxu0 0.0
          %2556 = vmatpush1.xpose.msra.mxu0 0.0
          %2557 = vmatprep.subr.mxu0 0.0
          %2558 = vmatpush1.xpose.msra.mxu0 0.0
          %2559 = vmatprep.subr.mxu0 0.0
          %2560 = vmatpush1.xpose.msra.mxu0 0.0
          %2561 = vmatprep.subr.mxu0 0.0
          %2562 = vmatpush1.xpose.msra.mxu0 0.0
          %2563 = vmatprep.subr.mxu0 0.0
          %2564 = vmatpush1.xpose.msra.mxu0 0.0
          %2565 = vmatprep.subr.mxu0 0.0
          %2566 = vmatpush1.xpose.msra.mxu0 0.0
          %2567 = vmatprep.subr.mxu0 0.0
          %2568 = vmatpush1.xpose.msra.mxu0 0.0
          %2569 = vmatprep.subr.mxu0 0.0
          %2570 = vmatpush1.xpose.msra.mxu0 0.0
          %2571 = vmatprep.subr.mxu0 0.0
          %2572 = vmatpush1.xpose.msra.mxu0 0.0
          %2573 = vmatprep.subr.mxu0 0.0
          %2574 = vmatpush1.xpose.msra.mxu0 0.0
          %2575 = vmatprep.subr.mxu0 0.0
          %2576 = vmatpush1.xpose.msra.mxu0 0.0
          %2577 = vmatprep.subr.mxu0 0.0
          %2578 = vmatpush1.xpose.msra.mxu0 0.0
          %2579 = vmatprep.subr.mxu0 0.0
          %2580 = vmatpush1.xpose.msra.mxu0 0.0
          %2581 = vmatprep.subr.mxu0 0.0
          %2582 = vmatpush1.xpose.msra.mxu0 0.0
          %2583 = vmatprep.subr.mxu0 0.0
          %2584 = vmatpush1.xpose.msra.mxu0 0.0
          %2585 = vmatprep.subr.mxu0 0.0
          %2586 = vmatpush1.xpose.msra.mxu0 0.0
          %2587 = vmatprep.subr.mxu0 0.0
          %2588 = vmatpush1.xpose.msra.mxu0 0.0
          %2589 = vmatprep.subr.mxu0 0.0
          %2590 = vmatpush1.xpose.msra.mxu0 0.0
          %2591 = vmatprep.subr.mxu0 0.0
          %2592 = vmatpush1.xpose.msra.mxu0 0.0
          %2593 = vmatprep.mubr.f32.mxu0 0.0
          %2594 = vmatmul.mubr.f32.gmra.mrb[0].mxu0 %v2524
          %v2595 = vpop.f32.mrb[0].mxu0
          %v2596 = vadd.f32 0.0, %v2595
          %v2597 = vpop.f32.mrb[0].mxu0
          %2598 = vdwg.mxu0
          %v2600 = vsel %vm2218, %v1627, 0
          %v2603 = vsel %vm2218, %v1921, 0
          %2605 = vmatprep.subr.mxu0 0.0
          %2606 = vmatpush1.xpose.msra.mxu0 %v2603
          %2607 = vmatprep.subr.mxu0 0.0
          %2608 = vmatpush1.xpose.msra.mxu0 0.0
          %2609 = vmatprep.subr.mxu0 0.0
          %2610 = vmatpush1.xpose.msra.mxu0 0.0
          %2611 = vmatprep.subr.mxu0 0.0
          %2612 = vmatpush1.xpose.msra.mxu0 0.0
          %2613 = vmatprep.subr.mxu0 0.0
          %2614 = vmatpush1.xpose.msra.mxu0 0.0
          %2615 = vmatprep.subr.mxu0 0.0
          %2616 = vmatpush1.xpose.msra.mxu0 0.0
          %2617 = vmatprep.subr.mxu0 0.0
          %2618 = vmatpush1.xpose.msra.mxu0 0.0
          %2619 = vmatprep.subr.mxu0 0.0
          %2620 = vmatpush1.xpose.msra.mxu0 0.0
          %2621 = vmatprep.subr.mxu0 0.0
          %2622 = vmatpush1.xpose.msra.mxu0 0.0
          %2623 = vmatprep.subr.mxu0 0.0
          %2624 = vmatpush1.xpose.msra.mxu0 0.0
          %2625 = vmatprep.subr.mxu0 0.0
          %2626 = vmatpush1.xpose.msra.mxu0 0.0
          %2627 = vmatprep.subr.mxu0 0.0
          %2628 = vmatpush1.xpose.msra.mxu0 0.0
          %2629 = vmatprep.subr.mxu0 0.0
          %2630 = vmatpush1.xpose.msra.mxu0 0.0
          %2631 = vmatprep.subr.mxu0 0.0
          %2632 = vmatpush1.xpose.msra.mxu0 0.0
          %2633 = vmatprep.subr.mxu0 0.0
          %2634 = vmatpush1.xpose.msra.mxu0 0.0
          %2635 = vmatprep.subr.mxu0 0.0
          %2636 = vmatpush1.xpose.msra.mxu0 0.0
          %2637 = vmatprep.subr.mxu0 0.0
          %2638 = vmatpush1.xpose.msra.mxu0 0.0
          %2639 = vmatprep.subr.mxu0 0.0
          %2640 = vmatpush1.xpose.msra.mxu0 0.0
          %2641 = vmatprep.subr.mxu0 0.0
          %2642 = vmatpush1.xpose.msra.mxu0 0.0
          %2643 = vmatprep.subr.mxu0 0.0
          %2644 = vmatpush1.xpose.msra.mxu0 0.0
          %2645 = vmatprep.subr.mxu0 0.0
          %2646 = vmatpush1.xpose.msra.mxu0 0.0
          %2647 = vmatprep.subr.mxu0 0.0
          %2648 = vmatpush1.xpose.msra.mxu0 0.0
          %2649 = vmatprep.subr.mxu0 0.0
          %2650 = vmatpush1.xpose.msra.mxu0 0.0
          %2651 = vmatprep.subr.mxu0 0.0
          %2652 = vmatpush1.xpose.msra.mxu0 0.0
          %2653 = vmatprep.subr.mxu0 0.0
          %2654 = vmatpush1.xpose.msra.mxu0 0.0
          %2655 = vmatprep.subr.mxu0 0.0
          %2656 = vmatpush1.xpose.msra.mxu0 0.0
          %2657 = vmatprep.subr.mxu0 0.0
          %2658 = vmatpush1.xpose.msra.mxu0 0.0
          %2659 = vmatprep.subr.mxu0 0.0
          %2660 = vmatpush1.xpose.msra.mxu0 0.0
          %2661 = vmatprep.subr.mxu0 0.0
          %2662 = vmatpush1.xpose.msra.mxu0 0.0
          %2663 = vmatprep.subr.mxu0 0.0
          %2664 = vmatpush1.xpose.msra.mxu0 0.0
          %2665 = vmatprep.subr.mxu0 0.0
          %2666 = vmatpush1.xpose.msra.mxu0 0.0
          %2667 = vmatprep.subr.mxu0 0.0
          %2668 = vmatpush1.xpose.msra.mxu0 0.0
          %2669 = vmatprep.mubr.f32.mxu0 0.0
          %2670 = vmatmul.mubr.f32.gmra.mrb[0].mxu0 %v2600
          %v2671 = vpop.f32.mrb[0].mxu0
          %v2672 = vadd.f32 0.0, %v2671
          %v2673 = vpop.f32.mrb[0].mxu0
          %2674 = vdwg.mxu0
          %v2676 = vsel %vm2218, %v1628, 0
          %v2679 = vsel %vm2218, %v1922, 0
          %2681 = vmatprep.subr.mxu0 0.0
          %2682 = vmatpush1.xpose.msra.mxu0 %v2679
          %2683 = vmatprep.subr.mxu0 0.0
          %2684 = vmatpush1.xpose.msra.mxu0 0.0
          %2685 = vmatprep.subr.mxu0 0.0
          %2686 = vmatpush1.xpose.msra.mxu0 0.0
          %2687 = vmatprep.subr.mxu0 0.0
          %2688 = vmatpush1.xpose.msra.mxu0 0.0
          %2689 = vmatprep.subr.mxu0 0.0
          %2690 = vmatpush1.xpose.msra.mxu0 0.0
          %2691 = vmatprep.subr.mxu0 0.0
          %2692 = vmatpush1.xpose.msra.mxu0 0.0
          %2693 = vmatprep.subr.mxu0 0.0
          %2694 = vmatpush1.xpose.msra.mxu0 0.0
          %2695 = vmatprep.subr.mxu0 0.0
          %2696 = vmatpush1.xpose.msra.mxu0 0.0
          %2697 = vmatprep.subr.mxu0 0.0
          %2698 = vmatpush1.xpose.msra.mxu0 0.0
          %2699 = vmatprep.subr.mxu0 0.0
          %2700 = vmatpush1.xpose.msra.mxu0 0.0
          %2701 = vmatprep.subr.mxu0 0.0
          %2702 = vmatpush1.xpose.msra.mxu0 0.0
          %2703 = vmatprep.subr.mxu0 0.0
          %2704 = vmatpush1.xpose.msra.mxu0 0.0
          %2705 = vmatprep.subr.mxu0 0.0
          %2706 = vmatpush1.xpose.msra.mxu0 0.0
          %2707 = vmatprep.subr.mxu0 0.0
          %2708 = vmatpush1.xpose.msra.mxu0 0.0
          %2709 = vmatprep.subr.mxu0 0.0
          %2710 = vmatpush1.xpose.msra.mxu0 0.0
          %2711 = vmatprep.subr.mxu0 0.0
          %2712 = vmatpush1.xpose.msra.mxu0 0.0
          %2713 = vmatprep.subr.mxu0 0.0
          %2714 = vmatpush1.xpose.msra.mxu0 0.0
          %2715 = vmatprep.subr.mxu0 0.0
          %2716 = vmatpush1.xpose.msra.mxu0 0.0
          %2717 = vmatprep.subr.mxu0 0.0
          %2718 = vmatpush1.xpose.msra.mxu0 0.0
          %2719 = vmatprep.subr.mxu0 0.0
          %2720 = vmatpush1.xpose.msra.mxu0 0.0
          %2721 = vmatprep.subr.mxu0 0.0
          %2722 = vmatpush1.xpose.msra.mxu0 0.0
          %2723 = vmatprep.subr.mxu0 0.0
          %2724 = vmatpush1.xpose.msra.mxu0 0.0
          %2725 = vmatprep.subr.mxu0 0.0
          %2726 = vmatpush1.xpose.msra.mxu0 0.0
          %2727 = vmatprep.subr.mxu0 0.0
          %2728 = vmatpush1.xpose.msra.mxu0 0.0
          %2729 = vmatprep.subr.mxu0 0.0
          %2730 = vmatpush1.xpose.msra.mxu0 0.0
          %2731 = vmatprep.subr.mxu0 0.0
          %2732 = vmatpush1.xpose.msra.mxu0 0.0
          %2733 = vmatprep.subr.mxu0 0.0
          %2734 = vmatpush1.xpose.msra.mxu0 0.0
          %2735 = vmatprep.subr.mxu0 0.0
          %2736 = vmatpush1.xpose.msra.mxu0 0.0
          %2737 = vmatprep.subr.mxu0 0.0
          %2738 = vmatpush1.xpose.msra.mxu0 0.0
          %2739 = vmatprep.subr.mxu0 0.0
          %2740 = vmatpush1.xpose.msra.mxu0 0.0
          %2741 = vmatprep.subr.mxu0 0.0
          %2742 = vmatpush1.xpose.msra.mxu0 0.0
          %2743 = vmatprep.subr.mxu0 0.0
          %2744 = vmatpush1.xpose.msra.mxu0 0.0
          %2745 = vmatprep.mubr.f32.mxu0 0.0
          %2746 = vmatmul.mubr.f32.gmra.mrb[0].mxu0 %v2676
          %v2747 = vpop.f32.mrb[0].mxu0
          %v2748 = vadd.f32 0.0, %v2747
          %v2749 = vpop.f32.mrb[0].mxu0
          %2750 = vdwg.mxu0
          %v2752 = vsel %vm2218, %v1629, 0
          %v2755 = vsel %vm2218, %v1923, 0
          %2757 = vmatprep.subr.mxu0 0.0
          %2758 = vmatpush1.xpose.msra.mxu0 %v2755
          %2759 = vmatprep.subr.mxu0 0.0
          %2760 = vmatpush1.xpose.msra.mxu0 0.0
          %2761 = vmatprep.subr.mxu0 0.0
          %2762 = vmatpush1.xpose.msra.mxu0 0.0
          %2763 = vmatprep.subr.mxu0 0.0
          %2764 = vmatpush1.xpose.msra.mxu0 0.0
          %2765 = vmatprep.subr.mxu0 0.0
          %2766 = vmatpush1.xpose.msra.mxu0 0.0
          %2767 = vmatprep.subr.mxu0 0.0
          %2768 = vmatpush1.xpose.msra.mxu0 0.0
          %2769 = vmatprep.subr.mxu0 0.0
          %2770 = vmatpush1.xpose.msra.mxu0 0.0
          %2771 = vmatprep.subr.mxu0 0.0
          %2772 = vmatpush1.xpose.msra.mxu0 0.0
          %2773 = vmatprep.subr.mxu0 0.0
          %2774 = vmatpush1.xpose.msra.mxu0 0.0
          %2775 = vmatprep.subr.mxu0 0.0
          %2776 = vmatpush1.xpose.msra.mxu0 0.0
          %2777 = vmatprep.subr.mxu0 0.0
          %2778 = vmatpush1.xpose.msra.mxu0 0.0
          %2779 = vmatprep.subr.mxu0 0.0
          %2780 = vmatpush1.xpose.msra.mxu0 0.0
          %2781 = vmatprep.subr.mxu0 0.0
          %2782 = vmatpush1.xpose.msra.mxu0 0.0
          %2783 = vmatprep.subr.mxu0 0.0
          %2784 = vmatpush1.xpose.msra.mxu0 0.0
          %2785 = vmatprep.subr.mxu0 0.0
          %2786 = vmatpush1.xpose.msra.mxu0 0.0
          %2787 = vmatprep.subr.mxu0 0.0
          %2788 = vmatpush1.xpose.msra.mxu0 0.0
          %2789 = vmatprep.subr.mxu0 0.0
          %2790 = vmatpush1.xpose.msra.mxu0 0.0
          %2791 = vmatprep.subr.mxu0 0.0
          %2792 = vmatpush1.xpose.msra.mxu0 0.0
          %2793 = vmatprep.subr.mxu0 0.0
          %2794 = vmatpush1.xpose.msra.mxu0 0.0
          %2795 = vmatprep.subr.mxu0 0.0
          %2796 = vmatpush1.xpose.msra.mxu0 0.0
          %2797 = vmatprep.subr.mxu0 0.0
          %2798 = vmatpush1.xpose.msra.mxu0 0.0
          %2799 = vmatprep.subr.mxu0 0.0
          %2800 = vmatpush1.xpose.msra.mxu0 0.0
          %2801 = vmatprep.subr.mxu0 0.0
          %2802 = vmatpush1.xpose.msra.mxu0 0.0
          %2803 = vmatprep.subr.mxu0 0.0
          %2804 = vmatpush1.xpose.msra.mxu0 0.0
          %2805 = vmatprep.subr.mxu0 0.0
          %2806 = vmatpush1.xpose.msra.mxu0 0.0
          %2807 = vmatprep.subr.mxu0 0.0
          %2808 = vmatpush1.xpose.msra.mxu0 0.0
          %2809 = vmatprep.subr.mxu0 0.0
          %2810 = vmatpush1.xpose.msra.mxu0 0.0
          %2811 = vmatprep.subr.mxu0 0.0
          %2812 = vmatpush1.xpose.msra.mxu0 0.0
          %2813 = vmatprep.subr.mxu0 0.0
          %2814 = vmatpush1.xpose.msra.mxu0 0.0
          %2815 = vmatprep.subr.mxu0 0.0
          %2816 = vmatpush1.xpose.msra.mxu0 0.0
          %2817 = vmatprep.subr.mxu0 0.0
          %2818 = vmatpush1.xpose.msra.mxu0 0.0
          %2819 = vmatprep.subr.mxu0 0.0
          %2820 = vmatpush1.xpose.msra.mxu0 0.0
          %2821 = vmatprep.mubr.f32.mxu0 0.0
          %2822 = vmatmul.mubr.f32.gmra.mrb[0].mxu0 %v2752
          %v2823 = vpop.f32.mrb[0].mxu0
          %v2824 = vadd.f32 0.0, %v2823
          %v2825 = vpop.f32.mrb[0].mxu0
          %2826 = vdwg.mxu0
          %vm2827 = vcmask 64512
          %v2828 = vsel %vm2827, %v2292, -inf
          %2829 = vmax.xlane.f32.xlu0 %v2828
          %v2830 = vpop.xlane.xlu0 %2829
          %v2831 = vsel %vm2827, %v2368, -inf
          %2832 = vmax.xlane.f32.xlu0 %v2831
          %v2833 = vpop.xlane.xlu0 %2832
          %v2834 = vsel %vm2827, %v2444, -inf
          %2835 = vmax.xlane.f32.xlu0 %v2834
          %v2836 = vpop.xlane.xlu0 %2835
          %v2837 = vsel %vm2827, %v2520, -inf
          %2838 = vmax.xlane.f32.xlu0 %v2837
          %v2839 = vpop.xlane.xlu0 %2838
          %v2840 = vsel %vm2827, %v2596, -inf
          %2841 = vmax.xlane.f32.xlu0 %v2840
          %v2842 = vpop.xlane.xlu0 %2841
          %v2843 = vsel %vm2827, %v2672, -inf
          %2844 = vmax.xlane.f32.xlu0 %v2843
          %v2845 = vpop.xlane.xlu0 %2844
          %v2846 = vsel %vm2827, %v2748, -inf
          %2847 = vmax.xlane.f32.xlu0 %v2846
          %v2848 = vpop.xlane.xlu0 %2847
          %v2849 = vsel %vm2827, %v2824, -inf
          %2850 = vmax.xlane.f32.xlu0 %v2849
          %v2851 = vpop.xlane.xlu0 %2850
          %v2852 = vsub.f32 %v2292, %v2830
          %v2853 = vsub.f32 %v2368, %v2833
          %v2854 = vsub.f32 %v2444, %v2836
          %v2855 = vsub.f32 %v2520, %v2839
          %v2856 = vsub.f32 %v2596, %v2842
          %v2857 = vsub.f32 %v2672, %v2845
          %v2858 = vsub.f32 %v2748, %v2848
          %v2859 = vsub.f32 %v2824, %v2851
          %v2860 = vmul.f32 %v2852, 1.442695
          %v2861 = vpow.pop %v2860
          %v2862 = vmul.f32 %v2853, 1.442695
          %v2863 = vpow.pop %v2862
          %v2864 = vmul.f32 %v2854, 1.442695
          %v2865 = vpow.pop %v2864
          %v2866 = vmul.f32 %v2855, 1.442695
          %v2867 = vpow.pop %v2866
          %v2868 = vmul.f32 %v2856, 1.442695
          %v2869 = vpow.pop %v2868
          %v2870 = vmul.f32 %v2857, 1.442695
          %v2871 = vpow.pop %v2870
          %v2872 = vmul.f32 %v2858, 1.442695
          %v2873 = vpow.pop %v2872
          %v2874 = vmul.f32 %v2859, 1.442695
          %v2875 = vpow.pop %v2874
          %v2876 = vsel %vm2827, %v2861, 0.0
          %2877 = vadd.xlane.f32.xlu0 %v2876
          %v2878 = vpop.xlane.xlu0 %2877
          %v2879 = vsel %vm2827, %v2863, 0.0
          %2880 = vadd.xlane.f32.xlu0 %v2879
          %v2881 = vpop.xlane.xlu0 %2880
          %v2882 = vsel %vm2827, %v2865, 0.0
          %2883 = vadd.xlane.f32.xlu0 %v2882
          %v2884 = vpop.xlane.xlu0 %2883
          %v2885 = vsel %vm2827, %v2867, 0.0
          %2886 = vadd.xlane.f32.xlu0 %v2885
          %v2887 = vpop.xlane.xlu0 %2886
          %v2888 = vsel %vm2827, %v2869, 0.0
          %2889 = vadd.xlane.f32.xlu0 %v2888
          %v2890 = vpop.xlane.xlu0 %2889
          %v2891 = vsel %vm2827, %v2871, 0.0
          %2892 = vadd.xlane.f32.xlu0 %v2891
          %v2893 = vpop.xlane.xlu0 %2892
          %v2894 = vsel %vm2827, %v2873, 0.0
          %2895 = vadd.xlane.f32.xlu0 %v2894
          %v2896 = vpop.xlane.xlu0 %2895
          %v2897 = vsel %vm2827, %v2875, 0.0
          %2898 = vadd.xlane.f32.xlu0 %v2897
          %v2899 = vpop.xlane.xlu0 %2898
          %v2900 = vrcp.pop %v2878
          %v2901 = vrcp.pop %v2881
          %v2902 = vrcp.pop %v2884
          %v2903 = vrcp.pop %v2887
          %v2904 = vrcp.pop %v2890
          %v2905 = vrcp.pop %v2893
          %v2906 = vrcp.pop %v2896
          %v2907 = vrcp.pop %v2899
          %v2908 = vmul.f32 %v2861, %v2900
          %v2909 = vmul.f32 %v2863, %v2901
          %v2910 = vmul.f32 %v2865, %v2902
          %v2911 = vmul.f32 %v2867, %v2903
          %v2912 = vmul.f32 %v2869, %v2904
          %v2913 = vmul.f32 %v2871, %v2905
          %v2914 = vmul.f32 %v2873, %v2906
          %v2915 = vmul.f32 %v2875, %v2907
          %v2917 = vsel %vm2827, %v2908, 0
          %2919 = vmatprep.subr.mxu0 0.0
          %2920 = vmatpush1.msra.mxu0 %v2210
          %2921 = vmatprep.subr.mxu0 0.0
          %2922 = vmatpush1.msra.mxu0 0.0
          %2923 = vmatprep.subr.mxu0 0.0
          %2924 = vmatpush1.msra.mxu0 0.0
          %2925 = vmatprep.subr.mxu0 0.0
          %2926 = vmatpush1.msra.mxu0 0.0
          %2927 = vmatprep.subr.mxu0 0.0
          %2928 = vmatpush1.msra.mxu0 0.0
          %2929 = vmatprep.subr.mxu0 0.0
          %2930 = vmatpush1.msra.mxu0 0.0
          %2931 = vmatprep.subr.mxu0 0.0
          %2932 = vmatpush1.msra.mxu0 0.0
          %2933 = vmatprep.subr.mxu0 0.0
          %2934 = vmatpush1.msra.mxu0 0.0
          %2935 = vmatprep.subr.mxu0 0.0
          %2936 = vmatpush1.msra.mxu0 0.0
          %2937 = vmatprep.subr.mxu0 0.0
          %2938 = vmatpush1.msra.mxu0 0.0
          %2939 = vmatprep.subr.mxu0 0.0
          %2940 = vmatpush1.msra.mxu0 0.0
          %2941 = vmatprep.subr.mxu0 0.0
          %2942 = vmatpush1.msra.mxu0 0.0
          %2943 = vmatprep.subr.mxu0 0.0
          %2944 = vmatpush1.msra.mxu0 0.0
          %2945 = vmatprep.subr.mxu0 0.0
          %2946 = vmatpush1.msra.mxu0 0.0
          %2947 = vmatprep.subr.mxu0 0.0
          %2948 = vmatpush1.msra.mxu0 0.0
          %2949 = vmatprep.subr.mxu0 0.0
          %2950 = vmatpush1.msra.mxu0 0.0
          %2951 = vmatprep.subr.mxu0 0.0
          %2952 = vmatpush1.msra.mxu0 0.0
          %2953 = vmatprep.subr.mxu0 0.0
          %2954 = vmatpush1.msra.mxu0 0.0
          %2955 = vmatprep.subr.mxu0 0.0
          %2956 = vmatpush1.msra.mxu0 0.0
          %2957 = vmatprep.subr.mxu0 0.0
          %2958 = vmatpush1.msra.mxu0 0.0
          %2959 = vmatprep.subr.mxu0 0.0
          %2960 = vmatpush1.msra.mxu0 0.0
          %2961 = vmatprep.subr.mxu0 0.0
          %2962 = vmatpush1.msra.mxu0 0.0
          %2963 = vmatprep.subr.mxu0 0.0
          %2964 = vmatpush1.msra.mxu0 0.0
          %2965 = vmatprep.subr.mxu0 0.0
          %2966 = vmatpush1.msra.mxu0 0.0
          %2967 = vmatprep.subr.mxu0 0.0
          %2968 = vmatpush1.msra.mxu0 0.0
          %2969 = vmatprep.subr.mxu0 0.0
          %2970 = vmatpush1.msra.mxu0 0.0
          %2971 = vmatprep.subr.mxu0 0.0
          %2972 = vmatpush1.msra.mxu0 0.0
          %2973 = vmatprep.subr.mxu0 0.0
          %2974 = vmatpush1.msra.mxu0 0.0
          %2975 = vmatprep.subr.mxu0 0.0
          %2976 = vmatpush1.msra.mxu0 0.0
          %2977 = vmatprep.subr.mxu0 0.0
          %2978 = vmatpush1.msra.mxu0 0.0
          %2979 = vmatprep.subr.mxu0 0.0
          %2980 = vmatpush1.msra.mxu0 0.0
          %2981 = vmatprep.subr.mxu0 0.0
          %2982 = vmatpush1.msra.mxu0 0.0
          %2983 = vmatprep.mubr.f32.mxu0 0.0
          %2984 = vmatmul.mubr.f32.gmra.mrb[0].mxu0 %v2917
          %v2985 = vpop.f32.mrb[0].mxu0
          %v2986 = vadd.f32 0.0, %v2985
          %v2987 = vpop.f32.mrb[0].mxu0
          %2988 = vdwg.mxu0
          %v2990 = vsel %vm2827, %v2909, 0
          %2992 = vmatprep.subr.mxu0 0.0
          %2993 = vmatpush1.msra.mxu0 %v2211
          %2994 = vmatprep.subr.mxu0 0.0
          %2995 = vmatpush1.msra.mxu0 0.0
          %2996 = vmatprep.subr.mxu0 0.0
          %2997 = vmatpush1.msra.mxu0 0.0
          %2998 = vmatprep.subr.mxu0 0.0
          %2999 = vmatpush1.msra.mxu0 0.0
          %3000 = vmatprep.subr.mxu0 0.0
          %3001 = vmatpush1.msra.mxu0 0.0
          %3002 = vmatprep.subr.mxu0 0.0
          %3003 = vmatpush1.msra.mxu0 0.0
          %3004 = vmatprep.subr.mxu0 0.0
          %3005 = vmatpush1.msra.mxu0 0.0
          %3006 = vmatprep.subr.mxu0 0.0
          %3007 = vmatpush1.msra.mxu0 0.0
          %3008 = vmatprep.subr.mxu0 0.0
          %3009 = vmatpush1.msra.mxu0 0.0
          %3010 = vmatprep.subr.mxu0 0.0
          %3011 = vmatpush1.msra.mxu0 0.0
          %3012 = vmatprep.subr.mxu0 0.0
          %3013 = vmatpush1.msra.mxu0 0.0
          %3014 = vmatprep.subr.mxu0 0.0
          %3015 = vmatpush1.msra.mxu0 0.0
          %3016 = vmatprep.subr.mxu0 0.0
          %3017 = vmatpush1.msra.mxu0 0.0
          %3018 = vmatprep.subr.mxu0 0.0
          %3019 = vmatpush1.msra.mxu0 0.0
          %3020 = vmatprep.subr.mxu0 0.0
          %3021 = vmatpush1.msra.mxu0 0.0
          %3022 = vmatprep.subr.mxu0 0.0
          %3023 = vmatpush1.msra.mxu0 0.0
          %3024 = vmatprep.subr.mxu0 0.0
          %3025 = vmatpush1.msra.mxu0 0.0
          %3026 = vmatprep.subr.mxu0 0.0
          %3027 = vmatpush1.msra.mxu0 0.0
          %3028 = vmatprep.subr.mxu0 0.0
          %3029 = vmatpush1.msra.mxu0 0.0
          %3030 = vmatprep.subr.mxu0 0.0
          %3031 = vmatpush1.msra.mxu0 0.0
          %3032 = vmatprep.subr.mxu0 0.0
          %3033 = vmatpush1.msra.mxu0 0.0
          %3034 = vmatprep.subr.mxu0 0.0
          %3035 = vmatpush1.msra.mxu0 0.0
          %3036 = vmatprep.subr.mxu0 0.0
          %3037 = vmatpush1.msra.mxu0 0.0
          %3038 = vmatprep.subr.mxu0 0.0
          %3039 = vmatpush1.msra.mxu0 0.0
          %3040 = vmatprep.subr.mxu0 0.0
          %3041 = vmatpush1.msra.mxu0 0.0
          %3042 = vmatprep.subr.mxu0 0.0
          %3043 = vmatpush1.msra.mxu0 0.0
          %3044 = vmatprep.subr.mxu0 0.0
          %3045 = vmatpush1.msra.mxu0 0.0
          %3046 = vmatprep.subr.mxu0 0.0
          %3047 = vmatpush1.msra.mxu0 0.0
          %3048 = vmatprep.subr.mxu0 0.0
          %3049 = vmatpush1.msra.mxu0 0.0
          %3050 = vmatprep.subr.mxu0 0.0
          %3051 = vmatpush1.msra.mxu0 0.0
          %3052 = vmatprep.subr.mxu0 0.0
          %3053 = vmatpush1.msra.mxu0 0.0
          %3054 = vmatprep.subr.mxu0 0.0
          %3055 = vmatpush1.msra.mxu0 0.0
          %3056 = vmatprep.mubr.f32.mxu0 0.0
          %3057 = vmatmul.mubr.f32.gmra.mrb[0].mxu0 %v2990
          %v3058 = vpop.f32.mrb[0].mxu0
          %v3059 = vadd.f32 0.0, %v3058
          %v3060 = vpop.f32.mrb[0].mxu0
          %3061 = vdwg.mxu0
          %v3063 = vsel %vm2827, %v2910, 0
          %3065 = vmatprep.subr.mxu0 0.0
          %3066 = vmatpush1.msra.mxu0 %v2212
          %3067 = vmatprep.subr.mxu0 0.0
          %3068 = vmatpush1.msra.mxu0 0.0
          %3069 = vmatprep.subr.mxu0 0.0
          %3070 = vmatpush1.msra.mxu0 0.0
          %3071 = vmatprep.subr.mxu0 0.0
          %3072 = vmatpush1.msra.mxu0 0.0
          %3073 = vmatprep.subr.mxu0 0.0
          %3074 = vmatpush1.msra.mxu0 0.0
          %3075 = vmatprep.subr.mxu0 0.0
          %3076 = vmatpush1.msra.mxu0 0.0
          %3077 = vmatprep.subr.mxu0 0.0
          %3078 = vmatpush1.msra.mxu0 0.0
          %3079 = vmatprep.subr.mxu0 0.0
          %3080 = vmatpush1.msra.mxu0 0.0
          %3081 = vmatprep.subr.mxu0 0.0
          %3082 = vmatpush1.msra.mxu0 0.0
          %3083 = vmatprep.subr.mxu0 0.0
          %3084 = vmatpush1.msra.mxu0 0.0
          %3085 = vmatprep.subr.mxu0 0.0
          %3086 = vmatpush1.msra.mxu0 0.0
          %3087 = vmatprep.subr.mxu0 0.0
          %3088 = vmatpush1.msra.mxu0 0.0
          %3089 = vmatprep.subr.mxu0 0.0
          %3090 = vmatpush1.msra.mxu0 0.0
          %3091 = vmatprep.subr.mxu0 0.0
          %3092 = vmatpush1.msra.mxu0 0.0
          %3093 = vmatprep.subr.mxu0 0.0
          %3094 = vmatpush1.msra.mxu0 0.0
          %3095 = vmatprep.subr.mxu0 0.0
          %3096 = vmatpush1.msra.mxu0 0.0
          %3097 = vmatprep.subr.mxu0 0.0
          %3098 = vmatpush1.msra.mxu0 0.0
          %3099 = vmatprep.subr.mxu0 0.0
          %3100 = vmatpush1.msra.mxu0 0.0
          %3101 = vmatprep.subr.mxu0 0.0
          %3102 = vmatpush1.msra.mxu0 0.0
          %3103 = vmatprep.subr.mxu0 0.0
          %3104 = vmatpush1.msra.mxu0 0.0
          %3105 = vmatprep.subr.mxu0 0.0
          %3106 = vmatpush1.msra.mxu0 0.0
          %3107 = vmatprep.subr.mxu0 0.0
          %3108 = vmatpush1.msra.mxu0 0.0
          %3109 = vmatprep.subr.mxu0 0.0
          %3110 = vmatpush1.msra.mxu0 0.0
          %3111 = vmatprep.subr.mxu0 0.0
          %3112 = vmatpush1.msra.mxu0 0.0
          %3113 = vmatprep.subr.mxu0 0.0
          %3114 = vmatpush1.msra.mxu0 0.0
          %3115 = vmatprep.subr.mxu0 0.0
          %3116 = vmatpush1.msra.mxu0 0.0
          %3117 = vmatprep.subr.mxu0 0.0
          %3118 = vmatpush1.msra.mxu0 0.0
          %3119 = vmatprep.subr.mxu0 0.0
          %3120 = vmatpush1.msra.mxu0 0.0
          %3121 = vmatprep.subr.mxu0 0.0
          %3122 = vmatpush1.msra.mxu0 0.0
          %3123 = vmatprep.subr.mxu0 0.0
          %3124 = vmatpush1.msra.mxu0 0.0
          %3125 = vmatprep.subr.mxu0 0.0
          %3126 = vmatpush1.msra.mxu0 0.0
          %3127 = vmatprep.subr.mxu0 0.0
          %3128 = vmatpush1.msra.mxu0 0.0
          %3129 = vmatprep.mubr.f32.mxu0 0.0
          %3130 = vmatmul.mubr.f32.gmra.mrb[0].mxu0 %v3063
          %v3131 = vpop.f32.mrb[0].mxu0
          %v3132 = vadd.f32 0.0, %v3131
          %v3133 = vpop.f32.mrb[0].mxu0
          %3134 = vdwg.mxu0
          %v3136 = vsel %vm2827, %v2911, 0
          %3138 = vmatprep.subr.mxu0 0.0
          %3139 = vmatpush1.msra.mxu0 %v2213
          %3140 = vmatprep.subr.mxu0 0.0
          %3141 = vmatpush1.msra.mxu0 0.0
          %3142 = vmatprep.subr.mxu0 0.0
          %3143 = vmatpush1.msra.mxu0 0.0
          %3144 = vmatprep.subr.mxu0 0.0
          %3145 = vmatpush1.msra.mxu0 0.0
          %3146 = vmatprep.subr.mxu0 0.0
          %3147 = vmatpush1.msra.mxu0 0.0
          %3148 = vmatprep.subr.mxu0 0.0
          %3149 = vmatpush1.msra.mxu0 0.0
          %3150 = vmatprep.subr.mxu0 0.0
          %3151 = vmatpush1.msra.mxu0 0.0
          %3152 = vmatprep.subr.mxu0 0.0
          %3153 = vmatpush1.msra.mxu0 0.0
          %3154 = vmatprep.subr.mxu0 0.0
          %3155 = vmatpush1.msra.mxu0 0.0
          %3156 = vmatprep.subr.mxu0 0.0
          %3157 = vmatpush1.msra.mxu0 0.0
          %3158 = vmatprep.subr.mxu0 0.0
          %3159 = vmatpush1.msra.mxu0 0.0
          %3160 = vmatprep.subr.mxu0 0.0
          %3161 = vmatpush1.msra.mxu0 0.0
          %3162 = vmatprep.subr.mxu0 0.0
          %3163 = vmatpush1.msra.mxu0 0.0
          %3164 = vmatprep.subr.mxu0 0.0
          %3165 = vmatpush1.msra.mxu0 0.0
          %3166 = vmatprep.subr.mxu0 0.0
          %3167 = vmatpush1.msra.mxu0 0.0
          %3168 = vmatprep.subr.mxu0 0.0
          %3169 = vmatpush1.msra.mxu0 0.0
          %3170 = vmatprep.subr.mxu0 0.0
          %3171 = vmatpush1.msra.mxu0 0.0
          %3172 = vmatprep.subr.mxu0 0.0
          %3173 = vmatpush1.msra.mxu0 0.0
          %3174 = vmatprep.subr.mxu0 0.0
          %3175 = vmatpush1.msra.mxu0 0.0
          %3176 = vmatprep.subr.mxu0 0.0
          %3177 = vmatpush1.msra.mxu0 0.0
          %3178 = vmatprep.subr.mxu0 0.0
          %3179 = vmatpush1.msra.mxu0 0.0
          %3180 = vmatprep.subr.mxu0 0.0
          %3181 = vmatpush1.msra.mxu0 0.0
          %3182 = vmatprep.subr.mxu0 0.0
          %3183 = vmatpush1.msra.mxu0 0.0
          %3184 = vmatprep.subr.mxu0 0.0
          %3185 = vmatpush1.msra.mxu0 0.0
          %3186 = vmatprep.subr.mxu0 0.0
          %3187 = vmatpush1.msra.mxu0 0.0
          %3188 = vmatprep.subr.mxu0 0.0
          %3189 = vmatpush1.msra.mxu0 0.0
          %3190 = vmatprep.subr.mxu0 0.0
          %3191 = vmatpush1.msra.mxu0 0.0
          %3192 = vmatprep.subr.mxu0 0.0
          %3193 = vmatpush1.msra.mxu0 0.0
          %3194 = vmatprep.subr.mxu0 0.0
          %3195 = vmatpush1.msra.mxu0 0.0
          %3196 = vmatprep.subr.mxu0 0.0
          %3197 = vmatpush1.msra.mxu0 0.0
          %3198 = vmatprep.subr.mxu0 0.0
          %3199 = vmatpush1.msra.mxu0 0.0
          %3200 = vmatprep.subr.mxu0 0.0
          %3201 = vmatpush1.msra.mxu0 0.0
          %3202 = vmatprep.mubr.f32.mxu0 0.0
          %3203 = vmatmul.mubr.f32.gmra.mrb[0].mxu0 %v3136
          %v3204 = vpop.f32.mrb[0].mxu0
          %v3205 = vadd.f32 0.0, %v3204
          %v3206 = vpop.f32.mrb[0].mxu0
          %3207 = vdwg.mxu0
          %v3209 = vsel %vm2827, %v2912, 0
          %3211 = vmatprep.subr.mxu0 0.0
          %3212 = vmatpush1.msra.mxu0 %v2214
          %3213 = vmatprep.subr.mxu0 0.0
          %3214 = vmatpush1.msra.mxu0 0.0
          %3215 = vmatprep.subr.mxu0 0.0
          %3216 = vmatpush1.msra.mxu0 0.0
          %3217 = vmatprep.subr.mxu0 0.0
          %3218 = vmatpush1.msra.mxu0 0.0
          %3219 = vmatprep.subr.mxu0 0.0
          %3220 = vmatpush1.msra.mxu0 0.0
          %3221 = vmatprep.subr.mxu0 0.0
          %3222 = vmatpush1.msra.mxu0 0.0
          %3223 = vmatprep.subr.mxu0 0.0
          %3224 = vmatpush1.msra.mxu0 0.0
          %3225 = vmatprep.subr.mxu0 0.0
          %3226 = vmatpush1.msra.mxu0 0.0
          %3227 = vmatprep.subr.mxu0 0.0
          %3228 = vmatpush1.msra.mxu0 0.0
          %3229 = vmatprep.subr.mxu0 0.0
          %3230 = vmatpush1.msra.mxu0 0.0
          %3231 = vmatprep.subr.mxu0 0.0
          %3232 = vmatpush1.msra.mxu0 0.0
          %3233 = vmatprep.subr.mxu0 0.0
          %3234 = vmatpush1.msra.mxu0 0.0
          %3235 = vmatprep.subr.mxu0 0.0
          %3236 = vmatpush1.msra.mxu0 0.0
          %3237 = vmatprep.subr.mxu0 0.0
          %3238 = vmatpush1.msra.mxu0 0.0
          %3239 = vmatprep.subr.mxu0 0.0
          %3240 = vmatpush1.msra.mxu0 0.0
          %3241 = vmatprep.subr.mxu0 0.0
          %3242 = vmatpush1.msra.mxu0 0.0
          %3243 = vmatprep.subr.mxu0 0.0
          %3244 = vmatpush1.msra.mxu0 0.0
          %3245 = vmatprep.subr.mxu0 0.0
          %3246 = vmatpush1.msra.mxu0 0.0
          %3247 = vmatprep.subr.mxu0 0.0
          %3248 = vmatpush1.msra.mxu0 0.0
          %3249 = vmatprep.subr.mxu0 0.0
          %3250 = vmatpush1.msra.mxu0 0.0
          %3251 = vmatprep.subr.mxu0 0.0
          %3252 = vmatpush1.msra.mxu0 0.0
          %3253 = vmatprep.subr.mxu0 0.0
          %3254 = vmatpush1.msra.mxu0 0.0
          %3255 = vmatprep.subr.mxu0 0.0
          %3256 = vmatpush1.msra.mxu0 0.0
          %3257 = vmatprep.subr.mxu0 0.0
          %3258 = vmatpush1.msra.mxu0 0.0
          %3259 = vmatprep.subr.mxu0 0.0
          %3260 = vmatpush1.msra.mxu0 0.0
          %3261 = vmatprep.subr.mxu0 0.0
          %3262 = vmatpush1.msra.mxu0 0.0
          %3263 = vmatprep.subr.mxu0 0.0
          %3264 = vmatpush1.msra.mxu0 0.0
          %3265 = vmatprep.subr.mxu0 0.0
          %3266 = vmatpush1.msra.mxu0 0.0
          %3267 = vmatprep.subr.mxu0 0.0
          %3268 = vmatpush1.msra.mxu0 0.0
          %3269 = vmatprep.subr.mxu0 0.0
          %3270 = vmatpush1.msra.mxu0 0.0
          %3271 = vmatprep.subr.mxu0 0.0
          %3272 = vmatpush1.msra.mxu0 0.0
          %3273 = vmatprep.subr.mxu0 0.0
          %3274 = vmatpush1.msra.mxu0 0.0
          %3275 = vmatprep.mubr.f32.mxu0 0.0
          %3276 = vmatmul.mubr.f32.gmra.mrb[0].mxu0 %v3209
          %v3277 = vpop.f32.mrb[0].mxu0
          %v3278 = vadd.f32 0.0, %v3277
          %v3279 = vpop.f32.mrb[0].mxu0
          %3280 = vdwg.mxu0
          %v3282 = vsel %vm2827, %v2913, 0
          %3284 = vmatprep.subr.mxu0 0.0
          %3285 = vmatpush1.msra.mxu0 %v2215
          %3286 = vmatprep.subr.mxu0 0.0
          %3287 = vmatpush1.msra.mxu0 0.0
          %3288 = vmatprep.subr.mxu0 0.0
          %3289 = vmatpush1.msra.mxu0 0.0
          %3290 = vmatprep.subr.mxu0 0.0
          %3291 = vmatpush1.msra.mxu0 0.0
          %3292 = vmatprep.subr.mxu0 0.0
          %3293 = vmatpush1.msra.mxu0 0.0
          %3294 = vmatprep.subr.mxu0 0.0
          %3295 = vmatpush1.msra.mxu0 0.0
          %3296 = vmatprep.subr.mxu0 0.0
          %3297 = vmatpush1.msra.mxu0 0.0
          %3298 = vmatprep.subr.mxu0 0.0
          %3299 = vmatpush1.msra.mxu0 0.0
          %3300 = vmatprep.subr.mxu0 0.0
          %3301 = vmatpush1.msra.mxu0 0.0
          %3302 = vmatprep.subr.mxu0 0.0
          %3303 = vmatpush1.msra.mxu0 0.0
          %3304 = vmatprep.subr.mxu0 0.0
          %3305 = vmatpush1.msra.mxu0 0.0
          %3306 = vmatprep.subr.mxu0 0.0
          %3307 = vmatpush1.msra.mxu0 0.0
          %3308 = vmatprep.subr.mxu0 0.0
          %3309 = vmatpush1.msra.mxu0 0.0
          %3310 = vmatprep.subr.mxu0 0.0
          %3311 = vmatpush1.msra.mxu0 0.0
          %3312 = vmatprep.subr.mxu0 0.0
          %3313 = vmatpush1.msra.mxu0 0.0
          %3314 = vmatprep.subr.mxu0 0.0
          %3315 = vmatpush1.msra.mxu0 0.0
          %3316 = vmatprep.subr.mxu0 0.0
          %3317 = vmatpush1.msra.mxu0 0.0
          %3318 = vmatprep.subr.mxu0 0.0
          %3319 = vmatpush1.msra.mxu0 0.0
          %3320 = vmatprep.subr.mxu0 0.0
          %3321 = vmatpush1.msra.mxu0 0.0
          %3322 = vmatprep.subr.mxu0 0.0
          %3323 = vmatpush1.msra.mxu0 0.0
          %3324 = vmatprep.subr.mxu0 0.0
          %3325 = vmatpush1.msra.mxu0 0.0
          %3326 = vmatprep.subr.mxu0 0.0
          %3327 = vmatpush1.msra.mxu0 0.0
          %3328 = vmatprep.subr.mxu0 0.0
          %3329 = vmatpush1.msra.mxu0 0.0
          %3330 = vmatprep.subr.mxu0 0.0
          %3331 = vmatpush1.msra.mxu0 0.0
          %3332 = vmatprep.subr.mxu0 0.0
          %3333 = vmatpush1.msra.mxu0 0.0
          %3334 = vmatprep.subr.mxu0 0.0
          %3335 = vmatpush1.msra.mxu0 0.0
          %3336 = vmatprep.subr.mxu0 0.0
          %3337 = vmatpush1.msra.mxu0 0.0
          %3338 = vmatprep.subr.mxu0 0.0
          %3339 = vmatpush1.msra.mxu0 0.0
          %3340 = vmatprep.subr.mxu0 0.0
          %3341 = vmatpush1.msra.mxu0 0.0
          %3342 = vmatprep.subr.mxu0 0.0
          %3343 = vmatpush1.msra.mxu0 0.0
          %3344 = vmatprep.subr.mxu0 0.0
          %3345 = vmatpush1.msra.mxu0 0.0
          %3346 = vmatprep.subr.mxu0 0.0
          %3347 = vmatpush1.msra.mxu0 0.0
          %3348 = vmatprep.mubr.f32.mxu0 0.0
          %3349 = vmatmul.mubr.f32.gmra.mrb[0].mxu0 %v3282
          %v3350 = vpop.f32.mrb[0].mxu0
          %v3351 = vadd.f32 0.0, %v3350
          %v3352 = vpop.f32.mrb[0].mxu0
          %3353 = vdwg.mxu0
          %v3355 = vsel %vm2827, %v2914, 0
          %3357 = vmatprep.subr.mxu0 0.0
          %3358 = vmatpush1.msra.mxu0 %v2216
          %3359 = vmatprep.subr.mxu0 0.0
          %3360 = vmatpush1.msra.mxu0 0.0
          %3361 = vmatprep.subr.mxu0 0.0
          %3362 = vmatpush1.msra.mxu0 0.0
          %3363 = vmatprep.subr.mxu0 0.0
          %3364 = vmatpush1.msra.mxu0 0.0
          %3365 = vmatprep.subr.mxu0 0.0
          %3366 = vmatpush1.msra.mxu0 0.0
          %3367 = vmatprep.subr.mxu0 0.0
          %3368 = vmatpush1.msra.mxu0 0.0
          %3369 = vmatprep.subr.mxu0 0.0
          %3370 = vmatpush1.msra.mxu0 0.0
          %3371 = vmatprep.subr.mxu0 0.0
          %3372 = vmatpush1.msra.mxu0 0.0
          %3373 = vmatprep.subr.mxu0 0.0
          %3374 = vmatpush1.msra.mxu0 0.0
          %3375 = vmatprep.subr.mxu0 0.0
          %3376 = vmatpush1.msra.mxu0 0.0
          %3377 = vmatprep.subr.mxu0 0.0
          %3378 = vmatpush1.msra.mxu0 0.0
          %3379 = vmatprep.subr.mxu0 0.0
          %3380 = vmatpush1.msra.mxu0 0.0
          %3381 = vmatprep.subr.mxu0 0.0
          %3382 = vmatpush1.msra.mxu0 0.0
          %3383 = vmatprep.subr.mxu0 0.0
          %3384 = vmatpush1.msra.mxu0 0.0
          %3385 = vmatprep.subr.mxu0 0.0
          %3386 = vmatpush1.msra.mxu0 0.0
          %3387 = vmatprep.subr.mxu0 0.0
          %3388 = vmatpush1.msra.mxu0 0.0
          %3389 = vmatprep.subr.mxu0 0.0
          %3390 = vmatpush1.msra.mxu0 0.0
          %3391 = vmatprep.subr.mxu0 0.0
          %3392 = vmatpush1.msra.mxu0 0.0
          %3393 = vmatprep.subr.mxu0 0.0
          %3394 = vmatpush1.msra.mxu0 0.0
          %3395 = vmatprep.subr.mxu0 0.0
          %3396 = vmatpush1.msra.mxu0 0.0
          %3397 = vmatprep.subr.mxu0 0.0
          %3398 = vmatpush1.msra.mxu0 0.0
          %3399 = vmatprep.subr.mxu0 0.0
          %3400 = vmatpush1.msra.mxu0 0.0
          %3401 = vmatprep.subr.mxu0 0.0
          %3402 = vmatpush1.msra.mxu0 0.0
          %3403 = vmatprep.subr.mxu0 0.0
          %3404 = vmatpush1.msra.mxu0 0.0
          %3405 = vmatprep.subr.mxu0 0.0
          %3406 = vmatpush1.msra.mxu0 0.0
          %3407 = vmatprep.subr.mxu0 0.0
          %3408 = vmatpush1.msra.mxu0 0.0
          %3409 = vmatprep.subr.mxu0 0.0
          %3410 = vmatpush1.msra.mxu0 0.0
          %3411 = vmatprep.subr.mxu0 0.0
          %3412 = vmatpush1.msra.mxu0 0.0
          %3413 = vmatprep.subr.mxu0 0.0
          %3414 = vmatpush1.msra.mxu0 0.0
          %3415 = vmatprep.subr.mxu0 0.0
          %3416 = vmatpush1.msra.mxu0 0.0
          %3417 = vmatprep.subr.mxu0 0.0
          %3418 = vmatpush1.msra.mxu0 0.0
          %3419 = vmatprep.subr.mxu0 0.0
          %3420 = vmatpush1.msra.mxu0 0.0
          %3421 = vmatprep.mubr.f32.mxu0 0.0
          %3422 = vmatmul.mubr.f32.gmra.mrb[0].mxu0 %v3355
          %v3423 = vpop.f32.mrb[0].mxu0
          %v3424 = vadd.f32 0.0, %v3423
          %v3425 = vpop.f32.mrb[0].mxu0
          %3426 = vdwg.mxu0
          %v3428 = vsel %vm2827, %v2915, 0
          %3430 = vmatprep.subr.mxu0 0.0
          %3431 = vmatpush1.msra.mxu0 %v2217
          %3432 = vmatprep.subr.mxu0 0.0
          %3433 = vmatpush1.msra.mxu0 0.0
          %3434 = vmatprep.subr.mxu0 0.0
          %3435 = vmatpush1.msra.mxu0 0.0
          %3436 = vmatprep.subr.mxu0 0.0
          %3437 = vmatpush1.msra.mxu0 0.0
          %3438 = vmatprep.subr.mxu0 0.0
          %3439 = vmatpush1.msra.mxu0 0.0
          %3440 = vmatprep.subr.mxu0 0.0
          %3441 = vmatpush1.msra.mxu0 0.0
          %3442 = vmatprep.subr.mxu0 0.0
          %3443 = vmatpush1.msra.mxu0 0.0
          %3444 = vmatprep.subr.mxu0 0.0
          %3445 = vmatpush1.msra.mxu0 0.0
          %3446 = vmatprep.subr.mxu0 0.0
          %3447 = vmatpush1.msra.mxu0 0.0
          %3448 = vmatprep.subr.mxu0 0.0
          %3449 = vmatpush1.msra.mxu0 0.0
          %3450 = vmatprep.subr.mxu0 0.0
          %3451 = vmatpush1.msra.mxu0 0.0
          %3452 = vmatprep.subr.mxu0 0.0
          %3453 = vmatpush1.msra.mxu0 0.0
          %3454 = vmatprep.subr.mxu0 0.0
          %3455 = vmatpush1.msra.mxu0 0.0
          %3456 = vmatprep.subr.mxu0 0.0
          %3457 = vmatpush1.msra.mxu0 0.0
          %3458 = vmatprep.subr.mxu0 0.0
          %3459 = vmatpush1.msra.mxu0 0.0
          %3460 = vmatprep.subr.mxu0 0.0
          %3461 = vmatpush1.msra.mxu0 0.0
          %3462 = vmatprep.subr.mxu0 0.0
          %3463 = vmatpush1.msra.mxu0 0.0
          %3464 = vmatprep.subr.mxu0 0.0
          %3465 = vmatpush1.msra.mxu0 0.0
          %3466 = vmatprep.subr.mxu0 0.0
          %3467 = vmatpush1.msra.mxu0 0.0
          %3468 = vmatprep.subr.mxu0 0.0
          %3469 = vmatpush1.msra.mxu0 0.0
          %3470 = vmatprep.subr.mxu0 0.0
          %3471 = vmatpush1.msra.mxu0 0.0
          %3472 = vmatprep.subr.mxu0 0.0
          %3473 = vmatpush1.msra.mxu0 0.0
          %3474 = vmatprep.subr.mxu0 0.0
          %3475 = vmatpush1.msra.mxu0 0.0
          %3476 = vmatprep.subr.mxu0 0.0
          %3477 = vmatpush1.msra.mxu0 0.0
          %3478 = vmatprep.subr.mxu0 0.0
          %3479 = vmatpush1.msra.mxu0 0.0
          %3480 = vmatprep.subr.mxu0 0.0
          %3481 = vmatpush1.msra.mxu0 0.0
          %3482 = vmatprep.subr.mxu0 0.0
          %3483 = vmatpush1.msra.mxu0 0.0
          %3484 = vmatprep.subr.mxu0 0.0
          %3485 = vmatpush1.msra.mxu0 0.0
          %3486 = vmatprep.subr.mxu0 0.0
          %3487 = vmatpush1.msra.mxu0 0.0
          %3488 = vmatprep.subr.mxu0 0.0
          %3489 = vmatpush1.msra.mxu0 0.0
          %3490 = vmatprep.subr.mxu0 0.0
          %3491 = vmatpush1.msra.mxu0 0.0
          %3492 = vmatprep.subr.mxu0 0.0
          %3493 = vmatpush1.msra.mxu0 0.0
          %3494 = vmatprep.mubr.f32.mxu0 0.0
          %3495 = vmatmul.mubr.f32.gmra.mrb[0].mxu0 %v3428
          %v3496 = vpop.f32.mrb[0].mxu0
          %v3497 = vadd.f32 0.0, %v3496
          %v3498 = vpop.f32.mrb[0].mxu0
          %3499 = vdwg.mxu0
          %v3500 = vcombine.low %v2986, %v3132
          %v3501 = vcombine.high %v2986, %v3132
          %v3503 = vunpack.c.l.s4 1983009808
          %v3504 = vunpack.c.0.s8 %v3503
          %v3505 = vlaneseq
          %v3506 = vshrl.u32 %v3505, 7
          %v3507 = vsub.s32 %v3504, %v3506
          %v3508 = vrot.slane %v3500, %v3507
          %v3510 = vunpack.c.l.s4 1983009808
          %v3511 = vunpack.c.0.s8 %v3510
          %v3512 = vlaneseq
          %v3513 = vshrl.u32 %v3512, 7
          %v3514 = vsub.s32 %v3511, %v3513
          %v3515 = vrot.slane %v3501, %v3514
          %v3516 = vcombine.low %v3059, %v3205
          %v3517 = vcombine.high %v3059, %v3205
          %v3519 = vunpack.c.l.s4 1983009808
          %v3520 = vunpack.c.0.s8 %v3519
          %v3521 = vlaneseq
          %v3522 = vshrl.u32 %v3521, 7
          %v3523 = vsub.s32 %v3520, %v3522
          %v3524 = vrot.slane %v3516, %v3523
          %v3526 = vunpack.c.l.s4 1983009808
          %v3527 = vunpack.c.0.s8 %v3526
          %v3528 = vlaneseq
          %v3529 = vshrl.u32 %v3528, 7
          %v3530 = vsub.s32 %v3527, %v3529
          %v3531 = vrot.slane %v3517, %v3530
          %v3532 = vcombine.low %v3278, %v3424
          %v3533 = vcombine.high %v3278, %v3424
          %v3535 = vunpack.c.l.s4 1983009808
          %v3536 = vunpack.c.0.s8 %v3535
          %v3537 = vlaneseq
          %v3538 = vshrl.u32 %v3537, 7
          %v3539 = vsub.s32 %v3536, %v3538
          %v3540 = vrot.slane %v3532, %v3539
          %v3542 = vunpack.c.l.s4 1983009808
          %v3543 = vunpack.c.0.s8 %v3542
          %v3544 = vlaneseq
          %v3545 = vshrl.u32 %v3544, 7
          %v3546 = vsub.s32 %v3543, %v3545
          %v3547 = vrot.slane %v3533, %v3546
          %v3548 = vcombine.low %v3351, %v3497
          %v3549 = vcombine.high %v3351, %v3497
          %v3551 = vunpack.c.l.s4 1983009808
          %v3552 = vunpack.c.0.s8 %v3551
          %v3553 = vlaneseq
          %v3554 = vshrl.u32 %v3553, 7
          %v3555 = vsub.s32 %v3552, %v3554
          %v3556 = vrot.slane %v3548, %v3555
          %v3558 = vunpack.c.l.s4 1983009808
          %v3559 = vunpack.c.0.s8 %v3558
          %v3560 = vlaneseq
          %v3561 = vshrl.u32 %v3560, 7
          %v3562 = vsub.s32 %v3559, %v3561
          %v3563 = vrot.slane %v3549, %v3562
          %v3564 = vcombine.low %v3508, %v3524
          %v3565 = vcombine.high %v3508, %v3524
          %v3567 = vunpack.c.l.s4 1934713408
          %v3568 = vunpack.c.0.s8 %v3567
          %v3569 = vlaneseq
          %v3570 = vshrl.u32 %v3569, 7
          %v3571 = vsub.s32 %v3568, %v3570
          %v3572 = vrot.slane %v3564, %v3571
          %v3574 = vunpack.c.l.s4 1934713408
          %v3575 = vunpack.c.0.s8 %v3574
          %v3576 = vlaneseq
          %v3577 = vshrl.u32 %v3576, 7
          %v3578 = vsub.s32 %v3575, %v3577
          %v3579 = vrot.slane %v3565, %v3578
          %v3580 = vcombine.low %v3515, %v3531
          %v3581 = vcombine.high %v3515, %v3531
          %v3583 = vunpack.c.l.s4 1934713408
          %v3584 = vunpack.c.0.s8 %v3583
          %v3585 = vlaneseq
          %v3586 = vshrl.u32 %v3585, 7
          %v3587 = vsub.s32 %v3584, %v3586
          %v3588 = vrot.slane %v3580, %v3587
          %v3590 = vunpack.c.l.s4 1934713408
          %v3591 = vunpack.c.0.s8 %v3590
          %v3592 = vlaneseq
          %v3593 = vshrl.u32 %v3592, 7
          %v3594 = vsub.s32 %v3591, %v3593
          %v3595 = vrot.slane %v3581, %v3594
          %v3596 = vcombine.low %v3540, %v3556
          %v3597 = vcombine.high %v3540, %v3556
          %v3599 = vunpack.c.l.s4 1934713408
          %v3600 = vunpack.c.0.s8 %v3599
          %v3601 = vlaneseq
          %v3602 = vshrl.u32 %v3601, 7
          %v3603 = vsub.s32 %v3600, %v3602
          %v3604 = vrot.slane %v3596, %v3603
          %v3606 = vunpack.c.l.s4 1934713408
          %v3607 = vunpack.c.0.s8 %v3606
          %v3608 = vlaneseq
          %v3609 = vshrl.u32 %v3608, 7
          %v3610 = vsub.s32 %v3607, %v3609
          %v3611 = vrot.slane %v3597, %v3610
          %v3612 = vcombine.low %v3547, %v3563
          %v3613 = vcombine.high %v3547, %v3563
          %v3615 = vunpack.c.l.s4 1934713408
          %v3616 = vunpack.c.0.s8 %v3615
          %v3617 = vlaneseq
          %v3618 = vshrl.u32 %v3617, 7
          %v3619 = vsub.s32 %v3616, %v3618
          %v3620 = vrot.slane %v3612, %v3619
          %v3622 = vunpack.c.l.s4 1934713408
          %v3623 = vunpack.c.0.s8 %v3622
          %v3624 = vlaneseq
          %v3625 = vshrl.u32 %v3624, 7
          %v3626 = vsub.s32 %v3623, %v3625
          %v3627 = vrot.slane %v3613, %v3626
          %v3628 = vcombine.low %v3572, %v3604
          %v3629 = vcombine.high %v3572, %v3604
          %v3630 = vcombine.low %v3579, %v3611
          %v3631 = vcombine.high %v3579, %v3611
          %v3632 = vcombine.low %v3588, %v3620
          %v3633 = vcombine.high %v3588, %v3620
          %v3634 = vcombine.low %v3595, %v3627
          %v3635 = vcombine.high %v3595, %v3627
          %v3636 = vcombine.low %v3628, %v3630
          %v3637 = vcombine.high %v3628, %v3630
          %v3639 = vunpack.c.l.s4 1983009808
          %v3640 = vunpack.c.0.s8 %v3639
          %v3641 = vlaneseq
          %v3642 = vshrl.u32 %v3641, 7
          %v3643 = vsub.s32 %v3640, %v3642
          %v3644 = vrot.slane %v3636, %v3643
          %v3646 = vunpack.c.l.s4 1983009808
          %v3647 = vunpack.c.0.s8 %v3646
          %v3648 = vlaneseq
          %v3649 = vshrl.u32 %v3648, 7
          %v3650 = vsub.s32 %v3647, %v3649
          %v3651 = vrot.slane %v3637, %v3650
          %v3652 = vcombine.low %v3629, %v3631
          %v3653 = vcombine.high %v3629, %v3631
          %v3655 = vunpack.c.l.s4 1983009808
          %v3656 = vunpack.c.0.s8 %v3655
          %v3657 = vlaneseq
          %v3658 = vshrl.u32 %v3657, 7
          %v3659 = vsub.s32 %v3656, %v3658
          %v3660 = vrot.slane %v3652, %v3659
          %v3662 = vunpack.c.l.s4 1983009808
          %v3663 = vunpack.c.0.s8 %v3662
          %v3664 = vlaneseq
          %v3665 = vshrl.u32 %v3664, 7
          %v3666 = vsub.s32 %v3663, %v3665
          %v3667 = vrot.slane %v3653, %v3666
          %v3668 = vcombine.low %v3632, %v3634
          %v3669 = vcombine.high %v3632, %v3634
          %v3671 = vunpack.c.l.s4 1983009808
          %v3672 = vunpack.c.0.s8 %v3671
          %v3673 = vlaneseq
          %v3674 = vshrl.u32 %v3673, 7
          %v3675 = vsub.s32 %v3672, %v3674
          %v3676 = vrot.slane %v3668, %v3675
          %v3678 = vunpack.c.l.s4 1983009808
          %v3679 = vunpack.c.0.s8 %v3678
          %v3680 = vlaneseq
          %v3681 = vshrl.u32 %v3680, 7
          %v3682 = vsub.s32 %v3679, %v3681
          %v3683 = vrot.slane %v3669, %v3682
          %v3684 = vcombine.low %v3633, %v3635
          %v3685 = vcombine.high %v3633, %v3635
          %v3687 = vunpack.c.l.s4 1983009808
          %v3688 = vunpack.c.0.s8 %v3687
          %v3689 = vlaneseq
          %v3690 = vshrl.u32 %v3689, 7
          %v3691 = vsub.s32 %v3688, %v3690
          %v3692 = vrot.slane %v3684, %v3691
          %v3694 = vunpack.c.l.s4 1983009808
          %v3695 = vunpack.c.0.s8 %v3694
          %v3696 = vlaneseq
          %v3697 = vshrl.u32 %v3696, 7
          %v3698 = vsub.s32 %v3695, %v3697
          %v3699 = vrot.slane %v3685, %v3698
          %v3700 = vcombine.low %v3644, %v3660
          %v3701 = vcombine.high %v3644, %v3660
          %v3703 = vunpack.c.l.s4 1934713408
          %v3704 = vunpack.c.0.s8 %v3703
          %v3705 = vlaneseq
          %v3706 = vshrl.u32 %v3705, 7
          %v3707 = vsub.s32 %v3704, %v3706
          %v3708 = vrot.slane %v3700, %v3707
          %v3710 = vunpack.c.l.s4 1934713408
          %v3711 = vunpack.c.0.s8 %v3710
          %v3712 = vlaneseq
          %v3713 = vshrl.u32 %v3712, 7
          %v3714 = vsub.s32 %v3711, %v3713
          %v3715 = vrot.slane %v3701, %v3714
          %v3716 = vcombine.low %v3651, %v3667
          %v3717 = vcombine.high %v3651, %v3667
          %v3719 = vunpack.c.l.s4 1934713408
          %v3720 = vunpack.c.0.s8 %v3719
          %v3721 = vlaneseq
          %v3722 = vshrl.u32 %v3721, 7
          %v3723 = vsub.s32 %v3720, %v3722
          %v3724 = vrot.slane %v3716, %v3723
          %v3726 = vunpack.c.l.s4 1934713408
          %v3727 = vunpack.c.0.s8 %v3726
          %v3728 = vlaneseq
          %v3729 = vshrl.u32 %v3728, 7
          %v3730 = vsub.s32 %v3727, %v3729
          %v3731 = vrot.slane %v3717, %v3730
          %v3732 = vcombine.low %v3676, %v3692
          %v3733 = vcombine.high %v3676, %v3692
          %v3735 = vunpack.c.l.s4 1934713408
          %v3736 = vunpack.c.0.s8 %v3735
          %v3737 = vlaneseq
          %v3738 = vshrl.u32 %v3737, 7
          %v3739 = vsub.s32 %v3736, %v3738
          %v3740 = vrot.slane %v3732, %v3739
          %v3742 = vunpack.c.l.s4 1934713408
          %v3743 = vunpack.c.0.s8 %v3742
          %v3744 = vlaneseq
          %v3745 = vshrl.u32 %v3744, 7
          %v3746 = vsub.s32 %v3743, %v3745
          %v3747 = vrot.slane %v3733, %v3746
          %v3748 = vcombine.low %v3683, %v3699
          %v3749 = vcombine.high %v3683, %v3699
          %v3751 = vunpack.c.l.s4 1934713408
          %v3752 = vunpack.c.0.s8 %v3751
          %v3753 = vlaneseq
          %v3754 = vshrl.u32 %v3753, 7
          %v3755 = vsub.s32 %v3752, %v3754
          %v3756 = vrot.slane %v3748, %v3755
          %v3758 = vunpack.c.l.s4 1934713408
          %v3759 = vunpack.c.0.s8 %v3758
          %v3760 = vlaneseq
          %v3761 = vshrl.u32 %v3760, 7
          %v3762 = vsub.s32 %v3759, %v3761
          %v3763 = vrot.slane %v3749, %v3762
          %v3764 = vcombine.low %v3708, %v3740
          %v3765 = vcombine.high %v3708, %v3740
          %v3766 = vcombine.low %v3715, %v3747
          %v3767 = vcombine.high %v3715, %v3747
          %v3768 = vcombine.low %v3724, %v3756
          %v3769 = vcombine.high %v3724, %v3756
          %v3770 = vcombine.low %v3731, %v3763
          %v3771 = vcombine.high %v3731, %v3763
          %3773 = vrot.lane.b32.xlu0 %v3765, 16
          %v3774 = vpop.permute.xlu0 %3773
          %3777 = vrot.lane.b32.xlu0 %v3766, 32
          %v3778 = vpop.permute.xlu0 %3777
          %3781 = vrot.lane.b32.xlu0 %v3767, 48
          %v3782 = vpop.permute.xlu0 %3781
          %3785 = vrot.lane.b32.xlu0 %v3768, 64
          %v3786 = vpop.permute.xlu0 %3785
          %3789 = vrot.lane.b32.xlu0 %v3769, 80
          %v3790 = vpop.permute.xlu0 %3789
          %3793 = vrot.lane.b32.xlu0 %v3770, 96
          %v3794 = vpop.permute.xlu0 %3793
          %3797 = vrot.lane.b32.xlu0 %v3771, 112
          %v3798 = vpop.permute.xlu0 %3797
          %v3800 = vsel %vm2218, %v3764, %v3774
          %vm3801 = vcmask 261120
          %v3802 = vsel %vm3801, %v3800, %v3778
          %vm3803 = vcmask 392192
          %v3804 = vsel %vm3803, %v3802, %v3782
          %vm3805 = vcmask 523264
          %v3806 = vsel %vm3805, %v3804, %v3786
          %vm3807 = vcmask 654336
          %v3808 = vsel %vm3807, %v3806, %v3790
          %vm3809 = vcmask 785408
          %v3810 = vsel %vm3809, %v3808, %v3794
          %vm3811 = vcmask 916480
          %v3812 = vsel %vm3811, %v3810, %v3798
          %v3813 = vpack.c.bf16 %v3812, %v3812
          %v3814 = vld [vmem:[%s825] sm:$0xf]
          %v3815 = vld [vmem:[%s825 + $0x4] sm:$0xf]
          %v3816 = vld [vmem:[%s825 + $0x8] sm:$0xf]
          %v3817 = vld [vmem:[%s825 + $0xc] sm:$0xf]
          %v3818 = vld [vmem:[%s825 + $0x10] sm:$0xf]
          %v3819 = vld [vmem:[%s825 + $0x14] sm:$0xf]
          %v3820 = vld [vmem:[%s825 + $0x18] sm:$0xf]
          %v3821 = vld [vmem:[%s825 + $0x1c] sm:$0xf]
          %v3822 = vld [vmem:[%s825 + $0x20] sm:$0xf]
          %v3823 = vld [vmem:[%s825 + $0x24] sm:$0xf]
          %v3824 = vld [vmem:[%s825 + $0x28] sm:$0xf]
          %v3825 = vld [vmem:[%s825 + $0x2c] sm:$0xf]
          %v3826 = vld [vmem:[%s825 + $0x30] sm:$0xf]
          %v3827 = vld [vmem:[%s825 + $0x34] sm:$0xf]
          %v3828 = vld [vmem:[%s825 + $0x38] sm:$0xf]
          %v3829 = vld [vmem:[%s825 + $0x3c] sm:$0xf]
          %v3830 = vld [vmem:[%s833] sm:$0x1]
          %v3832 = vlaneseq
          %v3833 = vshrl.u32 %v3832, 7
          %v3834 = vsub.s32 0, %v3833
          %v3835 = vrot.slane %v3830, %v3834
          %v3853 = vunpack.c.l.b16 %v3814
          %v3854 = vunpack.c.l.b16 %v3815
          %v3855 = vunpack.c.l.b16 %v3816
          %v3856 = vunpack.c.l.b16 %v3817
          %v3857 = vunpack.c.l.b16 %v3818
          %v3858 = vunpack.c.l.b16 %v3819
          %v3859 = vunpack.c.l.b16 %v3820
          %v3860 = vunpack.c.l.b16 %v3821
          %v3861 = vunpack.c.l.b16 %v3822
          %v3862 = vunpack.c.l.b16 %v3823
          %v3863 = vunpack.c.l.b16 %v3824
          %v3864 = vunpack.c.l.b16 %v3825
          %v3865 = vunpack.c.l.b16 %v3826
          %v3866 = vunpack.c.l.b16 %v3827
          %v3867 = vunpack.c.l.b16 %v3828
          %v3868 = vunpack.c.l.b16 %v3829
          %v3869 = vpack.c.b16 %v3854, %v3853
          %v3870 = vpack.c.b16 %v3856, %v3855
          %v3871 = vpack.c.b16 %v3858, %v3857
          %v3872 = vpack.c.b16 %v3860, %v3859
          %v3873 = vpack.c.b16 %v3862, %v3861
          %v3874 = vpack.c.b16 %v3864, %v3863
          %v3875 = vpack.c.b16 %v3866, %v3865
          %v3876 = vpack.c.b16 %v3868, %v3867
          %3885 = vmatprep.subr.bf16.mxu0 0
          %3886 = vmatpush1.bf16.msra.mxu0 %v3869
          %3887 = vmatprep.subr.bf16.mxu0 0
          %3888 = vmatpush1.bf16.msra.mxu0 %v3870
          %3889 = vmatprep.subr.bf16.mxu0 0
          %3890 = vmatpush1.bf16.msra.mxu0 %v3871
          %3891 = vmatprep.subr.bf16.mxu0 0
          %3892 = vmatpush1.bf16.msra.mxu0 %v3872
          %3893 = vmatprep.subr.bf16.mxu0 0
          %3894 = vmatpush1.bf16.msra.mxu0 %v3873
          %3895 = vmatprep.subr.bf16.mxu0 0
          %3896 = vmatpush1.bf16.msra.mxu0 %v3874
          %3897 = vmatprep.subr.bf16.mxu0 0
          %3898 = vmatpush1.bf16.msra.mxu0 %v3875
          %3899 = vmatprep.subr.bf16.mxu0 0
          %3900 = vmatpush1.bf16.msra.mxu0 %v3876
          %3901 = vmatprep.subr.bf16.mxu0 0
          %3902 = vmatpush1.bf16.msra.mxu0 0
          %3903 = vmatprep.subr.bf16.mxu0 0
          %3904 = vmatpush1.bf16.msra.mxu0 0
          %3905 = vmatprep.subr.bf16.mxu0 0
          %3906 = vmatpush1.bf16.msra.mxu0 0
          %3907 = vmatprep.subr.bf16.mxu0 0
          %3908 = vmatpush1.bf16.msra.mxu0 0
          %3909 = vmatprep.subr.bf16.mxu0 0
          %3910 = vmatpush1.bf16.msra.mxu0 0
          %3911 = vmatprep.subr.bf16.mxu0 0
          %3912 = vmatpush1.bf16.msra.mxu0 0
          %3913 = vmatprep.subr.bf16.mxu0 0
          %3914 = vmatpush1.bf16.msra.mxu0 0
          %3915 = vmatprep.subr.bf16.mxu0 0
          %3916 = vmatpush1.bf16.msra.mxu0 0
          %3917 = vmatprep.mubr.bf16.mxu0 0
          %3918 = vmatmul.mubr.bf16.gmra.mrb[0].mxu0 %v3813
          %v3919 = vpop.f32.mrb[0].mxu0
          %v3920 = vadd.f32 %v3835, %v3919
          %v3921 = vpop.f32.mrb[0].mxu0
          %v3922 = vpop.f32.mrb[0].mxu0
          %v3923 = vpop.f32.mrb[0].mxu0
          %3924 = vdwg.mxu0
          %v3925 = vadd.f32 %v1076, %v3920
          %v3926 = vld [vmem:[%s1010] sm:$0x1]
          %v3927 = vld [vmem:[%s841] sm:$0x1]
          %3928 = vadd.xlane.f32.xlu0 %v3925
          %v3929 = vpop.xlane.xlu0 %3928
          %v3930 = vrcp.pop 128.0
          %v3931 = vmul.f32 %v3929, %v3930
          %v3932 = vsub.f32 %v3925, %v3931
          %v3933 = vmul.f32 %v3932, %v3932
          %3934 = vadd.xlane.f32.xlu0 %v3933
          %v3935 = vpop.xlane.xlu0 %3934
          %v3936 = vmul.f32 %v3935, %v3930
          %v3937 = vadd.f32 %v3936, 1e-05
          %v3938 = vrsqrt.pop %v3937
          %v3939 = vmul.f32 %v3932, %v3938
          %v3941 = vlaneseq
          %v3942 = vshrl.u32 %v3941, 7
          %v3943 = vsub.s32 0, %v3942
          %v3944 = vrot.slane %v3926, %v3943
          %v3946 = vmul.f32 %v3939, %v3944
          %v3948 = vlaneseq
          %v3949 = vshrl.u32 %v3948, 7
          %v3950 = vsub.s32 0, %v3949
          %v3951 = vrot.slane %v3927, %v3950
          %v3953 = vadd.f32 %v3946, %v3951
          %v3954 = vpack.c.bf16 %v3953, %v3953
          %v3955 = vld [vmem:[%s850] sm:$0xff]
          %v3956 = vld [vmem:[%s850 + $0x8] sm:$0xff]
          %v3957 = vld [vmem:[%s850 + $0x10] sm:$0xff]
          %v3958 = vld [vmem:[%s850 + $0x18] sm:$0xff]
          %v3959 = vld [vmem:[%s850 + $0x20] sm:$0xff]
          %v3960 = vld [vmem:[%s850 + $0x28] sm:$0xff]
          %v3961 = vld [vmem:[%s850 + $0x30] sm:$0xff]
          %v3962 = vld [vmem:[%s850 + $0x38] sm:$0xff]
          %v3963 = vld [vmem:[%s850 + $0x40] sm:$0xff]
          %v3964 = vld [vmem:[%s850 + $0x48] sm:$0xff]
          %v3965 = vld [vmem:[%s850 + $0x50] sm:$0xff]
          %v3966 = vld [vmem:[%s850 + $0x58] sm:$0xff]
          %v3967 = vld [vmem:[%s850 + $0x60] sm:$0xff]
          %v3968 = vld [vmem:[%s850 + $0x68] sm:$0xff]
          %v3969 = vld [vmem:[%s850 + $0x70] sm:$0xff]
          %v3970 = vld [vmem:[%s850 + $0x78] sm:$0xff]
          %v3971 = vld [vmem:[%s850 + $0x80] sm:$0xff]
          %v3972 = vld [vmem:[%s850 + $0x88] sm:$0xff]
          %v3973 = vld [vmem:[%s850 + $0x90] sm:$0xff]
          %v3974 = vld [vmem:[%s850 + $0x98] sm:$0xff]
          %v3975 = vld [vmem:[%s850 + $0xa0] sm:$0xff]
          %v3976 = vld [vmem:[%s850 + $0xa8] sm:$0xff]
          %v3977 = vld [vmem:[%s850 + $0xb0] sm:$0xff]
          %v3978 = vld [vmem:[%s850 + $0xb8] sm:$0xff]
          %v3979 = vld [vmem:[%s850 + $0xc0] sm:$0xff]
          %v3980 = vld [vmem:[%s850 + $0xc8] sm:$0xff]
          %v3981 = vld [vmem:[%s850 + $0xd0] sm:$0xff]
          %v3982 = vld [vmem:[%s850 + $0xd8] sm:$0xff]
          %v3983 = vld [vmem:[%s850 + $0xe0] sm:$0xff]
          %v3984 = vld [vmem:[%s850 + $0xe8] sm:$0xff]
          %v3985 = vld [vmem:[%s850 + $0xf0] sm:$0xff]
          %v3986 = vld [vmem:[%s850 + $0xf8] sm:$0xff]
          %v3987 = vld [vmem:[%s1022] sm:$0xf]
          %v3989 = vlaneseq
          %v3990 = vshrl.u32 %v3989, 7
          %v3991 = vsub.s32 0, %v3990
          %v3992 = vrot.slane %v3987, %v3991
          %v3993 = vlaneseq
          %v3994 = vshrl.u32 %v3993, 7
          %v3995 = vsub.s32 1, %v3994
          %v3996 = vrot.slane %v3987, %v3995
          %v3997 = vlaneseq
          %v3998 = vshrl.u32 %v3997, 7
          %v3999 = vsub.s32 2, %v3998
          %v4000 = vrot.slane %v3987, %v3999
          %v4001 = vlaneseq
          %v4002 = vshrl.u32 %v4001, 7
          %v4003 = vsub.s32 3, %v4002
          %v4004 = vrot.slane %v3987, %v4003
          %v4041 = vunpack.c.l.b16 %v3955
          %v4042 = vunpack.c.h.b16 %v3955
          %v4043 = vunpack.c.l.b16 %v3956
          %v4044 = vunpack.c.h.b16 %v3956
          %v4045 = vunpack.c.l.b16 %v3957
          %v4046 = vunpack.c.h.b16 %v3957
          %v4047 = vunpack.c.l.b16 %v3958
          %v4048 = vunpack.c.h.b16 %v3958
          %v4049 = vunpack.c.l.b16 %v3959
          %v4050 = vunpack.c.h.b16 %v3959
          %v4051 = vunpack.c.l.b16 %v3960
          %v4052 = vunpack.c.h.b16 %v3960
          %v4053 = vunpack.c.l.b16 %v3961
          %v4054 = vunpack.c.h.b16 %v3961
          %v4055 = vunpack.c.l.b16 %v3962
          %v4056 = vunpack.c.h.b16 %v3962
          %v4057 = vunpack.c.l.b16 %v3963
          %v4058 = vunpack.c.h.b16 %v3963
          %v4059 = vunpack.c.l.b16 %v3964
          %v4060 = vunpack.c.h.b16 %v3964
          %v4061 = vunpack.c.l.b16 %v3965
          %v4062 = vunpack.c.h.b16 %v3965
          %v4063 = vunpack.c.l.b16 %v3966
          %v4064 = vunpack.c.h.b16 %v3966
          %v4065 = vunpack.c.l.b16 %v3967
          %v4066 = vunpack.c.h.b16 %v3967
          %v4067 = vunpack.c.l.b16 %v3968
          %v4068 = vunpack.c.h.b16 %v3968
          %v4069 = vunpack.c.l.b16 %v3969
          %v4070 = vunpack.c.h.b16 %v3969
          %v4071 = vunpack.c.l.b16 %v3970
          %v4072 = vunpack.c.h.b16 %v3970
          %v4073 = vunpack.c.l.b16 %v3971
          %v4074 = vunpack.c.h.b16 %v3971
          %v4075 = vunpack.c.l.b16 %v3972
          %v4076 = vunpack.c.h.b16 %v3972
          %v4077 = vunpack.c.l.b16 %v3973
          %v4078 = vunpack.c.h.b16 %v3973
          %v4079 = vunpack.c.l.b16 %v3974
          %v4080 = vunpack.c.h.b16 %v3974
          %v4081 = vunpack.c.l.b16 %v3975
          %v4082 = vunpack.c.h.b16 %v3975
          %v4083 = vunpack.c.l.b16 %v3976
          %v4084 = vunpack.c.h.b16 %v3976
          %v4085 = vunpack.c.l.b16 %v3977
          %v4086 = vunpack.c.h.b16 %v3977
          %v4087 = vunpack.c.l.b16 %v3978
          %v4088 = vunpack.c.h.b16 %v3978
          %v4089 = vunpack.c.l.b16 %v3979
          %v4090 = vunpack.c.h.b16 %v3979
          %v4091 = vunpack.c.l.b16 %v3980
          %v4092 = vunpack.c.h.b16 %v3980
          %v4093 = vunpack.c.l.b16 %v3981
          %v4094 = vunpack.c.h.b16 %v3981
          %v4095 = vunpack.c.l.b16 %v3982
          %v4096 = vunpack.c.h.b16 %v3982
          %v4097 = vunpack.c.l.b16 %v3983
          %v4098 = vunpack.c.h.b16 %v3983
          %v4099 = vunpack.c.l.b16 %v3984
          %v4100 = vunpack.c.h.b16 %v3984
          %v4101 = vunpack.c.l.b16 %v3985
          %v4102 = vunpack.c.h.b16 %v3985
          %v4103 = vunpack.c.l.b16 %v3986
          %v4104 = vunpack.c.h.b16 %v3986
          %v4105 = vpack.c.b16 %v4045, %v4041
          %v4106 = vpack.c.b16 %v4046, %v4042
          %v4107 = vpack.c.b16 %v4047, %v4043
          %v4108 = vpack.c.b16 %v4048, %v4044
          %v4109 = vpack.c.b16 %v4053, %v4049
          %v4110 = vpack.c.b16 %v4054, %v4050
          %v4111 = vpack.c.b16 %v4055, %v4051
          %v4112 = vpack.c.b16 %v4056, %v4052
          %v4113 = vpack.c.b16 %v4061, %v4057
          %v4114 = vpack.c.b16 %v4062, %v4058
          %v4115 = vpack.c.b16 %v4063, %v4059
          %v4116 = vpack.c.b16 %v4064, %v4060
          %v4117 = vpack.c.b16 %v4069, %v4065
          %v4118 = vpack.c.b16 %v4070, %v4066
          %v4119 = vpack.c.b16 %v4071, %v4067
          %v4120 = vpack.c.b16 %v4072, %v4068
          %v4121 = vpack.c.b16 %v4077, %v4073
          %v4122 = vpack.c.b16 %v4078, %v4074
          %v4123 = vpack.c.b16 %v4079, %v4075
          %v4124 = vpack.c.b16 %v4080, %v4076
          %v4125 = vpack.c.b16 %v4085, %v4081
          %v4126 = vpack.c.b16 %v4086, %v4082
          %v4127 = vpack.c.b16 %v4087, %v4083
          %v4128 = vpack.c.b16 %v4088, %v4084
          %v4129 = vpack.c.b16 %v4093, %v4089
          %v4130 = vpack.c.b16 %v4094, %v4090
          %v4131 = vpack.c.b16 %v4095, %v4091
          %v4132 = vpack.c.b16 %v4096, %v4092
          %v4133 = vpack.c.b16 %v4101, %v4097
          %v4134 = vpack.c.b16 %v4102, %v4098
          %v4135 = vpack.c.b16 %v4103, %v4099
          %v4136 = vpack.c.b16 %v4104, %v4100
          %4169 = vmatprep.subr.bf16.mxu0 %v4106
          %4170 = vmatpush1.bf16.msra.mxu0 %v4105
          %4171 = vmatprep.subr.bf16.mxu0 %v4110
          %4172 = vmatpush1.bf16.msra.mxu0 %v4109
          %4173 = vmatprep.subr.bf16.mxu0 %v4114
          %4174 = vmatpush1.bf16.msra.mxu0 %v4113
          %4175 = vmatprep.subr.bf16.mxu0 %v4118
          %4176 = vmatpush1.bf16.msra.mxu0 %v4117
          %4177 = vmatprep.subr.bf16.mxu0 %v4122
          %4178 = vmatpush1.bf16.msra.mxu0 %v4121
          %4179 = vmatprep.subr.bf16.mxu0 %v4126
          %4180 = vmatpush1.bf16.msra.mxu0 %v4125
          %4181 = vmatprep.subr.bf16.mxu0 %v4130
          %4182 = vmatpush1.bf16.msra.mxu0 %v4129
          %4183 = vmatprep.subr.bf16.mxu0 %v4134
          %4184 = vmatpush1.bf16.msra.mxu0 %v4133
          %4185 = vmatprep.subr.bf16.mxu0 0
          %4186 = vmatpush1.bf16.msra.mxu0 0
          %4187 = vmatprep.subr.bf16.mxu0 0
          %4188 = vmatpush1.bf16.msra.mxu0 0
          %4189 = vmatprep.subr.bf16.mxu0 0
          %4190 = vmatpush1.bf16.msra.mxu0 0
          %4191 = vmatprep.subr.bf16.mxu0 0
          %4192 = vmatpush1.bf16.msra.mxu0 0
          %4193 = vmatprep.subr.bf16.mxu0 0
          %4194 = vmatpush1.bf16.msra.mxu0 0
          %4195 = vmatprep.subr.bf16.mxu0 0
          %4196 = vmatpush1.bf16.msra.mxu0 0
          %4197 = vmatprep.subr.bf16.mxu0 0
          %4198 = vmatpush1.bf16.msra.mxu0 0
          %4199 = vmatprep.subr.bf16.mxu0 0
          %4200 = vmatpush1.bf16.msra.mxu0 0
          %4201 = vmatprep.mubr.bf16.mxu0 0
          %4202 = vmatmul.mubr.bf16.gmra.mrb[0].mxu0 %v3954
          %v4203 = vpop.f32.mrb[0].mxu0
          %v4204 = vadd.f32 %v3992, %v4203
          %v4205 = vpop.f32.mrb[0].mxu0
          %v4206 = vadd.f32 %v3996, %v4205
          %v4207 = vpop.f32.mrb[0].mxu0
          %v4208 = vpop.f32.mrb[0].mxu0
          %4209 = vdwg.mxu0
          %4210 = vmatprep.subr.bf16.mxu0 %v4108
          %4211 = vmatpush1.bf16.msra.mxu0 %v4107
          %4212 = vmatprep.subr.bf16.mxu0 %v4112
          %4213 = vmatpush1.bf16.msra.mxu0 %v4111
          %4214 = vmatprep.subr.bf16.mxu0 %v4116
          %4215 = vmatpush1.bf16.msra.mxu0 %v4115
          %4216 = vmatprep.subr.bf16.mxu0 %v4120
          %4217 = vmatpush1.bf16.msra.mxu0 %v4119
          %4218 = vmatprep.subr.bf16.mxu0 %v4124
          %4219 = vmatpush1.bf16.msra.mxu0 %v4123
          %4220 = vmatprep.subr.bf16.mxu0 %v4128
          %4221 = vmatpush1.bf16.msra.mxu0 %v4127
          %4222 = vmatprep.subr.bf16.mxu0 %v4132
          %4223 = vmatpush1.bf16.msra.mxu0 %v4131
          %4224 = vmatprep.subr.bf16.mxu0 %v4136
          %4225 = vmatpush1.bf16.msra.mxu0 %v4135
          %4226 = vmatprep.subr.bf16.mxu0 0
          %4227 = vmatpush1.bf16.msra.mxu0 0
          %4228 = vmatprep.subr.bf16.mxu0 0
          %4229 = vmatpush1.bf16.msra.mxu0 0
          %4230 = vmatprep.subr.bf16.mxu0 0
          %4231 = vmatpush1.bf16.msra.mxu0 0
          %4232 = vmatprep.subr.bf16.mxu0 0
          %4233 = vmatpush1.bf16.msra.mxu0 0
          %4234 = vmatprep.subr.bf16.mxu0 0
          %4235 = vmatpush1.bf16.msra.mxu0 0
          %4236 = vmatprep.subr.bf16.mxu0 0
          %4237 = vmatpush1.bf16.msra.mxu0 0
          %4238 = vmatprep.subr.bf16.mxu0 0
          %4239 = vmatpush1.bf16.msra.mxu0 0
          %4240 = vmatprep.subr.bf16.mxu0 0
          %4241 = vmatpush1.bf16.msra.mxu0 0
          %4242 = vmatprep.mubr.bf16.mxu0 0
          %4243 = vmatmul.mubr.bf16.gmra.mrb[0].mxu0 %v3954
          %v4244 = vpop.f32.mrb[0].mxu0
          %v4245 = vadd.f32 %v4000, %v4244
          %v4246 = vpop.f32.mrb[0].mxu0
          %v4247 = vadd.f32 %v4004, %v4246
          %v4248 = vpop.f32.mrb[0].mxu0
          %v4249 = vpop.f32.mrb[0].mxu0
          %4250 = vdwg.mxu0
          %v4251 = vmax.f32 %v4204, 0.0
          %v4252 = vmax.f32 %v4206, 0.0
          %v4253 = vmax.f32 %v4245, 0.0
          %v4254 = vmax.f32 %v4247, 0.0
          %v4255 = vpack.c.bf16 %v4251, %v4251
          %v4256 = vpack.c.bf16 %v4252, %v4252
          %v4257 = vpack.c.bf16 %v4253, %v4253
          %v4258 = vpack.c.bf16 %v4254, %v4254
          %v4259 = vld [vmem:[%s859] sm:$0xf]
          %v4260 = vld [vmem:[%s859 + $0x4] sm:$0xf]
          %v4261 = vld [vmem:[%s859 + $0x8] sm:$0xf]
          %v4262 = vld [vmem:[%s859 + $0xc] sm:$0xf]
          %v4263 = vld [vmem:[%s859 + $0x10] sm:$0xf]
          %v4264 = vld [vmem:[%s859 + $0x14] sm:$0xf]
          %v4265 = vld [vmem:[%s859 + $0x18] sm:$0xf]
          %v4266 = vld [vmem:[%s859 + $0x1c] sm:$0xf]
          %v4267 = vld [vmem:[%s859 + $0x20] sm:$0xf]
          %v4268 = vld [vmem:[%s859 + $0x24] sm:$0xf]
          %v4269 = vld [vmem:[%s859 + $0x28] sm:$0xf]
          %v4270 = vld [vmem:[%s859 + $0x2c] sm:$0xf]
          %v4271 = vld [vmem:[%s859 + $0x30] sm:$0xf]
          %v4272 = vld [vmem:[%s859 + $0x34] sm:$0xf]
          %v4273 = vld [vmem:[%s859 + $0x38] sm:$0xf]
          %v4274 = vld [vmem:[%s859 + $0x3c] sm:$0xf]
          %v4275 = vld [vmem:[%s859 + $0x40] sm:$0xf]
          %v4276 = vld [vmem:[%s859 + $0x44] sm:$0xf]
          %v4277 = vld [vmem:[%s859 + $0x48] sm:$0xf]
          %v4278 = vld [vmem:[%s859 + $0x4c] sm:$0xf]
          %v4279 = vld [vmem:[%s859 + $0x50] sm:$0xf]
          %v4280 = vld [vmem:[%s859 + $0x54] sm:$0xf]
          %v4281 = vld [vmem:[%s859 + $0x58] sm:$0xf]
          %v4282 = vld [vmem:[%s859 + $0x5c] sm:$0xf]
          %v4283 = vld [vmem:[%s859 + $0x60] sm:$0xf]
          %v4284 = vld [vmem:[%s859 + $0x64] sm:$0xf]
          %v4285 = vld [vmem:[%s859 + $0x68] sm:$0xf]
          %v4286 = vld [vmem:[%s859 + $0x6c] sm:$0xf]
          %v4287 = vld [vmem:[%s859 + $0x70] sm:$0xf]
          %v4288 = vld [vmem:[%s859 + $0x74] sm:$0xf]
          %v4289 = vld [vmem:[%s859 + $0x78] sm:$0xf]
          %v4290 = vld [vmem:[%s859 + $0x7c] sm:$0xf]
          %v4291 = vld [vmem:[%s859 + $0x80] sm:$0xf]
          %v4292 = vld [vmem:[%s859 + $0x84] sm:$0xf]
          %v4293 = vld [vmem:[%s859 + $0x88] sm:$0xf]
          %v4294 = vld [vmem:[%s859 + $0x8c] sm:$0xf]
          %v4295 = vld [vmem:[%s859 + $0x90] sm:$0xf]
          %v4296 = vld [vmem:[%s859 + $0x94] sm:$0xf]
          %v4297 = vld [vmem:[%s859 + $0x98] sm:$0xf]
          %v4298 = vld [vmem:[%s859 + $0x9c] sm:$0xf]
          %v4299 = vld [vmem:[%s859 + $0xa0] sm:$0xf]
          %v4300 = vld [vmem:[%s859 + $0xa4] sm:$0xf]
          %v4301 = vld [vmem:[%s859 + $0xa8] sm:$0xf]
          %v4302 = vld [vmem:[%s859 + $0xac] sm:$0xf]
          %v4303 = vld [vmem:[%s859 + $0xb0] sm:$0xf]
          %v4304 = vld [vmem:[%s859 + $0xb4] sm:$0xf]
          %v4305 = vld [vmem:[%s859 + $0xb8] sm:$0xf]
          %v4306 = vld [vmem:[%s859 + $0xbc] sm:$0xf]
          %v4307 = vld [vmem:[%s859 + $0xc0] sm:$0xf]
          %v4308 = vld [vmem:[%s859 + $0xc4] sm:$0xf]
          %v4309 = vld [vmem:[%s859 + $0xc8] sm:$0xf]
          %v4310 = vld [vmem:[%s859 + $0xcc] sm:$0xf]
          %v4311 = vld [vmem:[%s859 + $0xd0] sm:$0xf]
          %v4312 = vld [vmem:[%s859 + $0xd4] sm:$0xf]
          %v4313 = vld [vmem:[%s859 + $0xd8] sm:$0xf]
          %v4314 = vld [vmem:[%s859 + $0xdc] sm:$0xf]
          %v4315 = vld [vmem:[%s859 + $0xe0] sm:$0xf]
          %v4316 = vld [vmem:[%s859 + $0xe4] sm:$0xf]
          %v4317 = vld [vmem:[%s859 + $0xe8] sm:$0xf]
          %v4318 = vld [vmem:[%s859 + $0xec] sm:$0xf]
          %v4319 = vld [vmem:[%s859 + $0xf0] sm:$0xf]
          %v4320 = vld [vmem:[%s859 + $0xf4] sm:$0xf]
          %v4321 = vld [vmem:[%s859 + $0xf8] sm:$0xf]
          %v4322 = vld [vmem:[%s859 + $0xfc] sm:$0xf]
          %v4323 = vld [vmem:[%s867] sm:$0x1]
          %v4325 = vlaneseq
          %v4326 = vshrl.u32 %v4325, 7
          %v4327 = vsub.s32 0, %v4326
          %v4328 = vrot.slane %v4323, %v4327
          %v4394 = vunpack.c.l.b16 %v4259
          %v4395 = vunpack.c.l.b16 %v4260
          %v4396 = vunpack.c.l.b16 %v4261
          %v4397 = vunpack.c.l.b16 %v4262
          %v4398 = vunpack.c.l.b16 %v4263
          %v4399 = vunpack.c.l.b16 %v4264
          %v4400 = vunpack.c.l.b16 %v4265
          %v4401 = vunpack.c.l.b16 %v4266
          %v4402 = vunpack.c.l.b16 %v4267
          %v4403 = vunpack.c.l.b16 %v4268
          %v4404 = vunpack.c.l.b16 %v4269
          %v4405 = vunpack.c.l.b16 %v4270
          %v4406 = vunpack.c.l.b16 %v4271
          %v4407 = vunpack.c.l.b16 %v4272
          %v4408 = vunpack.c.l.b16 %v4273
          %v4409 = vunpack.c.l.b16 %v4274
          %v4410 = vunpack.c.l.b16 %v4275
          %v4411 = vunpack.c.l.b16 %v4276
          %v4412 = vunpack.c.l.b16 %v4277
          %v4413 = vunpack.c.l.b16 %v4278
          %v4414 = vunpack.c.l.b16 %v4279
          %v4415 = vunpack.c.l.b16 %v4280
          %v4416 = vunpack.c.l.b16 %v4281
          %v4417 = vunpack.c.l.b16 %v4282
          %v4418 = vunpack.c.l.b16 %v4283
          %v4419 = vunpack.c.l.b16 %v4284
          %v4420 = vunpack.c.l.b16 %v4285
          %v4421 = vunpack.c.l.b16 %v4286
          %v4422 = vunpack.c.l.b16 %v4287
          %v4423 = vunpack.c.l.b16 %v4288
          %v4424 = vunpack.c.l.b16 %v4289
          %v4425 = vunpack.c.l.b16 %v4290
          %v4426 = vunpack.c.l.b16 %v4291
          %v4427 = vunpack.c.l.b16 %v4292
          %v4428 = vunpack.c.l.b16 %v4293
          %v4429 = vunpack.c.l.b16 %v4294
          %v4430 = vunpack.c.l.b16 %v4295
          %v4431 = vunpack.c.l.b16 %v4296
          %v4432 = vunpack.c.l.b16 %v4297
          %v4433 = vunpack.c.l.b16 %v4298
          %v4434 = vunpack.c.l.b16 %v4299
          %v4435 = vunpack.c.l.b16 %v4300
          %v4436 = vunpack.c.l.b16 %v4301
          %v4437 = vunpack.c.l.b16 %v4302
          %v4438 = vunpack.c.l.b16 %v4303
          %v4439 = vunpack.c.l.b16 %v4304
          %v4440 = vunpack.c.l.b16 %v4305
          %v4441 = vunpack.c.l.b16 %v4306
          %v4442 = vunpack.c.l.b16 %v4307
          %v4443 = vunpack.c.l.b16 %v4308
          %v4444 = vunpack.c.l.b16 %v4309
          %v4445 = vunpack.c.l.b16 %v4310
          %v4446 = vunpack.c.l.b16 %v4311
          %v4447 = vunpack.c.l.b16 %v4312
          %v4448 = vunpack.c.l.b16 %v4313
          %v4449 = vunpack.c.l.b16 %v4314
          %v4450 = vunpack.c.l.b16 %v4315
          %v4451 = vunpack.c.l.b16 %v4316
          %v4452 = vunpack.c.l.b16 %v4317
          %v4453 = vunpack.c.l.b16 %v4318
          %v4454 = vunpack.c.l.b16 %v4319
          %v4455 = vunpack.c.l.b16 %v4320
          %v4456 = vunpack.c.l.b16 %v4321
          %v4457 = vunpack.c.l.b16 %v4322
          %v4458 = vpack.c.b16 %v4395, %v4394
          %v4459 = vpack.c.b16 %v4397, %v4396
          %v4460 = vpack.c.b16 %v4399, %v4398
          %v4461 = vpack.c.b16 %v4401, %v4400
          %v4462 = vpack.c.b16 %v4403, %v4402
          %v4463 = vpack.c.b16 %v4405, %v4404
          %v4464 = vpack.c.b16 %v4407, %v4406
          %v4465 = vpack.c.b16 %v4409, %v4408
          %v4466 = vpack.c.b16 %v4411, %v4410
          %v4467 = vpack.c.b16 %v4413, %v4412
          %v4468 = vpack.c.b16 %v4415, %v4414
          %v4469 = vpack.c.b16 %v4417, %v4416
          %v4470 = vpack.c.b16 %v4419, %v4418
          %v4471 = vpack.c.b16 %v4421, %v4420
          %v4472 = vpack.c.b16 %v4423, %v4422
          %v4473 = vpack.c.b16 %v4425, %v4424
          %v4474 = vpack.c.b16 %v4427, %v4426
          %v4475 = vpack.c.b16 %v4429, %v4428
          %v4476 = vpack.c.b16 %v4431, %v4430
          %v4477 = vpack.c.b16 %v4433, %v4432
          %v4478 = vpack.c.b16 %v4435, %v4434
          %v4479 = vpack.c.b16 %v4437, %v4436
          %v4480 = vpack.c.b16 %v4439, %v4438
          %v4481 = vpack.c.b16 %v4441, %v4440
          %v4482 = vpack.c.b16 %v4443, %v4442
          %v4483 = vpack.c.b16 %v4445, %v4444
          %v4484 = vpack.c.b16 %v4447, %v4446
          %v4485 = vpack.c.b16 %v4449, %v4448
          %v4486 = vpack.c.b16 %v4451, %v4450
          %v4487 = vpack.c.b16 %v4453, %v4452
          %v4488 = vpack.c.b16 %v4455, %v4454
          %v4489 = vpack.c.b16 %v4457, %v4456
          %4522 = vmatprep.subr.bf16.mxu0 0
          %4523 = vmatpush1.bf16.msra.mxu0 %v4458
          %4524 = vmatprep.subr.bf16.mxu0 0
          %4525 = vmatpush1.bf16.msra.mxu0 %v4459
          %4526 = vmatprep.subr.bf16.mxu0 0
          %4527 = vmatpush1.bf16.msra.mxu0 %v4460
          %4528 = vmatprep.subr.bf16.mxu0 0
          %4529 = vmatpush1.bf16.msra.mxu0 %v4461
          %4530 = vmatprep.subr.bf16.mxu0 0
          %4531 = vmatpush1.bf16.msra.mxu0 %v4462
          %4532 = vmatprep.subr.bf16.mxu0 0
          %4533 = vmatpush1.bf16.msra.mxu0 %v4463
          %4534 = vmatprep.subr.bf16.mxu0 0
          %4535 = vmatpush1.bf16.msra.mxu0 %v4464
          %4536 = vmatprep.subr.bf16.mxu0 0
          %4537 = vmatpush1.bf16.msra.mxu0 %v4465
          %4538 = vmatprep.subr.bf16.mxu0 0
          %4539 = vmatpush1.bf16.msra.mxu0 %v4466
          %4540 = vmatprep.subr.bf16.mxu0 0
          %4541 = vmatpush1.bf16.msra.mxu0 %v4467
          %4542 = vmatprep.subr.bf16.mxu0 0
          %4543 = vmatpush1.bf16.msra.mxu0 %v4468
          %4544 = vmatprep.subr.bf16.mxu0 0
          %4545 = vmatpush1.bf16.msra.mxu0 %v4469
          %4546 = vmatprep.subr.bf16.mxu0 0
          %4547 = vmatpush1.bf16.msra.mxu0 %v4470
          %4548 = vmatprep.subr.bf16.mxu0 0
          %4549 = vmatpush1.bf16.msra.mxu0 %v4471
          %4550 = vmatprep.subr.bf16.mxu0 0
          %4551 = vmatpush1.bf16.msra.mxu0 %v4472
          %4552 = vmatprep.subr.bf16.mxu0 0
          %4553 = vmatpush1.bf16.msra.mxu0 %v4473
          %4554 = vmatprep.mubr.bf16.mxu0 %v4256
          %4555 = vmatmul.mubr.bf16.gmra.mrb[0].mxu0 %v4255
          %v4556 = vpop.f32.mrb[0].mxu0
          %v4557 = vadd.f32 %v4328, %v4556
          %v4558 = vpop.f32.mrb[0].mxu0
          %v4559 = vpop.f32.mrb[0].mxu0
          %v4560 = vpop.f32.mrb[0].mxu0
          %4561 = vdwg.mxu0
          %4562 = vmatprep.subr.bf16.mxu0 0
          %4563 = vmatpush1.bf16.msra.mxu0 %v4474
          %4564 = vmatprep.subr.bf16.mxu0 0
          %4565 = vmatpush1.bf16.msra.mxu0 %v4475
          %4566 = vmatprep.subr.bf16.mxu0 0
          %4567 = vmatpush1.bf16.msra.mxu0 %v4476
          %4568 = vmatprep.subr.bf16.mxu0 0
          %4569 = vmatpush1.bf16.msra.mxu0 %v4477
          %4570 = vmatprep.subr.bf16.mxu0 0
          %4571 = vmatpush1.bf16.msra.mxu0 %v4478
          %4572 = vmatprep.subr.bf16.mxu0 0
          %4573 = vmatpush1.bf16.msra.mxu0 %v4479
          %4574 = vmatprep.subr.bf16.mxu0 0
          %4575 = vmatpush1.bf16.msra.mxu0 %v4480
          %4576 = vmatprep.subr.bf16.mxu0 0
          %4577 = vmatpush1.bf16.msra.mxu0 %v4481
          %4578 = vmatprep.subr.bf16.mxu0 0
          %4579 = vmatpush1.bf16.msra.mxu0 %v4482
          %4580 = vmatprep.subr.bf16.mxu0 0
          %4581 = vmatpush1.bf16.msra.mxu0 %v4483
          %4582 = vmatprep.subr.bf16.mxu0 0
          %4583 = vmatpush1.bf16.msra.mxu0 %v4484
          %4584 = vmatprep.subr.bf16.mxu0 0
          %4585 = vmatpush1.bf16.msra.mxu0 %v4485
          %4586 = vmatprep.subr.bf16.mxu0 0
          %4587 = vmatpush1.bf16.msra.mxu0 %v4486
          %4588 = vmatprep.subr.bf16.mxu0 0
          %4589 = vmatpush1.bf16.msra.mxu0 %v4487
          %4590 = vmatprep.subr.bf16.mxu0 0
          %4591 = vmatpush1.bf16.msra.mxu0 %v4488
          %4592 = vmatprep.subr.bf16.mxu0 0
          %4593 = vmatpush1.bf16.msra.mxu0 %v4489
          %4594 = vmatprep.mubr.bf16.mxu0 %v4258
          %4595 = vmatmul.mubr.bf16.gmra.mrb[0].mxu0 %v4257
          %v4596 = vpop.f32.mrb[0].mxu0
          %v4597 = vadd.f32 %v4557, %v4596
          %v4598 = vpop.f32.mrb[0].mxu0
          %v4599 = vpop.f32.mrb[0].mxu0
          %v4600 = vpop.f32.mrb[0].mxu0
          %4601 = vdwg.mxu0
          %v4602 = vadd.f32 %v3953, %v4597
          %v4603 = vld [vmem:[%s1033] sm:$0x1]
          %v4604 = vld [vmem:[%s875] sm:$0x1]
          %4605 = vadd.xlane.f32.xlu0 %v4602
          %v4606 = vpop.xlane.xlu0 %4605
          %v4607 = vmul.f32 %v4606, %v3930
          %v4608 = vsub.f32 %v4602, %v4607
          %v4609 = vmul.f32 %v4608, %v4608
          %4610 = vadd.xlane.f32.xlu0 %v4609
          %v4611 = vpop.xlane.xlu0 %4610
          %v4612 = vmul.f32 %v4611, %v3930
          %v4613 = vadd.f32 %v4612, 1e-05
          %v4614 = vrsqrt.pop %v4613
          %v4615 = vmul.f32 %v4608, %v4614
          %v4617 = vlaneseq
          %v4618 = vshrl.u32 %v4617, 7
          %v4619 = vsub.s32 0, %v4618
          %v4620 = vrot.slane %v4603, %v4619
          %v4622 = vmul.f32 %v4615, %v4620
          %v4624 = vlaneseq
          %v4625 = vshrl.u32 %v4624, 7
          %v4626 = vsub.s32 0, %v4625
          %v4627 = vrot.slane %v4604, %v4626
          %v4629 = vadd.f32 %v4622, %v4627
          %4630 = vst [vmem:[#allocation2] sm:$0xff] %v4629
        $region124: #{transformer_forward.1} parent=79 // pred_fallthru
          _
        %p4631 = scmp.ge.s32.totalorder %s44, 6
        // Predicated region
        $region129: #{transformer_forward.1} parent=79 // pred_check
          %p4632 = pneg %p4631
        $region130: #{transformer_forward.1} parent=79 // pred_check_branch
          %4634 = sbr.rel (%p4632) target = $region132
        $region131: #{transformer_forward.1} parent=79 // pred_region
          %v4635 = vld [vmem:[#allocation2] sm:$0xff]
          %v4636 = vpack.c.bf16 %v4635, %v4635
          %v4637 = vld [vmem:[%s884] sm:$0xff]
          %v4638 = vld [vmem:[%s884 + $0x8] sm:$0xff]
          %v4639 = vld [vmem:[%s884 + $0x10] sm:$0xff]
          %v4640 = vld [vmem:[%s884 + $0x18] sm:$0xff]
          %v4641 = vld [vmem:[%s884 + $0x20] sm:$0xff]
          %v4642 = vld [vmem:[%s884 + $0x28] sm:$0xff]
          %v4643 = vld [vmem:[%s884 + $0x30] sm:$0xff]
          %v4644 = vld [vmem:[%s884 + $0x38] sm:$0xff]
          %v4645 = vld [vmem:[%s884 + $0x40] sm:$0xff]
          %v4646 = vld [vmem:[%s884 + $0x48] sm:$0xff]
          %v4647 = vld [vmem:[%s884 + $0x50] sm:$0xff]
          %v4648 = vld [vmem:[%s884 + $0x58] sm:$0xff]
          %v4649 = vld [vmem:[%s884 + $0x60] sm:$0xff]
          %v4650 = vld [vmem:[%s884 + $0x68] sm:$0xff]
          %v4651 = vld [vmem:[%s884 + $0x70] sm:$0xff]
          %v4652 = vld [vmem:[%s884 + $0x78] sm:$0xff]
          %v4653 = vld [vmem:[%s884 + $0x80] sm:$0xff]
          %v4654 = vld [vmem:[%s884 + $0x88] sm:$0xff]
          %v4655 = vld [vmem:[%s884 + $0x90] sm:$0xff]
          %v4656 = vld [vmem:[%s884 + $0x98] sm:$0xff]
          %v4657 = vld [vmem:[%s884 + $0xa0] sm:$0xff]
          %v4658 = vld [vmem:[%s884 + $0xa8] sm:$0xff]
          %v4659 = vld [vmem:[%s884 + $0xb0] sm:$0xff]
          %v4660 = vld [vmem:[%s884 + $0xb8] sm:$0xff]
          %v4661 = vld [vmem:[%s884 + $0xc0] sm:$0xff]
          %v4662 = vld [vmem:[%s884 + $0xc8] sm:$0xff]
          %v4663 = vld [vmem:[%s884 + $0xd0] sm:$0xff]
          %v4664 = vld [vmem:[%s884 + $0xd8] sm:$0xff]
          %v4665 = vld [vmem:[%s884 + $0xe0] sm:$0xff]
          %v4666 = vld [vmem:[%s884 + $0xe8] sm:$0xff]
          %v4667 = vld [vmem:[%s884 + $0xf0] sm:$0xff]
          %v4668 = vld [vmem:[%s884 + $0xf8] sm:$0xff]
          %v4669 = vld [vmem:[%s884 + $0x100] sm:$0xff]
          %v4670 = vld [vmem:[%s884 + $0x108] sm:$0xff]
          %v4671 = vld [vmem:[%s884 + $0x110] sm:$0xff]
          %v4672 = vld [vmem:[%s884 + $0x118] sm:$0xff]
          %v4673 = vld [vmem:[%s884 + $0x120] sm:$0xff]
          %v4674 = vld [vmem:[%s884 + $0x128] sm:$0xff]
          %v4675 = vld [vmem:[%s884 + $0x130] sm:$0xff]
          %v4676 = vld [vmem:[%s884 + $0x138] sm:$0xff]
          %v4677 = vld [vmem:[%s884 + $0x140] sm:$0xff]
          %v4678 = vld [vmem:[%s884 + $0x148] sm:$0xff]
          %v4679 = vld [vmem:[%s884 + $0x150] sm:$0xff]
          %v4680 = vld [vmem:[%s884 + $0x158] sm:$0xff]
          %v4681 = vld [vmem:[%s884 + $0x160] sm:$0xff]
          %v4682 = vld [vmem:[%s884 + $0x168] sm:$0xff]
          %v4683 = vld [vmem:[%s884 + $0x170] sm:$0xff]
          %v4684 = vld [vmem:[%s884 + $0x178] sm:$0xff]
          %v4685 = vld [vmem:[%s884 + $0x180] sm:$0xff]
          %v4686 = vld [vmem:[%s884 + $0x188] sm:$0xff]
          %v4687 = vld [vmem:[%s884 + $0x190] sm:$0xff]
          %v4688 = vld [vmem:[%s884 + $0x198] sm:$0xff]
          %v4689 = vld [vmem:[%s884 + $0x1a0] sm:$0xff]
          %v4690 = vld [vmem:[%s884 + $0x1a8] sm:$0xff]
          %v4691 = vld [vmem:[%s884 + $0x1b0] sm:$0xff]
          %v4692 = vld [vmem:[%s884 + $0x1b8] sm:$0xff]
          %v4693 = vld [vmem:[%s884 + $0x1c0] sm:$0xff]
          %v4694 = vld [vmem:[%s884 + $0x1c8] sm:$0xff]
          %v4695 = vld [vmem:[%s884 + $0x1d0] sm:$0xff]
          %v4696 = vld [vmem:[%s884 + $0x1d8] sm:$0xff]
          %v4697 = vld [vmem:[%s884 + $0x1e0] sm:$0xff]
          %v4698 = vld [vmem:[%s884 + $0x1e8] sm:$0xff]
          %v4699 = vld [vmem:[%s884 + $0x1f0] sm:$0xff]
          %v4700 = vld [vmem:[%s884 + $0x1f8] sm:$0xff]
          %v4701 = vld [vmem:[%s1048] sm:$0xff]
          %v4703 = vlaneseq
          %v4704 = vshrl.u32 %v4703, 7
          %v4705 = vsub.s32 0, %v4704
          %v4706 = vrot.slane %v4701, %v4705
          %v4707 = vlaneseq
          %v4708 = vshrl.u32 %v4707, 7
          %v4709 = vsub.s32 1, %v4708
          %v4710 = vrot.slane %v4701, %v4709
          %v4711 = vlaneseq
          %v4712 = vshrl.u32 %v4711, 7
          %v4713 = vsub.s32 2, %v4712
          %v4714 = vrot.slane %v4701, %v4713
          %v4715 = vlaneseq
          %v4716 = vshrl.u32 %v4715, 7
          %v4717 = vsub.s32 3, %v4716
          %v4718 = vrot.slane %v4701, %v4717
          %v4719 = vlaneseq
          %v4720 = vshrl.u32 %v4719, 7
          %v4721 = vsub.s32 4, %v4720
          %v4722 = vrot.slane %v4701, %v4721
          %v4723 = vlaneseq
          %v4724 = vshrl.u32 %v4723, 7
          %v4725 = vsub.s32 5, %v4724
          %v4726 = vrot.slane %v4701, %v4725
          %v4727 = vlaneseq
          %v4728 = vshrl.u32 %v4727, 7
          %v4729 = vsub.s32 6, %v4728
          %v4730 = vrot.slane %v4701, %v4729
          %v4731 = vlaneseq
          %v4732 = vshrl.u32 %v4731, 7
          %v4733 = vsub.s32 7, %v4732
          %v4734 = vrot.slane %v4701, %v4733
          %v4807 = vunpack.c.l.b16 %v4637
          %v4808 = vunpack.c.h.b16 %v4637
          %v4809 = vunpack.c.l.b16 %v4638
          %v4810 = vunpack.c.h.b16 %v4638
          %v4811 = vunpack.c.l.b16 %v4639
          %v4812 = vunpack.c.h.b16 %v4639
          %v4813 = vunpack.c.l.b16 %v4640
          %v4814 = vunpack.c.h.b16 %v4640
          %v4815 = vunpack.c.l.b16 %v4641
          %v4816 = vunpack.c.h.b16 %v4641
          %v4817 = vunpack.c.l.b16 %v4642
          %v4818 = vunpack.c.h.b16 %v4642
          %v4819 = vunpack.c.l.b16 %v4643
          %v4820 = vunpack.c.h.b16 %v4643
          %v4821 = vunpack.c.l.b16 %v4644
          %v4822 = vunpack.c.h.b16 %v4644
          %v4823 = vunpack.c.l.b16 %v4645
          %v4824 = vunpack.c.h.b16 %v4645
          %v4825 = vunpack.c.l.b16 %v4646
          %v4826 = vunpack.c.h.b16 %v4646
          %v4827 = vunpack.c.l.b16 %v4647
          %v4828 = vunpack.c.h.b16 %v4647
          %v4829 = vunpack.c.l.b16 %v4648
          %v4830 = vunpack.c.h.b16 %v4648
          %v4831 = vunpack.c.l.b16 %v4649
          %v4832 = vunpack.c.h.b16 %v4649
          %v4833 = vunpack.c.l.b16 %v4650
          %v4834 = vunpack.c.h.b16 %v4650
          %v4835 = vunpack.c.l.b16 %v4651
          %v4836 = vunpack.c.h.b16 %v4651
          %v4837 = vunpack.c.l.b16 %v4652
          %v4838 = vunpack.c.h.b16 %v4652
          %v4839 = vunpack.c.l.b16 %v4653
          %v4840 = vunpack.c.h.b16 %v4653
          %v4841 = vunpack.c.l.b16 %v4654
          %v4842 = vunpack.c.h.b16 %v4654
          %v4843 = vunpack.c.l.b16 %v4655
          %v4844 = vunpack.c.h.b16 %v4655
          %v4845 = vunpack.c.l.b16 %v4656
          %v4846 = vunpack.c.h.b16 %v4656
          %v4847 = vunpack.c.l.b16 %v4657
          %v4848 = vunpack.c.h.b16 %v4657
          %v4849 = vunpack.c.l.b16 %v4658
          %v4850 = vunpack.c.h.b16 %v4658
          %v4851 = vunpack.c.l.b16 %v4659
          %v4852 = vunpack.c.h.b16 %v4659
          %v4853 = vunpack.c.l.b16 %v4660
          %v4854 = vunpack.c.h.b16 %v4660
          %v4855 = vunpack.c.l.b16 %v4661
          %v4856 = vunpack.c.h.b16 %v4661
          %v4857 = vunpack.c.l.b16 %v4662
          %v4858 = vunpack.c.h.b16 %v4662
          %v4859 = vunpack.c.l.b16 %v4663
          %v4860 = vunpack.c.h.b16 %v4663
          %v4861 = vunpack.c.l.b16 %v4664
          %v4862 = vunpack.c.h.b16 %v4664
          %v4863 = vunpack.c.l.b16 %v4665
          %v4864 = vunpack.c.h.b16 %v4665
          %v4865 = vunpack.c.l.b16 %v4666
          %v4866 = vunpack.c.h.b16 %v4666
          %v4867 = vunpack.c.l.b16 %v4667
          %v4868 = vunpack.c.h.b16 %v4667
          %v4869 = vunpack.c.l.b16 %v4668
          %v4870 = vunpack.c.h.b16 %v4668
          %v4871 = vunpack.c.l.b16 %v4669
          %v4872 = vunpack.c.h.b16 %v4669
          %v4873 = vunpack.c.l.b16 %v4670
          %v4874 = vunpack.c.h.b16 %v4670
          %v4875 = vunpack.c.l.b16 %v4671
          %v4876 = vunpack.c.h.b16 %v4671
          %v4877 = vunpack.c.l.b16 %v4672
          %v4878 = vunpack.c.h.b16 %v4672
          %v4879 = vunpack.c.l.b16 %v4673
          %v4880 = vunpack.c.h.b16 %v4673
          %v4881 = vunpack.c.l.b16 %v4674
          %v4882 = vunpack.c.h.b16 %v4674
          %v4883 = vunpack.c.l.b16 %v4675
          %v4884 = vunpack.c.h.b16 %v4675
          %v4885 = vunpack.c.l.b16 %v4676
          %v4886 = vunpack.c.h.b16 %v4676
          %v4887 = vunpack.c.l.b16 %v4677
          %v4888 = vunpack.c.h.b16 %v4677
          %v4889 = vunpack.c.l.b16 %v4678
          %v4890 = vunpack.c.h.b16 %v4678
          %v4891 = vunpack.c.l.b16 %v4679
          %v4892 = vunpack.c.h.b16 %v4679
          %v4893 = vunpack.c.l.b16 %v4680
          %v4894 = vunpack.c.h.b16 %v4680
          %v4895 = vunpack.c.l.b16 %v4681
          %v4896 = vunpack.c.h.b16 %v4681
          %v4897 = vunpack.c.l.b16 %v4682
          %v4898 = vunpack.c.h.b16 %v4682
          %v4899 = vunpack.c.l.b16 %v4683
          %v4900 = vunpack.c.h.b16 %v4683
          %v4901 = vunpack.c.l.b16 %v4684
          %v4902 = vunpack.c.h.b16 %v4684
          %v4903 = vunpack.c.l.b16 %v4685
          %v4904 = vunpack.c.h.b16 %v4685
          %v4905 = vunpack.c.l.b16 %v4686
          %v4906 = vunpack.c.h.b16 %v4686
          %v4907 = vunpack.c.l.b16 %v4687
          %v4908 = vunpack.c.h.b16 %v4687
          %v4909 = vunpack.c.l.b16 %v4688
          %v4910 = vunpack.c.h.b16 %v4688
          %v4911 = vunpack.c.l.b16 %v4689
          %v4912 = vunpack.c.h.b16 %v4689
          %v4913 = vunpack.c.l.b16 %v4690
          %v4914 = vunpack.c.h.b16 %v4690
          %v4915 = vunpack.c.l.b16 %v4691
          %v4916 = vunpack.c.h.b16 %v4691
          %v4917 = vunpack.c.l.b16 %v4692
          %v4918 = vunpack.c.h.b16 %v4692
          %v4919 = vunpack.c.l.b16 %v4693
          %v4920 = vunpack.c.h.b16 %v4693
          %v4921 = vunpack.c.l.b16 %v4694
          %v4922 = vunpack.c.h.b16 %v4694
          %v4923 = vunpack.c.l.b16 %v4695
          %v4924 = vunpack.c.h.b16 %v4695
          %v4925 = vunpack.c.l.b16 %v4696
          %v4926 = vunpack.c.h.b16 %v4696
          %v4927 = vunpack.c.l.b16 %v4697
          %v4928 = vunpack.c.h.b16 %v4697
          %v4929 = vunpack.c.l.b16 %v4698
          %v4930 = vunpack.c.h.b16 %v4698
          %v4931 = vunpack.c.l.b16 %v4699
          %v4932 = vunpack.c.h.b16 %v4699
          %v4933 = vunpack.c.l.b16 %v4700
          %v4934 = vunpack.c.h.b16 %v4700
          %v4935 = vpack.c.b16 %v4815, %v4807
          %v4936 = vpack.c.b16 %v4816, %v4808
          %v4937 = vpack.c.b16 %v4817, %v4809
          %v4938 = vpack.c.b16 %v4818, %v4810
          %v4939 = vpack.c.b16 %v4819, %v4811
          %v4940 = vpack.c.b16 %v4820, %v4812
          %v4941 = vpack.c.b16 %v4821, %v4813
          %v4942 = vpack.c.b16 %v4822, %v4814
          %v4943 = vpack.c.b16 %v4831, %v4823
          %v4944 = vpack.c.b16 %v4832, %v4824
          %v4945 = vpack.c.b16 %v4833, %v4825
          %v4946 = vpack.c.b16 %v4834, %v4826
          %v4947 = vpack.c.b16 %v4835, %v4827
          %v4948 = vpack.c.b16 %v4836, %v4828
          %v4949 = vpack.c.b16 %v4837, %v4829
          %v4950 = vpack.c.b16 %v4838, %v4830
          %v4951 = vpack.c.b16 %v4847, %v4839
          %v4952 = vpack.c.b16 %v4848, %v4840
          %v4953 = vpack.c.b16 %v4849, %v4841
          %v4954 = vpack.c.b16 %v4850, %v4842
          %v4955 = vpack.c.b16 %v4851, %v4843
          %v4956 = vpack.c.b16 %v4852, %v4844
          %v4957 = vpack.c.b16 %v4853, %v4845
          %v4958 = vpack.c.b16 %v4854, %v4846
          %v4959 = vpack.c.b16 %v4863, %v4855
          %v4960 = vpack.c.b16 %v4864, %v4856
          %v4961 = vpack.c.b16 %v4865, %v4857
          %v4962 = vpack.c.b16 %v4866, %v4858
          %v4963 = vpack.c.b16 %v4867, %v4859
          %v4964 = vpack.c.b16 %v4868, %v4860
          %v4965 = vpack.c.b16 %v4869, %v4861
          %v4966 = vpack.c.b16 %v4870, %v4862
          %v4967 = vpack.c.b16 %v4879, %v4871
          %v4968 = vpack.c.b16 %v4880, %v4872
          %v4969 = vpack.c.b16 %v4881, %v4873
          %v4970 = vpack.c.b16 %v4882, %v4874
          %v4971 = vpack.c.b16 %v4883, %v4875
          %v4972 = vpack.c.b16 %v4884, %v4876
          %v4973 = vpack.c.b16 %v4885, %v4877
          %v4974 = vpack.c.b16 %v4886, %v4878
          %v4975 = vpack.c.b16 %v4895, %v4887
          %v4976 = vpack.c.b16 %v4896, %v4888
          %v4977 = vpack.c.b16 %v4897, %v4889
          %v4978 = vpack.c.b16 %v4898, %v4890
          %v4979 = vpack.c.b16 %v4899, %v4891
          %v4980 = vpack.c.b16 %v4900, %v4892
          %v4981 = vpack.c.b16 %v4901, %v4893
          %v4982 = vpack.c.b16 %v4902, %v4894
          %v4983 = vpack.c.b16 %v4911, %v4903
          %v4984 = vpack.c.b16 %v4912, %v4904
          %v4985 = vpack.c.b16 %v4913, %v4905
          %v4986 = vpack.c.b16 %v4914, %v4906
          %v4987 = vpack.c.b16 %v4915, %v4907
          %v4988 = vpack.c.b16 %v4916, %v4908
          %v4989 = vpack.c.b16 %v4917, %v4909
          %v4990 = vpack.c.b16 %v4918, %v4910
          %v4991 = vpack.c.b16 %v4927, %v4919
          %v4992 = vpack.c.b16 %v4928, %v4920
          %v4993 = vpack.c.b16 %v4929, %v4921
          %v4994 = vpack.c.b16 %v4930, %v4922
          %v4995 = vpack.c.b16 %v4931, %v4923
          %v4996 = vpack.c.b16 %v4932, %v4924
          %v4997 = vpack.c.b16 %v4933, %v4925
          %v4998 = vpack.c.b16 %v4934, %v4926
          %5063 = vmatprep.subr.bf16.mxu0 %v4936
          %5064 = vmatpush1.bf16.msra.mxu0 %v4935
          %5065 = vmatprep.subr.bf16.mxu0 %v4944
          %5066 = vmatpush1.bf16.msra.mxu0 %v4943
          %5067 = vmatprep.subr.bf16.mxu0 %v4952
          %5068 = vmatpush1.bf16.msra.mxu0 %v4951
          %5069 = vmatprep.subr.bf16.mxu0 %v4960
          %5070 = vmatpush1.bf16.msra.mxu0 %v4959
          %5071 = vmatprep.subr.bf16.mxu0 %v4968
          %5072 = vmatpush1.bf16.msra.mxu0 %v4967
          %5073 = vmatprep.subr.bf16.mxu0 %v4976
          %5074 = vmatpush1.bf16.msra.mxu0 %v4975
          %5075 = vmatprep.subr.bf16.mxu0 %v4984
          %5076 = vmatpush1.bf16.msra.mxu0 %v4983
          %5077 = vmatprep.subr.bf16.mxu0 %v4992
          %5078 = vmatpush1.bf16.msra.mxu0 %v4991
          %5079 = vmatprep.subr.bf16.mxu0 0
          %5080 = vmatpush1.bf16.msra.mxu0 0
          %5081 = vmatprep.subr.bf16.mxu0 0
          %5082 = vmatpush1.bf16.msra.mxu0 0
          %5083 = vmatprep.subr.bf16.mxu0 0
          %5084 = vmatpush1.bf16.msra.mxu0 0
          %5085 = vmatprep.subr.bf16.mxu0 0
          %5086 = vmatpush1.bf16.msra.mxu0 0
          %5087 = vmatprep.subr.bf16.mxu0 0
          %5088 = vmatpush1.bf16.msra.mxu0 0
          %5089 = vmatprep.subr.bf16.mxu0 0
          %5090 = vmatpush1.bf16.msra.mxu0 0
          %5091 = vmatprep.subr.bf16.mxu0 0
          %5092 = vmatpush1.bf16.msra.mxu0 0
          %5093 = vmatprep.subr.bf16.mxu0 0
          %5094 = vmatpush1.bf16.msra.mxu0 0
          %5095 = vmatprep.mubr.bf16.mxu0 0
          %5096 = vmatmul.mubr.bf16.gmra.mrb[0].mxu0 %v4636
          %v5097 = vpop.f32.mrb[0].mxu0
          %v5098 = vadd.f32 %v4706, %v5097
          %v5099 = vpop.f32.mrb[0].mxu0
          %v5100 = vadd.f32 %v4710, %v5099
          %v5101 = vpop.f32.mrb[0].mxu0
          %v5102 = vpop.f32.mrb[0].mxu0
          %5103 = vdwg.mxu0
          %5104 = vmatprep.subr.bf16.mxu0 %v4938
          %5105 = vmatpush1.bf16.msra.mxu0 %v4937
          %5106 = vmatprep.subr.bf16.mxu0 %v4946
          %5107 = vmatpush1.bf16.msra.mxu0 %v4945
          %5108 = vmatprep.subr.bf16.mxu0 %v4954
          %5109 = vmatpush1.bf16.msra.mxu0 %v4953
          %5110 = vmatprep.subr.bf16.mxu0 %v4962
          %5111 = vmatpush1.bf16.msra.mxu0 %v4961
          %5112 = vmatprep.subr.bf16.mxu0 %v4970
          %5113 = vmatpush1.bf16.msra.mxu0 %v4969
          %5114 = vmatprep.subr.bf16.mxu0 %v4978
          %5115 = vmatpush1.bf16.msra.mxu0 %v4977
          %5116 = vmatprep.subr.bf16.mxu0 %v4986
          %5117 = vmatpush1.bf16.msra.mxu0 %v4985
          %5118 = vmatprep.subr.bf16.mxu0 %v4994
          %5119 = vmatpush1.bf16.msra.mxu0 %v4993
          %5120 = vmatprep.subr.bf16.mxu0 0
          %5121 = vmatpush1.bf16.msra.mxu0 0
          %5122 = vmatprep.subr.bf16.mxu0 0
          %5123 = vmatpush1.bf16.msra.mxu0 0
          %5124 = vmatprep.subr.bf16.mxu0 0
          %5125 = vmatpush1.bf16.msra.mxu0 0
          %5126 = vmatprep.subr.bf16.mxu0 0
          %5127 = vmatpush1.bf16.msra.mxu0 0
          %5128 = vmatprep.subr.bf16.mxu0 0
          %5129 = vmatpush1.bf16.msra.mxu0 0
          %5130 = vmatprep.subr.bf16.mxu0 0
          %5131 = vmatpush1.bf16.msra.mxu0 0
          %5132 = vmatprep.subr.bf16.mxu0 0
          %5133 = vmatpush1.bf16.msra.mxu0 0
          %5134 = vmatprep.subr.bf16.mxu0 0
          %5135 = vmatpush1.bf16.msra.mxu0 0
          %5136 = vmatprep.mubr.bf16.mxu0 0
          %5137 = vmatmul.mubr.bf16.gmra.mrb[0].mxu0 %v4636
          %v5138 = vpop.f32.mrb[0].mxu0
          %v5139 = vadd.f32 %v4714, %v5138
          %v5140 = vpop.f32.mrb[0].mxu0
          %v5141 = vadd.f32 %v4718, %v5140
          %v5142 = vpop.f32.mrb[0].mxu0
          %v5143 = vpop.f32.mrb[0].mxu0
          %5144 = vdwg.mxu0
          %5145 = vmatprep.subr.bf16.mxu0 %v4940
          %5146 = vmatpush1.bf16.msra.mxu0 %v4939
          %5147 = vmatprep.subr.bf16.mxu0 %v4948
          %5148 = vmatpush1.bf16.msra.mxu0 %v4947
          %5149 = vmatprep.subr.bf16.mxu0 %v4956
          %5150 = vmatpush1.bf16.msra.mxu0 %v4955
          %5151 = vmatprep.subr.bf16.mxu0 %v4964
          %5152 = vmatpush1.bf16.msra.mxu0 %v4963
          %5153 = vmatprep.subr.bf16.mxu0 %v4972
          %5154 = vmatpush1.bf16.msra.mxu0 %v4971
          %5155 = vmatprep.subr.bf16.mxu0 %v4980
          %5156 = vmatpush1.bf16.msra.mxu0 %v4979
          %5157 = vmatprep.subr.bf16.mxu0 %v4988
          %5158 = vmatpush1.bf16.msra.mxu0 %v4987
          %5159 = vmatprep.subr.bf16.mxu0 %v4996
          %5160 = vmatpush1.bf16.msra.mxu0 %v4995
          %5161 = vmatprep.subr.bf16.mxu0 0
          %5162 = vmatpush1.bf16.msra.mxu0 0
          %5163 = vmatprep.subr.bf16.mxu0 0
          %5164 = vmatpush1.bf16.msra.mxu0 0
          %5165 = vmatprep.subr.bf16.mxu0 0
          %5166 = vmatpush1.bf16.msra.mxu0 0
          %5167 = vmatprep.subr.bf16.mxu0 0
          %5168 = vmatpush1.bf16.msra.mxu0 0
          %5169 = vmatprep.subr.bf16.mxu0 0
          %5170 = vmatpush1.bf16.msra.mxu0 0
          %5171 = vmatprep.subr.bf16.mxu0 0
          %5172 = vmatpush1.bf16.msra.mxu0 0
          %5173 = vmatprep.subr.bf16.mxu0 0
          %5174 = vmatpush1.bf16.msra.mxu0 0
          %5175 = vmatprep.subr.bf16.mxu0 0
          %5176 = vmatpush1.bf16.msra.mxu0 0
          %5177 = vmatprep.mubr.bf16.mxu0 0
          %5178 = vmatmul.mubr.bf16.gmra.mrb[0].mxu0 %v4636
          %v5179 = vpop.f32.mrb[0].mxu0
          %v5180 = vadd.f32 %v4722, %v5179
          %v5181 = vpop.f32.mrb[0].mxu0
          %v5182 = vadd.f32 %v4726, %v5181
          %v5183 = vpop.f32.mrb[0].mxu0
          %v5184 = vpop.f32.mrb[0].mxu0
          %5185 = vdwg.mxu0
          %5186 = vmatprep.subr.bf16.mxu0 %v4942
          %5187 = vmatpush1.bf16.msra.mxu0 %v4941
          %5188 = vmatprep.subr.bf16.mxu0 %v4950
          %5189 = vmatpush1.bf16.msra.mxu0 %v4949
          %5190 = vmatprep.subr.bf16.mxu0 %v4958
          %5191 = vmatpush1.bf16.msra.mxu0 %v4957
          %5192 = vmatprep.subr.bf16.mxu0 %v4966
          %5193 = vmatpush1.bf16.msra.mxu0 %v4965
          %5194 = vmatprep.subr.bf16.mxu0 %v4974
          %5195 = vmatpush1.bf16.msra.mxu0 %v4973
          %5196 = vmatprep.subr.bf16.mxu0 %v4982
          %5197 = vmatpush1.bf16.msra.mxu0 %v4981
          %5198 = vmatprep.subr.bf16.mxu0 %v4990
          %5199 = vmatpush1.bf16.msra.mxu0 %v4989
          %5200 = vmatprep.subr.bf16.mxu0 %v4998
          %5201 = vmatpush1.bf16.msra.mxu0 %v4997
          %5202 = vmatprep.subr.bf16.mxu0 0
          %5203 = vmatpush1.bf16.msra.mxu0 0
          %5204 = vmatprep.subr.bf16.mxu0 0
          %5205 = vmatpush1.bf16.msra.mxu0 0
          %5206 = vmatprep.subr.bf16.mxu0 0
          %5207 = vmatpush1.bf16.msra.mxu0 0
          %5208 = vmatprep.subr.bf16.mxu0 0
          %5209 = vmatpush1.bf16.msra.mxu0 0
          %5210 = vmatprep.subr.bf16.mxu0 0
          %5211 = vmatpush1.bf16.msra.mxu0 0
          %5212 = vmatprep.subr.bf16.mxu0 0
          %5213 = vmatpush1.bf16.msra.mxu0 0
          %5214 = vmatprep.subr.bf16.mxu0 0
          %5215 = vmatpush1.bf16.msra.mxu0 0
          %5216 = vmatprep.subr.bf16.mxu0 0
          %5217 = vmatpush1.bf16.msra.mxu0 0
          %5218 = vmatprep.mubr.bf16.mxu0 0
          %5219 = vmatmul.mubr.bf16.gmra.mrb[0].mxu0 %v4636
          %v5220 = vpop.f32.mrb[0].mxu0
          %v5221 = vadd.f32 %v4730, %v5220
          %v5222 = vpop.f32.mrb[0].mxu0
          %v5223 = vadd.f32 %v4734, %v5222
          %v5224 = vpop.f32.mrb[0].mxu0
          %v5225 = vpop.f32.mrb[0].mxu0
          %5226 = vdwg.mxu0
          %5227 = vst [vmem:[%s1060] sm:$0xff] %v5098
          %5228 = vst [vmem:[%s1060 + $0x8] sm:$0xff] %v5100
          %5229 = vst [vmem:[%s1060 + $0x10] sm:$0xff] %v5139
          %5230 = vst [vmem:[%s1060 + $0x18] sm:$0xff] %v5141
          %5231 = vst [vmem:[%s1060 + $0x20] sm:$0xff] %v5180
          %5232 = vst [vmem:[%s1060 + $0x28] sm:$0xff] %v5182
          %5233 = vst [vmem:[%s1060 + $0x30] sm:$0xff] %v5221
          %5234 = vst [vmem:[%s1060 + $0x38] sm:$0xff] %v5223
        $region132: #{transformer_forward.1} parent=79 // pred_fallthru
          _
        %s5235 = ssub.s32 %s44, 6
        %p5236 = scmp.gt.s32.totalorder %s5235, 0
        %s5237 = scalar_select %p5236, %s5235, 0
        %s5238 = smul.u32 8, %s5237
        %p5239 = scmp.lt.s32.totalorder %s5238, 15
        %s5240 = scalar_select %p5239, %s5238, 15
        %s5241 = smul.addr %s5240, 8
        %s5242 = scalar_lea.vmem %s15, %s5241
        // Predicated region
        $region133: #{transformer_forward.1} parent=79 // pred_check
          %p5243 = pneg %p513
        $region134: #{transformer_forward.1} parent=79 // pred_check_branch
          %5245 = sbr.rel (%p5243) target = $region136
        $region135: #{transformer_forward.1} parent=79 // pred_region
          %s5246 = ssub.s32 %s44, 6
          %p5247 = scmp.gt.s32.totalorder %s5246, 0
          %s5248 = scalar_select %p5247, %s5246, 0
          %s5249 = smul.u32 8, %s5248
        $region136: #{transformer_forward.1} parent=79 // pred_fallthru
          _
      $region80: #{transformer_forward.1} parent=5 // pred_fallthru
        _
      %p5250 = scmp.le.s32.totalorder 2, %s39
      // Predicated region
      $region137: #{transformer_forward.1} parent=5 // pred_check
        %p5251 = pneg %p5250
      $region138: #{transformer_forward.1} parent=5 // pred_check_branch
        %5253 = sbr.rel (%p5251) target = $region140
      $region139: #{transformer_forward.1} parent=5 // pred_region
        %s5254 = ssub.s32 %s39, 2
        // Predicated region
        $region141: #{transformer_forward.1} parent=139 // pred_check
          %p5255 = pneg %p519
        $region142: #{transformer_forward.1} parent=139 // pred_check_branch
          %5257 = sbr.rel (%p5255) target = $region144
        $region143: #{transformer_forward.1} parent=139 // pred_region
          %s5258 = ssub.s32 %s45, 6
          %p5259 = scmp.gt.s32.totalorder %s5258, 0
          %s5260 = scalar_select %p5259, %s5258, 0
          %s5261 = smul.u32 8, %s5260
          %p5262 = scmp.lt.s32.totalorder %s5261, 15
          %s5263 = scalar_select %p5262, %s5261, 15
          %s5264 = smul.addr %s5263, 8
          %s5265 = scalar_lea.vmem %s15, %s5264
        $region144: #{transformer_forward.1} parent=139 // pred_fallthru
          _
      $region140: #{transformer_forward.1} parent=5 // pred_fallthru
        _
    $region6: #{transformer_forward.1} parent=1 // loop_footer
      %s43 = sadd.s32 1, %s39
    $region7: #{transformer_forward.1} parent=1 // loop_footer_branch
      %38 = sbr.rel target = $region3
    $region8: #{transformer_forward.1} parent=1 // loop_exit
      _
    %5266 = vsyncpa [#allocation4], 1
    %s5267 = scalar_lea.sflag [#allocation4], 1
    %5268 = vsyncpa %s5267, 1
    %5269 = vsyncpa [#allocation6], 1
    %s5270 = scalar_lea.sflag [#allocation6], 1
    %5271 = vsyncpa %s5270, 1
    %5272 = vsyncpa [#allocation9], 1
    %s5273 = scalar_lea.sflag [#allocation9], 1
    %5274 = vsyncpa %s5273, 1
    %5275 = vsyncpa [#allocation12], 1
    %s5276 = scalar_lea.sflag [#allocation12], 1
    %5277 = vsyncpa %s5276, 1
    %5278 = vsyncpa [#allocation15], 1
    %s5279 = scalar_lea.sflag [#allocation15], 1
    %5280 = vsyncpa %s5279, 1
    %5281 = vsyncpa [#allocation18], 1
    %s5282 = scalar_lea.sflag [#allocation18], 1
    %5283 = vsyncpa %s5282, 1

</llo_original>
